<compile_context>
chip_gen: v7x
topology: tpu7x:2x2x1
jax: 0.10.0
libtpu: 0.0.40
codegen_flags: <defaults>
</compile_context>

<pallas_src>
import functools

import jax
import jax.numpy as jnp
import numpy as np
from jax.experimental import pallas as pl
from jax.experimental.pallas import tpu as pltpu

H = 51        # logical hidden size of both LSTM cells
H_PAD = 128   # lane-aligned padded hidden size (4*H_PAD = 512)


# ---------------------------------------------------------------------------
# Pallas kernel
# ---------------------------------------------------------------------------
def _sequence_kernel(xg_ref, whh1_ref, w2t_ref, w2b_ref, b2_ref,
                     wfb_ref, b1p_ref, wl_ref, bl_ref, out_ref, *, future):
    # xg_ref : (T, B, 4*HP)  precomputed x_t*wih1 + b1 (phase-1 input gates)
    # whh1   : (HP, 4*HP)    cell-1 hidden weights
    # w2t    : (HP, 4*HP)    cell-2 input-half weights  (W_ih2^T, on-chain)
    # w2b    : (HP, 4*HP)    cell-2 hidden-half weights (W_hh2^T, off-chain)
    # b2     : (1, 4*HP)     b_ih2 + b_hh2
    # wfb    : (HP, 4*HP)    phase-2 feedback matrix  wl^T @ wih1 (rank-1)
    # b1p    : (1, 4*HP)     b1 + bl*wih1 (phase-2 folded bias)
    # wl     : (1, HP)       linear weight row (zero-padded)
    # bl     : (1, 1)        linear bias
    whh1 = whh1_ref[...]
    w2t = w2t_ref[...]
    w2b = w2b_ref[...]
    b2 = b2_ref[...]
    wfb = wfb_ref[...]
    b1p = b1p_ref[...]
    wl = wl_ref[...]
    bl = bl_ref[...]

    T, B, _ = xg_ref.shape
    HP = whh1_ref.shape[0]
    total = T + future

    def cell(gates, c):
        # Gate slices are whole-vreg aligned (multiples of HP=128 lanes).
        # jax.nn.sigmoid lowers via the XLA logistic expansion (single tanh on
        # the EUP), so no manual rewrite is needed.
        i = jax.nn.sigmoid(gates[:, 0 * HP:1 * HP])
        f = jax.nn.sigmoid(gates[:, 1 * HP:2 * HP])
        g = jnp.tanh(gates[:, 2 * HP:3 * HP])
        o = jax.nn.sigmoid(gates[:, 3 * HP:4 * HP])
        c_new = f * c + i * g
        h_new = o * jnp.tanh(c_new)
        return h_new, c_new

    ones = jnp.ones((B, HP), jnp.float32)
    h1, c1, h2, c2 = ones, ones, ones, ones
    outs = []

    # ---- phase 1: consume the input sequence (statically unrolled) ----
    for t in range(T):
        # Off-chain: depends only on the *previous* step's h2, so the
        # scheduler can issue it early / overlap it with the serial chain.
        g2_part = jnp.dot(h2, w2b, preferred_element_type=jnp.float32) + b2
        # On-chain: one K=128 matmul + cell-1 nonlinearity.
        g1 = xg_ref[t] + jnp.dot(h1, whh1, preferred_element_type=jnp.float32)
        h1, c1 = cell(g1, c1)
        g2 = jnp.dot(h1, w2t, preferred_element_type=jnp.float32) + g2_part
        h2, c2 = cell(g2, c2)
        # Output projection on VPU/XLU, off the critical chain.
        outs.append(jnp.sum(h2 * wl, axis=-1, keepdims=True) + bl)

    # ---- phase 2: feedback ("future") rollout (statically unrolled) ----
    for _ in range(future):
        g2_part = jnp.dot(h2, w2b, preferred_element_type=jnp.float32) + b2
        # Feedback folded into a matmul: h2 @ wfb + b1p == out_prev*wih1 + b1.
        g1 = (jnp.dot(h1, whh1, preferred_element_type=jnp.float32)
              + jnp.dot(h2, wfb, preferred_element_type=jnp.float32)
              + b1p)
        h1, c1 = cell(g1, c1)
        g2 = jnp.dot(h1, w2t, preferred_element_type=jnp.float32) + g2_part
        h2, c2 = cell(g2, c2)
        outs.append(jnp.sum(h2 * wl, axis=-1, keepdims=True) + bl)

    # Single lane-dense store (output padded to a multiple of 128 lanes).
    pad = out_ref.shape[1] - total
    if pad > 0:
        outs.append(jnp.zeros((B, pad), jnp.float32))
    out_ref[...] = jnp.concatenate(outs, axis=1)


# ---------------------------------------------------------------------------
# Parameter padding / pre-fusion (done ONCE at init, outside the jit)
# ---------------------------------------------------------------------------
def _pad_gate_cols(w):
    """(rows, 4*H) -> (rows, 4*H_PAD): each gate block zero-padded to H_PAD."""
    r = w.shape[0]
    w4 = w.reshape(r, 4, H)
    w4 = jnp.pad(w4, ((0, 0), (0, 0), (0, H_PAD - H)))
    return w4.reshape(r, 4 * H_PAD)


def _pad_rows(w):
    """(H, cols) -> (H_PAD, cols) with zero rows for the padded state lanes."""
    return jnp.pad(w, ((0, H_PAD - w.shape[0]), (0, 0)))


def prepare_params(params):
    """Pad to H_PAD lanes and pre-fuse the phase-2 feedback matrices."""
    wih1 = _pad_gate_cols(params["wih1_t"])                    # (1, 512)
    whh1 = _pad_rows(_pad_gate_cols(params["whh1_t"]))         # (128, 512)
    b1 = _pad_gate_cols(params["b1"])                          # (1, 512)
    w2_top = _pad_rows(_pad_gate_cols(params["wih2_t"]))       # (128, 512)
    w2_bot = _pad_rows(_pad_gate_cols(params["whh2_t"]))       # (128, 512)
    b2 = _pad_gate_cols(params["b2"])                          # (1, 512)
    wl = jnp.pad(params["wl_t"].T, ((0, 0), (0, H_PAD - H)))   # (1, 128)
    bl = params["bl"]                                          # (1, 1)
    # Phase-2 feedback:  out*wih1 + b1 == h2 @ (wl^T @ wih1) + (b1 + bl*wih1)
    # (rank-1 matrix; zero rows for padded h2 lanes, zero cols for padded gates)
    w_fb = jnp.dot(wl.T, wih1)                                 # (128, 512)
    b1p = b1 + bl * wih1                                       # (1, 512)
    return dict(wih1=wih1, whh1=whh1, b1=b1, w2_top=w2_top, w2_bot=w2_bot,
                b2=b2, wl=wl, bl=bl, w_fb=w_fb, b1p=b1p)


@functools.partial(jax.jit, static_argnames=("future",))
def sequence_forward(x, pp, future=0):
    B, T = x.shape
    total = T + future
    out_pad = pl.cdiv(total, 128) * 128
    # Hoist the phase-1 input-gate contributions (incl. b1) out of the kernel
    # loop: (T, B, 4*HP), sliced per step along the leading dim in the kernel.
    xg_all = x.T[:, :, None] * pp["wih1"][None, :, :] + pp["b1"][None, :, :]

    vmem = pl.BlockSpec(memory_space=pltpu.MemorySpace.VMEM)
    kernel = functools.partial(_sequence_kernel, future=future)
    out = pl.pallas_call(
        kernel,
        out_shape=jax.ShapeDtypeStruct((B, out_pad), jnp.float32),
        in_specs=[vmem] * 9,
        out_specs=vmem,
    )(xg_all, pp["whh1"], pp["w2_top"], pp["w2_bot"], pp["b2"],
      pp["w_fb"], pp["b1p"], pp["wl"], pp["bl"])
    return out[:, :total]  # (B, T + future)


# ---------------------------------------------------------------------------
# Init + pure-JAX reference (logical, unpadded H=51)
# ---------------------------------------------------------------------------
def init_params(key):
    """Deterministic init mimicking PyTorch's U(-1/sqrt(H), 1/sqrt(H))."""
    bound = 1.0 / float(np.sqrt(H))
    keys = jax.random.split(key, 10)

    def u(k, shape):
        return jax.random.uniform(k, shape, jnp.float32, -bound, bound)

    w_ih1 = u(keys[0], (4 * H, 1))
    w_hh1 = u(keys[1], (4 * H, H))
    b_ih1 = u(keys[2], (4 * H,))
    b_hh1 = u(keys[3], (4 * H,))
    w_ih2 = u(keys[4], (4 * H, H))
    w_hh2 = u(keys[5], (4 * H, H))
    b_ih2 = u(keys[6], (4 * H,))
    b_hh2 = u(keys[7], (4 * H,))
    w_l = u(keys[8], (1, H))
    b_l = u(keys[9], (1,))

    return dict(
        wih1_t=w_ih1.T, whh1_t=w_hh1.T, b1=(b_ih1 + b_hh1).reshape(1, 4 * H),
        wih2_t=w_ih2.T, whh2_t=w_hh2.T, b2=(b_ih2 + b_hh2).reshape(1, 4 * H),
        wl_t=w_l.T, bl=b_l.reshape(1, 1),
    )


def _lstm_cell_ref(x, h, c, w_ih_t, w_hh_t, b):
    gates = (jnp.dot(x, w_ih_t, preferred_element_type=jnp.float32)
             + jnp.dot(h, w_hh_t, preferred_element_type=jnp.float32)
             + b)
    i = jax.nn.sigmoid(gates[:, 0 * H:1 * H])
    f = jax.nn.sigmoid(gates[:, 1 * H:2 * H])
    g = jnp.tanh(gates[:, 2 * H:3 * H])
    o = jax.nn.sigmoid(gates[:, 3 * H:4 * H])
    c_new = f * c + i * g
    h_new = o * jnp.tanh(c_new)
    return h_new, c_new


def sequence_ref(x, params, future=0):
    """Pure-JAX reference of the PyTorch forward (for verification)."""
    B, T = x.shape
    h1 = c1 = h2 = c2 = jnp.ones((B, H), jnp.float32)
    out = jnp.zeros((B, 1), jnp.float32)
    outputs = []
    for t in range(T + future):
        inp = x[:, t:t + 1] if t < T else out
        h1, c1 = _lstm_cell_ref(inp, h1, c1, params["wih1_t"], params["whh1_t"], params["b1"])
        h2, c2 = _lstm_cell_ref(h1, h2, c2, params["wih2_t"], params["whh2_t"], params["b2"])
        out = jnp.dot(h2, params["wl_t"]) + params["bl"]
        outputs.append(out)
    return jnp.concatenate(outputs, axis=1)  # (B, T + future)


if __name__ == "__main__":
    B, T, FUTURE = 2, 8, 3
    key = jax.random.PRNGKey(0)
    kx, kp = jax.random.split(key)
    x = jax.random.normal(kx, (B, T), jnp.float32)
    params = init_params(kp)
    pp = prepare_params(params)   # pad / pre-fuse once, outside the jit

    # Default-call semantics (future=0) and future-rollout semantics.
    out0 = jax.block_until_ready(sequence_forward(x, pp, future=0))
    out_f = jax.block_until_ready(sequence_forward(x, pp, future=FUTURE))

    ref0 = sequence_ref(x, params, future=0)
    ref_f = sequence_ref(x, params, future=FUTURE)

    assert out0.shape == (B, T)
    assert out_f.shape == (B, T + FUTURE)
    np.testing.assert_allclose(np.asarray(out0), np.asarray(ref0), rtol=2e-5, atol=2e-5)
    np.testing.assert_allclose(np.asarray(out_f), np.asarray(ref_f), rtol=2e-5, atol=2e-5)

    print("KERNEL_OK")
</pallas_src>

<mosaic_0001>
module attributes {stable_mosaic.version = 11 : i64} {
  func.func @_sequence_kernel(%arg0: memref<8x2x512xf32, #tpu.memory_space<vmem>>, %arg1: memref<128x512xf32, #tpu.memory_space<vmem>>, %arg2: memref<128x512xf32, #tpu.memory_space<vmem>>, %arg3: memref<128x512xf32, #tpu.memory_space<vmem>>, %arg4: memref<1x512xf32, #tpu.memory_space<vmem>>, %arg5: memref<128x512xf32, #tpu.memory_space<vmem>>, %arg6: memref<1x512xf32, #tpu.memory_space<vmem>>, %arg7: memref<1x128xf32, #tpu.memory_space<vmem>>, %arg8: memref<1x1xf32, #tpu.memory_space<vmem>>, %arg9: memref<2x128xf32, #tpu.memory_space<vmem>>) attributes {dimension_semantics = [], scalar_prefetch = 0 : i64, scratch_operands = 0 : i64, tpu.core_type = #tpu.core_type<tc>} {
    %c0 = arith.constant 0 : index
    %c0_0 = arith.constant 0 : index
    %0 = vector.load %arg1[%c0, %c0_0] : memref<128x512xf32, #tpu.memory_space<vmem>>, vector<128x512xf32>
    %c0_1 = arith.constant 0 : index
    %c0_2 = arith.constant 0 : index
    %1 = vector.load %arg2[%c0_1, %c0_2] : memref<128x512xf32, #tpu.memory_space<vmem>>, vector<128x512xf32>
    %c0_3 = arith.constant 0 : index
    %c0_4 = arith.constant 0 : index
    %2 = vector.load %arg3[%c0_3, %c0_4] : memref<128x512xf32, #tpu.memory_space<vmem>>, vector<128x512xf32>
    %c0_5 = arith.constant 0 : index
    %c0_6 = arith.constant 0 : index
    %3 = vector.load %arg4[%c0_5, %c0_6] : memref<1x512xf32, #tpu.memory_space<vmem>>, vector<1x512xf32>
    %c0_7 = arith.constant 0 : index
    %c0_8 = arith.constant 0 : index
    %4 = vector.load %arg7[%c0_7, %c0_8] : memref<1x128xf32, #tpu.memory_space<vmem>>, vector<1x128xf32>
    %c0_9 = arith.constant 0 : index
    %c0_10 = arith.constant 0 : index
    %5 = vector.load %arg8[%c0_9, %c0_10] : memref<1x1xf32, #tpu.memory_space<vmem>>, vector<1x1xf32>
    %cst = arith.constant 1.000000e+00 : f32
    %6 = vector.broadcast %cst : f32 to vector<2x128xf32>
    %cst_11 = arith.constant dense<0.000000e+00> : vector<2x512xf32>
    %7 = tpu.matmul %6, %2, %cst_11 {dimension_numbers = #tpu.dot_dimension_numbers<[1], [0], [0], [1], [0, 0, 1, 1], [], []>} : vector<2x128xf32>, vector<128x512xf32>, vector<2x512xf32> -> vector<2x512xf32>
    %8 = vector.broadcast %3 : vector<1x512xf32> to vector<2x512xf32>
    %9 = arith.addf %7, %8 : vector<2x512xf32>
    %c0_12 = arith.constant 0 : index
    %c0_13 = arith.constant 0 : index
    %c0_14 = arith.constant 0 : index
    %10 = vector.load %arg0[%c0_12, %c0_13, %c0_14] : memref<8x2x512xf32, #tpu.memory_space<vmem>>, vector<1x2x512xf32>
    %11 = vector.shape_cast %10 : vector<1x2x512xf32> to vector<2x512xf32>
    %cst_15 = arith.constant dense<0.000000e+00> : vector<2x512xf32>
    %12 = tpu.matmul %6, %0, %cst_15 {dimension_numbers = #tpu.dot_dimension_numbers<[1], [0], [0], [1], [0, 0, 1, 1], [], []>} : vector<2x128xf32>, vector<128x512xf32>, vector<2x512xf32> -> vector<2x512xf32>
    %13 = arith.addf %11, %12 : vector<2x512xf32>
    %14 = vector.extract_strided_slice %13 {offsets = [0, 0], sizes = [2, 128], strides = [1, 1]} : vector<2x512xf32> to vector<2x128xf32>
    %15 = arith.negf %14 : vector<2x128xf32>
    %16 = math.exp %15 : vector<2x128xf32>
    %cst_16 = arith.constant 1.000000e+00 : f32
    %17 = vector.broadcast %cst_16 : f32 to vector<2x128xf32>
    %18 = arith.addf %17, %16 : vector<2x128xf32>
    %19 = arith.divf %17, %18 : vector<2x128xf32>
    %20 = vector.extract_strided_slice %13 {offsets = [0, 128], sizes = [2, 128], strides = [1, 1]} : vector<2x512xf32> to vector<2x128xf32>
    %21 = arith.negf %20 : vector<2x128xf32>
    %22 = math.exp %21 : vector<2x128xf32>
    %cst_17 = arith.constant 1.000000e+00 : f32
    %23 = vector.broadcast %cst_17 : f32 to vector<2x128xf32>
    %24 = arith.addf %23, %22 : vector<2x128xf32>
    %25 = arith.divf %23, %24 : vector<2x128xf32>
    %26 = vector.extract_strided_slice %13 {offsets = [0, 256], sizes = [2, 128], strides = [1, 1]} : vector<2x512xf32> to vector<2x128xf32>
    %27 = math.tanh %26 : vector<2x128xf32>
    %28 = vector.extract_strided_slice %13 {offsets = [0, 384], sizes = [2, 128], strides = [1, 1]} : vector<2x512xf32> to vector<2x128xf32>
    %29 = arith.negf %28 : vector<2x128xf32>
    %30 = math.exp %29 : vector<2x128xf32>
    %cst_18 = arith.constant 1.000000e+00 : f32
    %31 = vector.broadcast %cst_18 : f32 to vector<2x128xf32>
    %32 = arith.addf %31, %30 : vector<2x128xf32>
    %33 = arith.divf %31, %32 : vector<2x128xf32>
    %34 = arith.mulf %25, %6 : vector<2x128xf32>
    %35 = arith.mulf %19, %27 : vector<2x128xf32>
    %36 = arith.addf %34, %35 : vector<2x128xf32>
    %37 = math.tanh %36 : vector<2x128xf32>
    %38 = arith.mulf %33, %37 : vector<2x128xf32>
    %cst_19 = arith.constant dense<0.000000e+00> : vector<2x512xf32>
    %39 = tpu.matmul %38, %1, %cst_19 {dimension_numbers = #tpu.dot_dimension_numbers<[1], [0], [0], [1], [0, 0, 1, 1], [], []>} : vector<2x128xf32>, vector<128x512xf32>, vector<2x512xf32> -> vector<2x512xf32>
    %40 = arith.addf %39, %9 : vector<2x512xf32>
    %41 = vector.extract_strided_slice %40 {offsets = [0, 0], sizes = [2, 128], strides = [1, 1]} : vector<2x512xf32> to vector<2x128xf32>
    %42 = arith.negf %41 : vector<2x128xf32>
    %43 = math.exp %42 : vector<2x128xf32>
    %cst_20 = arith.constant 1.000000e+00 : f32
    %44 = vector.broadcast %cst_20 : f32 to vector<2x128xf32>
    %45 = arith.addf %44, %43 : vector<2x128xf32>
    %46 = arith.divf %44, %45 : vector<2x128xf32>
    %47 = vector.extract_strided_slice %40 {offsets = [0, 128], sizes = [2, 128], strides = [1, 1]} : vector<2x512xf32> to vector<2x128xf32>
    %48 = arith.negf %47 : vector<2x128xf32>
    %49 = math.exp %48 : vector<2x128xf32>
    %cst_21 = arith.constant 1.000000e+00 : f32
    %50 = vector.broadcast %cst_21 : f32 to vector<2x128xf32>
    %51 = arith.addf %50, %49 : vector<2x128xf32>
    %52 = arith.divf %50, %51 : vector<2x128xf32>
    %53 = vector.extract_strided_slice %40 {offsets = [0, 256], sizes = [2, 128], strides = [1, 1]} : vector<2x512xf32> to vector<2x128xf32>
    %54 = math.tanh %53 : vector<2x128xf32>
    %55 = vector.extract_strided_slice %40 {offsets = [0, 384], sizes = [2, 128], strides = [1, 1]} : vector<2x512xf32> to vector<2x128xf32>
    %56 = arith.negf %55 : vector<2x128xf32>
    %57 = math.exp %56 : vector<2x128xf32>
    %cst_22 = arith.constant 1.000000e+00 : f32
    %58 = vector.broadcast %cst_22 : f32 to vector<2x128xf32>
    %59 = arith.addf %58, %57 : vector<2x128xf32>
    %60 = arith.divf %58, %59 : vector<2x128xf32>
    %61 = arith.mulf %52, %6 : vector<2x128xf32>
    %62 = arith.mulf %46, %54 : vector<2x128xf32>
    %63 = arith.addf %61, %62 : vector<2x128xf32>
    %64 = math.tanh %63 : vector<2x128xf32>
    %65 = arith.mulf %60, %64 : vector<2x128xf32>
    %66 = vector.broadcast %4 : vector<1x128xf32> to vector<2x128xf32>
    %67 = arith.mulf %65, %66 : vector<2x128xf32>
    %cst_23 = arith.constant dense<0.000000e+00> : vector<2xf32>
    %68 = vector.multi_reduction <add>, %67, %cst_23 [1] : vector<2x128xf32> to vector<2xf32>
    %69 = vector.shape_cast %68 : vector<2xf32> to vector<2x1xf32>
    %70 = vector.broadcast %5 : vector<1x1xf32> to vector<2x1xf32>
    %71 = arith.addf %69, %70 : vector<2x1xf32>
    %cst_24 = arith.constant dense<0.000000e+00> : vector<2x512xf32>
    %72 = tpu.matmul %65, %2, %cst_24 {dimension_numbers = #tpu.dot_dimension_numbers<[1], [0], [0], [1], [0, 0, 1, 1], [], []>} : vector<2x128xf32>, vector<128x512xf32>, vector<2x512xf32> -> vector<2x512xf32>
    %73 = vector.broadcast %3 : vector<1x512xf32> to vector<2x512xf32>
    %74 = arith.addf %72, %73 : vector<2x512xf32>
    %c1 = arith.constant 1 : index
    %c0_25 = arith.constant 0 : index
    %c0_26 = arith.constant 0 : index
    %75 = vector.load %arg0[%c1, %c0_25, %c0_26] : memref<8x2x512xf32, #tpu.memory_space<vmem>>, vector<1x2x512xf32>
    %76 = vector.shape_cast %75 : vector<1x2x512xf32> to vector<2x512xf32>
    %cst_27 = arith.constant dense<0.000000e+00> : vector<2x512xf32>
    %77 = tpu.matmul %38, %0, %cst_27 {dimension_numbers = #tpu.dot_dimension_numbers<[1], [0], [0], [1], [0, 0, 1, 1], [], []>} : vector<2x128xf32>, vector<128x512xf32>, vector<2x512xf32> -> vector<2x512xf32>
    %78 = arith.addf %76, %77 : vector<2x512xf32>
    %79 = vector.extract_strided_slice %78 {offsets = [0, 0], sizes = [2, 128], strides = [1, 1]} : vector<2x512xf32> to vector<2x128xf32>
    %80 = arith.negf %79 : vector<2x128xf32>
    %81 = math.exp %80 : vector<2x128xf32>
    %cst_28 = arith.constant 1.000000e+00 : f32
    %82 = vector.broadcast %cst_28 : f32 to vector<2x128xf32>
    %83 = arith.addf %82, %81 : vector<2x128xf32>
    %84 = arith.divf %82, %83 : vector<2x128xf32>
    %85 = vector.extract_strided_slice %78 {offsets = [0, 128], sizes = [2, 128], strides = [1, 1]} : vector<2x512xf32> to vector<2x128xf32>
    %86 = arith.negf %85 : vector<2x128xf32>
    %87 = math.exp %86 : vector<2x128xf32>
    %cst_29 = arith.constant 1.000000e+00 : f32
    %88 = vector.broadcast %cst_29 : f32 to vector<2x128xf32>
    %89 = arith.addf %88, %87 : vector<2x128xf32>
    %90 = arith.divf %88, %89 : vector<2x128xf32>
    %91 = vector.extract_strided_slice %78 {offsets = [0, 256], sizes = [2, 128], strides = [1, 1]} : vector<2x512xf32> to vector<2x128xf32>
    %92 = math.tanh %91 : vector<2x128xf32>
    %93 = vector.extract_strided_slice %78 {offsets = [0, 384], sizes = [2, 128], strides = [1, 1]} : vector<2x512xf32> to vector<2x128xf32>
    %94 = arith.negf %93 : vector<2x128xf32>
    %95 = math.exp %94 : vector<2x128xf32>
    %cst_30 = arith.constant 1.000000e+00 : f32
    %96 = vector.broadcast %cst_30 : f32 to vector<2x128xf32>
    %97 = arith.addf %96, %95 : vector<2x128xf32>
    %98 = arith.divf %96, %97 : vector<2x128xf32>
    %99 = arith.mulf %90, %36 : vector<2x128xf32>
    %100 = arith.mulf %84, %92 : vector<2x128xf32>
    %101 = arith.addf %99, %100 : vector<2x128xf32>
    %102 = math.tanh %101 : vector<2x128xf32>
    %103 = arith.mulf %98, %102 : vector<2x128xf32>
    %cst_31 = arith.constant dense<0.000000e+00> : vector<2x512xf32>
    %104 = tpu.matmul %103, %1, %cst_31 {dimension_numbers = #tpu.dot_dimension_numbers<[1], [0], [0], [1], [0, 0, 1, 1], [], []>} : vector<2x128xf32>, vector<128x512xf32>, vector<2x512xf32> -> vector<2x512xf32>
    %105 = arith.addf %104, %74 : vector<2x512xf32>
    %106 = vector.extract_strided_slice %105 {offsets = [0, 0], sizes = [2, 128], strides = [1, 1]} : vector<2x512xf32> to vector<2x128xf32>
    %107 = arith.negf %106 : vector<2x128xf32>
    %108 = math.exp %107 : vector<2x128xf32>
    %cst_32 = arith.constant 1.000000e+00 : f32
    %109 = vector.broadcast %cst_32 : f32 to vector<2x128xf32>
    %110 = arith.addf %109, %108 : vector<2x128xf32>
    %111 = arith.divf %109, %110 : vector<2x128xf32>
    %112 = vector.extract_strided_slice %105 {offsets = [0, 128], sizes = [2, 128], strides = [1, 1]} : vector<2x512xf32> to vector<2x128xf32>
    %113 = arith.negf %112 : vector<2x128xf32>
    %114 = math.exp %113 : vector<2x128xf32>
    %cst_33 = arith.constant 1.000000e+00 : f32
    %115 = vector.broadcast %cst_33 : f32 to vector<2x128xf32>
    %116 = arith.addf %115, %114 : vector<2x128xf32>
    %117 = arith.divf %115, %116 : vector<2x128xf32>
    %118 = vector.extract_strided_slice %105 {offsets = [0, 256], sizes = [2, 128], strides = [1, 1]} : vector<2x512xf32> to vector<2x128xf32>
    %119 = math.tanh %118 : vector<2x128xf32>
    %120 = vector.extract_strided_slice %105 {offsets = [0, 384], sizes = [2, 128], strides = [1, 1]} : vector<2x512xf32> to vector<2x128xf32>
    %121 = arith.negf %120 : vector<2x128xf32>
    %122 = math.exp %121 : vector<2x128xf32>
    %cst_34 = arith.constant 1.000000e+00 : f32
    %123 = vector.broadcast %cst_34 : f32 to vector<2x128xf32>
    %124 = arith.addf %123, %122 : vector<2x128xf32>
    %125 = arith.divf %123, %124 : vector<2x128xf32>
    %126 = arith.mulf %117, %63 : vector<2x128xf32>
    %127 = arith.mulf %111, %119 : vector<2x128xf32>
    %128 = arith.addf %126, %127 : vector<2x128xf32>
    %129 = math.tanh %128 : vector<2x128xf32>
    %130 = arith.mulf %125, %129 : vector<2x128xf32>
    %131 = vector.broadcast %4 : vector<1x128xf32> to vector<2x128xf32>
    %132 = arith.mulf %130, %131 : vector<2x128xf32>
    %cst_35 = arith.constant dense<0.000000e+00> : vector<2xf32>
    %133 = vector.multi_reduction <add>, %132, %cst_35 [1] : vector<2x128xf32> to vector<2xf32>
    %134 = vector.shape_cast %133 : vector<2xf32> to vector<2x1xf32>
    %135 = vector.broadcast %5 : vector<1x1xf32> to vector<2x1xf32>
    %136 = arith.addf %134, %135 : vector<2x1xf32>
    %cst_36 = arith.constant dense<0.000000e+00> : vector<2x512xf32>
    %137 = tpu.matmul %130, %2, %cst_36 {dimension_numbers = #tpu.dot_dimension_numbers<[1], [0], [0], [1], [0, 0, 1, 1], [], []>} : vector<2x128xf32>, vector<128x512xf32>, vector<2x512xf32> -> vector<2x512xf32>
    %138 = vector.broadcast %3 : vector<1x512xf32> to vector<2x512xf32>
    %139 = arith.addf %137, %138 : vector<2x512xf32>
    %c2 = arith.constant 2 : index
    %c0_37 = arith.constant 0 : index
    %c0_38 = arith.constant 0 : index
    %140 = vector.load %arg0[%c2, %c0_37, %c0_38] : memref<8x2x512xf32, #tpu.memory_space<vmem>>, vector<1x2x512xf32>
    %141 = vector.shape_cast %140 : vector<1x2x512xf32> to vector<2x512xf32>
    %cst_39 = arith.constant dense<0.000000e+00> : vector<2x512xf32>
    %142 = tpu.matmul %103, %0, %cst_39 {dimension_numbers = #tpu.dot_dimension_numbers<[1], [0], [0], [1], [0, 0, 1, 1], [], []>} : vector<2x128xf32>, vector<128x512xf32>, vector<2x512xf32> -> vector<2x512xf32>
    %143 = arith.addf %141, %142 : vector<2x512xf32>
    %144 = vector.extract_strided_slice %143 {offsets = [0, 0], sizes = [2, 128], strides = [1, 1]} : vector<2x512xf32> to vector<2x128xf32>
    %145 = arith.negf %144 : vector<2x128xf32>
    %146 = math.exp %145 : vector<2x128xf32>
    %cst_40 = arith.constant 1.000000e+00 : f32
    %147 = vector.broadcast %cst_40 : f32 to vector<2x128xf32>
    %148 = arith.addf %147, %146 : vector<2x128xf32>
    %149 = arith.divf %147, %148 : vector<2x128xf32>
    %150 = vector.extract_strided_slice %143 {offsets = [0, 128], sizes = [2, 128], strides = [1, 1]} : vector<2x512xf32> to vector<2x128xf32>
    %151 = arith.negf %150 : vector<2x128xf32>
    %152 = math.exp %151 : vector<2x128xf32>
    %cst_41 = arith.constant 1.000000e+00 : f32
    %153 = vector.broadcast %cst_41 : f32 to vector<2x128xf32>
    %154 = arith.addf %153, %152 : vector<2x128xf32>
    %155 = arith.divf %153, %154 : vector<2x128xf32>
    %156 = vector.extract_strided_slice %143 {offsets = [0, 256], sizes = [2, 128], strides = [1, 1]} : vector<2x512xf32> to vector<2x128xf32>
    %157 = math.tanh %156 : vector<2x128xf32>
    %158 = vector.extract_strided_slice %143 {offsets = [0, 384], sizes = [2, 128], strides = [1, 1]} : vector<2x512xf32> to vector<2x128xf32>
    %159 = arith.negf %158 : vector<2x128xf32>
    %160 = math.exp %159 : vector<2x128xf32>
    %cst_42 = arith.constant 1.000000e+00 : f32
    %161 = vector.broadcast %cst_42 : f32 to vector<2x128xf32>
    %162 = arith.addf %161, %160 : vector<2x128xf32>
    %163 = arith.divf %161, %162 : vector<2x128xf32>
    %164 = arith.mulf %155, %101 : vector<2x128xf32>
    %165 = arith.mulf %149, %157 : vector<2x128xf32>
    %166 = arith.addf %164, %165 : vector<2x128xf32>
    %167 = math.tanh %166 : vector<2x128xf32>
    %168 = arith.mulf %163, %167 : vector<2x128xf32>
    %cst_43 = arith.constant dense<0.000000e+00> : vector<2x512xf32>
    %169 = tpu.matmul %168, %1, %cst_43 {dimension_numbers = #tpu.dot_dimension_numbers<[1], [0], [0], [1], [0, 0, 1, 1], [], []>} : vector<2x128xf32>, vector<128x512xf32>, vector<2x512xf32> -> vector<2x512xf32>
    %170 = arith.addf %169, %139 : vector<2x512xf32>
    %171 = vector.extract_strided_slice %170 {offsets = [0, 0], sizes = [2, 128], strides = [1, 1]} : vector<2x512xf32> to vector<2x128xf32>
    %172 = arith.negf %171 : vector<2x128xf32>
    %173 = math.exp %172 : vector<2x128xf32>
    %cst_44 = arith.constant 1.000000e+00 : f32
    %174 = vector.broadcast %cst_44 : f32 to vector<2x128xf32>
    %175 = arith.addf %174, %173 : vector<2x128xf32>
    %176 = arith.divf %174, %175 : vector<2x128xf32>
    %177 = vector.extract_strided_slice %170 {offsets = [0, 128], sizes = [2, 128], strides = [1, 1]} : vector<2x512xf32> to vector<2x128xf32>
    %178 = arith.negf %177 : vector<2x128xf32>
    %179 = math.exp %178 : vector<2x128xf32>
    %cst_45 = arith.constant 1.000000e+00 : f32
    %180 = vector.broadcast %cst_45 : f32 to vector<2x128xf32>
    %181 = arith.addf %180, %179 : vector<2x128xf32>
    %182 = arith.divf %180, %181 : vector<2x128xf32>
    %183 = vector.extract_strided_slice %170 {offsets = [0, 256], sizes = [2, 128], strides = [1, 1]} : vector<2x512xf32> to vector<2x128xf32>
    %184 = math.tanh %183 : vector<2x128xf32>
    %185 = vector.extract_strided_slice %170 {offsets = [0, 384], sizes = [2, 128], strides = [1, 1]} : vector<2x512xf32> to vector<2x128xf32>
    %186 = arith.negf %185 : vector<2x128xf32>
    %187 = math.exp %186 : vector<2x128xf32>
    %cst_46 = arith.constant 1.000000e+00 : f32
    %188 = vector.broadcast %cst_46 : f32 to vector<2x128xf32>
    %189 = arith.addf %188, %187 : vector<2x128xf32>
    %190 = arith.divf %188, %189 : vector<2x128xf32>
    %191 = arith.mulf %182, %128 : vector<2x128xf32>
    %192 = arith.mulf %176, %184 : vector<2x128xf32>
    %193 = arith.addf %191, %192 : vector<2x128xf32>
    %194 = math.tanh %193 : vector<2x128xf32>
    %195 = arith.mulf %190, %194 : vector<2x128xf32>
    %196 = vector.broadcast %4 : vector<1x128xf32> to vector<2x128xf32>
    %197 = arith.mulf %195, %196 : vector<2x128xf32>
    %cst_47 = arith.constant dense<0.000000e+00> : vector<2xf32>
    %198 = vector.multi_reduction <add>, %197, %cst_47 [1] : vector<2x128xf32> to vector<2xf32>
    %199 = vector.shape_cast %198 : vector<2xf32> to vector<2x1xf32>
    %200 = vector.broadcast %5 : vector<1x1xf32> to vector<2x1xf32>
    %201 = arith.addf %199, %200 : vector<2x1xf32>
    %cst_48 = arith.constant dense<0.000000e+00> : vector<2x512xf32>
    %202 = tpu.matmul %195, %2, %cst_48 {dimension_numbers = #tpu.dot_dimension_numbers<[1], [0], [0], [1], [0, 0, 1, 1], [], []>} : vector<2x128xf32>, vector<128x512xf32>, vector<2x512xf32> -> vector<2x512xf32>
    %203 = vector.broadcast %3 : vector<1x512xf32> to vector<2x512xf32>
    %204 = arith.addf %202, %203 : vector<2x512xf32>
    %c3 = arith.constant 3 : index
    %c0_49 = arith.constant 0 : index
    %c0_50 = arith.constant 0 : index
    %205 = vector.load %arg0[%c3, %c0_49, %c0_50] : memref<8x2x512xf32, #tpu.memory_space<vmem>>, vector<1x2x512xf32>
    %206 = vector.shape_cast %205 : vector<1x2x512xf32> to vector<2x512xf32>
    %cst_51 = arith.constant dense<0.000000e+00> : vector<2x512xf32>
    %207 = tpu.matmul %168, %0, %cst_51 {dimension_numbers = #tpu.dot_dimension_numbers<[1], [0], [0], [1], [0, 0, 1, 1], [], []>} : vector<2x128xf32>, vector<128x512xf32>, vector<2x512xf32> -> vector<2x512xf32>
    %208 = arith.addf %206, %207 : vector<2x512xf32>
    %209 = vector.extract_strided_slice %208 {offsets = [0, 0], sizes = [2, 128], strides = [1, 1]} : vector<2x512xf32> to vector<2x128xf32>
    %210 = arith.negf %209 : vector<2x128xf32>
    %211 = math.exp %210 : vector<2x128xf32>
    %cst_52 = arith.constant 1.000000e+00 : f32
    %212 = vector.broadcast %cst_52 : f32 to vector<2x128xf32>
    %213 = arith.addf %212, %211 : vector<2x128xf32>
    %214 = arith.divf %212, %213 : vector<2x128xf32>
    %215 = vector.extract_strided_slice %208 {offsets = [0, 128], sizes = [2, 128], strides = [1, 1]} : vector<2x512xf32> to vector<2x128xf32>
    %216 = arith.negf %215 : vector<2x128xf32>
    %217 = math.exp %216 : vector<2x128xf32>
    %cst_53 = arith.constant 1.000000e+00 : f32
    %218 = vector.broadcast %cst_53 : f32 to vector<2x128xf32>
    %219 = arith.addf %218, %217 : vector<2x128xf32>
    %220 = arith.divf %218, %219 : vector<2x128xf32>
    %221 = vector.extract_strided_slice %208 {offsets = [0, 256], sizes = [2, 128], strides = [1, 1]} : vector<2x512xf32> to vector<2x128xf32>
    %222 = math.tanh %221 : vector<2x128xf32>
    %223 = vector.extract_strided_slice %208 {offsets = [0, 384], sizes = [2, 128], strides = [1, 1]} : vector<2x512xf32> to vector<2x128xf32>
    %224 = arith.negf %223 : vector<2x128xf32>
    %225 = math.exp %224 : vector<2x128xf32>
    %cst_54 = arith.constant 1.000000e+00 : f32
    %226 = vector.broadcast %cst_54 : f32 to vector<2x128xf32>
    %227 = arith.addf %226, %225 : vector<2x128xf32>
    %228 = arith.divf %226, %227 : vector<2x128xf32>
    %229 = arith.mulf %220, %166 : vector<2x128xf32>
    %230 = arith.mulf %214, %222 : vector<2x128xf32>
    %231 = arith.addf %229, %230 : vector<2x128xf32>
    %232 = math.tanh %231 : vector<2x128xf32>
    %233 = arith.mulf %228, %232 : vector<2x128xf32>
    %cst_55 = arith.constant dense<0.000000e+00> : vector<2x512xf32>
    %234 = tpu.matmul %233, %1, %cst_55 {dimension_numbers = #tpu.dot_dimension_numbers<[1], [0], [0], [1], [0, 0, 1, 1], [], []>} : vector<2x128xf32>, vector<128x512xf32>, vector<2x512xf32> -> vector<2x512xf32>
    %235 = arith.addf %234, %204 : vector<2x512xf32>
    %236 = vector.extract_strided_slice %235 {offsets = [0, 0], sizes = [2, 128], strides = [1, 1]} : vector<2x512xf32> to vector<2x128xf32>
    %237 = arith.negf %236 : vector<2x128xf32>
    %238 = math.exp %237 : vector<2x128xf32>
    %cst_56 = arith.constant 1.000000e+00 : f32
    %239 = vector.broadcast %cst_56 : f32 to vector<2x128xf32>
    %240 = arith.addf %239, %238 : vector<2x128xf32>
    %241 = arith.divf %239, %240 : vector<2x128xf32>
    %242 = vector.extract_strided_slice %235 {offsets = [0, 128], sizes = [2, 128], strides = [1, 1]} : vector<2x512xf32> to vector<2x128xf32>
    %243 = arith.negf %242 : vector<2x128xf32>
    %244 = math.exp %243 : vector<2x128xf32>
    %cst_57 = arith.constant 1.000000e+00 : f32
    %245 = vector.broadcast %cst_57 : f32 to vector<2x128xf32>
    %246 = arith.addf %245, %244 : vector<2x128xf32>
    %247 = arith.divf %245, %246 : vector<2x128xf32>
    %248 = vector.extract_strided_slice %235 {offsets = [0, 256], sizes = [2, 128], strides = [1, 1]} : vector<2x512xf32> to vector<2x128xf32>
    %249 = math.tanh %248 : vector<2x128xf32>
    %250 = vector.extract_strided_slice %235 {offsets = [0, 384], sizes = [2, 128], strides = [1, 1]} : vector<2x512xf32> to vector<2x128xf32>
    %251 = arith.negf %250 : vector<2x128xf32>
    %252 = math.exp %251 : vector<2x128xf32>
    %cst_58 = arith.constant 1.000000e+00 : f32
    %253 = vector.broadcast %cst_58 : f32 to vector<2x128xf32>
    %254 = arith.addf %253, %252 : vector<2x128xf32>
    %255 = arith.divf %253, %254 : vector<2x128xf32>
    %256 = arith.mulf %247, %193 : vector<2x128xf32>
    %257 = arith.mulf %241, %249 : vector<2x128xf32>
    %258 = arith.addf %256, %257 : vector<2x128xf32>
    %259 = math.tanh %258 : vector<2x128xf32>
    %260 = arith.mulf %255, %259 : vector<2x128xf32>
    %261 = vector.broadcast %4 : vector<1x128xf32> to vector<2x128xf32>
    %262 = arith.mulf %260, %261 : vector<2x128xf32>
    %cst_59 = arith.constant dense<0.000000e+00> : vector<2xf32>
    %263 = vector.multi_reduction <add>, %262, %cst_59 [1] : vector<2x128xf32> to vector<2xf32>
    %264 = vector.shape_cast %263 : vector<2xf32> to vector<2x1xf32>
    %265 = vector.broadcast %5 : vector<1x1xf32> to vector<2x1xf32>
    %266 = arith.addf %264, %265 : vector<2x1xf32>
    %cst_60 = arith.constant dense<0.000000e+00> : vector<2x512xf32>
    %267 = tpu.matmul %260, %2, %cst_60 {dimension_numbers = #tpu.dot_dimension_numbers<[1], [0], [0], [1], [0, 0, 1, 1], [], []>} : vector<2x128xf32>, vector<128x512xf32>, vector<2x512xf32> -> vector<2x512xf32>
    %268 = vector.broadcast %3 : vector<1x512xf32> to vector<2x512xf32>
    %269 = arith.addf %267, %268 : vector<2x512xf32>
    %c4 = arith.constant 4 : index
    %c0_61 = arith.constant 0 : index
    %c0_62 = arith.constant 0 : index
    %270 = vector.load %arg0[%c4, %c0_61, %c0_62] : memref<8x2x512xf32, #tpu.memory_space<vmem>>, vector<1x2x512xf32>
    %271 = vector.shape_cast %270 : vector<1x2x512xf32> to vector<2x512xf32>
    %cst_63 = arith.constant dense<0.000000e+00> : vector<2x512xf32>
    %272 = tpu.matmul %233, %0, %cst_63 {dimension_numbers = #tpu.dot_dimension_numbers<[1], [0], [0], [1], [0, 0, 1, 1], [], []>} : vector<2x128xf32>, vector<128x512xf32>, vector<2x512xf32> -> vector<2x512xf32>
    %273 = arith.addf %271, %272 : vector<2x512xf32>
    %274 = vector.extract_strided_slice %273 {offsets = [0, 0], sizes = [2, 128], strides = [1, 1]} : vector<2x512xf32> to vector<2x128xf32>
    %275 = arith.negf %274 : vector<2x128xf32>
    %276 = math.exp %275 : vector<2x128xf32>
    %cst_64 = arith.constant 1.000000e+00 : f32
    %277 = vector.broadcast %cst_64 : f32 to vector<2x128xf32>
    %278 = arith.addf %277, %276 : vector<2x128xf32>
    %279 = arith.divf %277, %278 : vector<2x128xf32>
    %280 = vector.extract_strided_slice %273 {offsets = [0, 128], sizes = [2, 128], strides = [1, 1]} : vector<2x512xf32> to vector<2x128xf32>
    %281 = arith.negf %280 : vector<2x128xf32>
    %282 = math.exp %281 : vector<2x128xf32>
    %cst_65 = arith.constant 1.000000e+00 : f32
    %283 = vector.broadcast %cst_65 : f32 to vector<2x128xf32>
    %284 = arith.addf %283, %282 : vector<2x128xf32>
    %285 = arith.divf %283, %284 : vector<2x128xf32>
    %286 = vector.extract_strided_slice %273 {offsets = [0, 256], sizes = [2, 128], strides = [1, 1]} : vector<2x512xf32> to vector<2x128xf32>
    %287 = math.tanh %286 : vector<2x128xf32>
    %288 = vector.extract_strided_slice %273 {offsets = [0, 384], sizes = [2, 128], strides = [1, 1]} : vector<2x512xf32> to vector<2x128xf32>
    %289 = arith.negf %288 : vector<2x128xf32>
    %290 = math.exp %289 : vector<2x128xf32>
    %cst_66 = arith.constant 1.000000e+00 : f32
    %291 = vector.broadcast %cst_66 : f32 to vector<2x128xf32>
    %292 = arith.addf %291, %290 : vector<2x128xf32>
    %293 = arith.divf %291, %292 : vector<2x128xf32>
    %294 = arith.mulf %285, %231 : vector<2x128xf32>
    %295 = arith.mulf %279, %287 : vector<2x128xf32>
    %296 = arith.addf %294, %295 : vector<2x128xf32>
    %297 = math.tanh %296 : vector<2x128xf32>
    %298 = arith.mulf %293, %297 : vector<2x128xf32>
    %cst_67 = arith.constant dense<0.000000e+00> : vector<2x512xf32>
    %299 = tpu.matmul %298, %1, %cst_67 {dimension_numbers = #tpu.dot_dimension_numbers<[1], [0], [0], [1], [0, 0, 1, 1], [], []>} : vector<2x128xf32>, vector<128x512xf32>, vector<2x512xf32> -> vector<2x512xf32>
    %300 = arith.addf %299, %269 : vector<2x512xf32>
    %301 = vector.extract_strided_slice %300 {offsets = [0, 0], sizes = [2, 128], strides = [1, 1]} : vector<2x512xf32> to vector<2x128xf32>
    %302 = arith.negf %301 : vector<2x128xf32>
    %303 = math.exp %302 : vector<2x128xf32>
    %cst_68 = arith.constant 1.000000e+00 : f32
    %304 = vector.broadcast %cst_68 : f32 to vector<2x128xf32>
    %305 = arith.addf %304, %303 : vector<2x128xf32>
    %306 = arith.divf %304, %305 : vector<2x128xf32>
    %307 = vector.extract_strided_slice %300 {offsets = [0, 128], sizes = [2, 128], strides = [1, 1]} : vector<2x512xf32> to vector<2x128xf32>
    %308 = arith.negf %307 : vector<2x128xf32>
    %309 = math.exp %308 : vector<2x128xf32>
    %cst_69 = arith.constant 1.000000e+00 : f32
    %310 = vector.broadcast %cst_69 : f32 to vector<2x128xf32>
    %311 = arith.addf %310, %309 : vector<2x128xf32>
    %312 = arith.divf %310, %311 : vector<2x128xf32>
    %313 = vector.extract_strided_slice %300 {offsets = [0, 256], sizes = [2, 128], strides = [1, 1]} : vector<2x512xf32> to vector<2x128xf32>
    %314 = math.tanh %313 : vector<2x128xf32>
    %315 = vector.extract_strided_slice %300 {offsets = [0, 384], sizes = [2, 128], strides = [1, 1]} : vector<2x512xf32> to vector<2x128xf32>
    %316 = arith.negf %315 : vector<2x128xf32>
    %317 = math.exp %316 : vector<2x128xf32>
    %cst_70 = arith.constant 1.000000e+00 : f32
    %318 = vector.broadcast %cst_70 : f32 to vector<2x128xf32>
    %319 = arith.addf %318, %317 : vector<2x128xf32>
    %320 = arith.divf %318, %319 : vector<2x128xf32>
    %321 = arith.mulf %312, %258 : vector<2x128xf32>
    %322 = arith.mulf %306, %314 : vector<2x128xf32>
    %323 = arith.addf %321, %322 : vector<2x128xf32>
    %324 = math.tanh %323 : vector<2x128xf32>
    %325 = arith.mulf %320, %324 : vector<2x128xf32>
    %326 = vector.broadcast %4 : vector<1x128xf32> to vector<2x128xf32>
    %327 = arith.mulf %325, %326 : vector<2x128xf32>
    %cst_71 = arith.constant dense<0.000000e+00> : vector<2xf32>
    %328 = vector.multi_reduction <add>, %327, %cst_71 [1] : vector<2x128xf32> to vector<2xf32>
    %329 = vector.shape_cast %328 : vector<2xf32> to vector<2x1xf32>
    %330 = vector.broadcast %5 : vector<1x1xf32> to vector<2x1xf32>
    %331 = arith.addf %329, %330 : vector<2x1xf32>
    %cst_72 = arith.constant dense<0.000000e+00> : vector<2x512xf32>
    %332 = tpu.matmul %325, %2, %cst_72 {dimension_numbers = #tpu.dot_dimension_numbers<[1], [0], [0], [1], [0, 0, 1, 1], [], []>} : vector<2x128xf32>, vector<128x512xf32>, vector<2x512xf32> -> vector<2x512xf32>
    %333 = vector.broadcast %3 : vector<1x512xf32> to vector<2x512xf32>
    %334 = arith.addf %332, %333 : vector<2x512xf32>
    %c5 = arith.constant 5 : index
    %c0_73 = arith.constant 0 : index
    %c0_74 = arith.constant 0 : index
    %335 = vector.load %arg0[%c5, %c0_73, %c0_74] : memref<8x2x512xf32, #tpu.memory_space<vmem>>, vector<1x2x512xf32>
    %336 = vector.shape_cast %335 : vector<1x2x512xf32> to vector<2x512xf32>
    %cst_75 = arith.constant dense<0.000000e+00> : vector<2x512xf32>
    %337 = tpu.matmul %298, %0, %cst_75 {dimension_numbers = #tpu.dot_dimension_numbers<[1], [0], [0], [1], [0, 0, 1, 1], [], []>} : vector<2x128xf32>, vector<128x512xf32>, vector<2x512xf32> -> vector<2x512xf32>
    %338 = arith.addf %336, %337 : vector<2x512xf32>
    %339 = vector.extract_strided_slice %338 {offsets = [0, 0], sizes = [2, 128], strides = [1, 1]} : vector<2x512xf32> to vector<2x128xf32>
    %340 = arith.negf %339 : vector<2x128xf32>
    %341 = math.exp %340 : vector<2x128xf32>
    %cst_76 = arith.constant 1.000000e+00 : f32
    %342 = vector.broadcast %cst_76 : f32 to vector<2x128xf32>
    %343 = arith.addf %342, %341 : vector<2x128xf32>
    %344 = arith.divf %342, %343 : vector<2x128xf32>
    %345 = vector.extract_strided_slice %338 {offsets = [0, 128], sizes = [2, 128], strides = [1, 1]} : vector<2x512xf32> to vector<2x128xf32>
    %346 = arith.negf %345 : vector<2x128xf32>
    %347 = math.exp %346 : vector<2x128xf32>
    %cst_77 = arith.constant 1.000000e+00 : f32
    %348 = vector.broadcast %cst_77 : f32 to vector<2x128xf32>
    %349 = arith.addf %348, %347 : vector<2x128xf32>
    %350 = arith.divf %348, %349 : vector<2x128xf32>
    %351 = vector.extract_strided_slice %338 {offsets = [0, 256], sizes = [2, 128], strides = [1, 1]} : vector<2x512xf32> to vector<2x128xf32>
    %352 = math.tanh %351 : vector<2x128xf32>
    %353 = vector.extract_strided_slice %338 {offsets = [0, 384], sizes = [2, 128], strides = [1, 1]} : vector<2x512xf32> to vector<2x128xf32>
    %354 = arith.negf %353 : vector<2x128xf32>
    %355 = math.exp %354 : vector<2x128xf32>
    %cst_78 = arith.constant 1.000000e+00 : f32
    %356 = vector.broadcast %cst_78 : f32 to vector<2x128xf32>
    %357 = arith.addf %356, %355 : vector<2x128xf32>
    %358 = arith.divf %356, %357 : vector<2x128xf32>
    %359 = arith.mulf %350, %296 : vector<2x128xf32>
    %360 = arith.mulf %344, %352 : vector<2x128xf32>
    %361 = arith.addf %359, %360 : vector<2x128xf32>
    %362 = math.tanh %361 : vector<2x128xf32>
    %363 = arith.mulf %358, %362 : vector<2x128xf32>
    %cst_79 = arith.constant dense<0.000000e+00> : vector<2x512xf32>
    %364 = tpu.matmul %363, %1, %cst_79 {dimension_numbers = #tpu.dot_dimension_numbers<[1], [0], [0], [1], [0, 0, 1, 1], [], []>} : vector<2x128xf32>, vector<128x512xf32>, vector<2x512xf32> -> vector<2x512xf32>
    %365 = arith.addf %364, %334 : vector<2x512xf32>
    %366 = vector.extract_strided_slice %365 {offsets = [0, 0], sizes = [2, 128], strides = [1, 1]} : vector<2x512xf32> to vector<2x128xf32>
    %367 = arith.negf %366 : vector<2x128xf32>
    %368 = math.exp %367 : vector<2x128xf32>
    %cst_80 = arith.constant 1.000000e+00 : f32
    %369 = vector.broadcast %cst_80 : f32 to vector<2x128xf32>
    %370 = arith.addf %369, %368 : vector<2x128xf32>
    %371 = arith.divf %369, %370 : vector<2x128xf32>
    %372 = vector.extract_strided_slice %365 {offsets = [0, 128], sizes = [2, 128], strides = [1, 1]} : vector<2x512xf32> to vector<2x128xf32>
    %373 = arith.negf %372 : vector<2x128xf32>
    %374 = math.exp %373 : vector<2x128xf32>
    %cst_81 = arith.constant 1.000000e+00 : f32
    %375 = vector.broadcast %cst_81 : f32 to vector<2x128xf32>
    %376 = arith.addf %375, %374 : vector<2x128xf32>
    %377 = arith.divf %375, %376 : vector<2x128xf32>
    %378 = vector.extract_strided_slice %365 {offsets = [0, 256], sizes = [2, 128], strides = [1, 1]} : vector<2x512xf32> to vector<2x128xf32>
    %379 = math.tanh %378 : vector<2x128xf32>
    %380 = vector.extract_strided_slice %365 {offsets = [0, 384], sizes = [2, 128], strides = [1, 1]} : vector<2x512xf32> to vector<2x128xf32>
    %381 = arith.negf %380 : vector<2x128xf32>
    %382 = math.exp %381 : vector<2x128xf32>
    %cst_82 = arith.constant 1.000000e+00 : f32
    %383 = vector.broadcast %cst_82 : f32 to vector<2x128xf32>
    %384 = arith.addf %383, %382 : vector<2x128xf32>
    %385 = arith.divf %383, %384 : vector<2x128xf32>
    %386 = arith.mulf %377, %323 : vector<2x128xf32>
    %387 = arith.mulf %371, %379 : vector<2x128xf32>
    %388 = arith.addf %386, %387 : vector<2x128xf32>
    %389 = math.tanh %388 : vector<2x128xf32>
    %390 = arith.mulf %385, %389 : vector<2x128xf32>
    %391 = vector.broadcast %4 : vector<1x128xf32> to vector<2x128xf32>
    %392 = arith.mulf %390, %391 : vector<2x128xf32>
    %cst_83 = arith.constant dense<0.000000e+00> : vector<2xf32>
    %393 = vector.multi_reduction <add>, %392, %cst_83 [1] : vector<2x128xf32> to vector<2xf32>
    %394 = vector.shape_cast %393 : vector<2xf32> to vector<2x1xf32>
    %395 = vector.broadcast %5 : vector<1x1xf32> to vector<2x1xf32>
    %396 = arith.addf %394, %395 : vector<2x1xf32>
    %cst_84 = arith.constant dense<0.000000e+00> : vector<2x512xf32>
    %397 = tpu.matmul %390, %2, %cst_84 {dimension_numbers = #tpu.dot_dimension_numbers<[1], [0], [0], [1], [0, 0, 1, 1], [], []>} : vector<2x128xf32>, vector<128x512xf32>, vector<2x512xf32> -> vector<2x512xf32>
    %398 = vector.broadcast %3 : vector<1x512xf32> to vector<2x512xf32>
    %399 = arith.addf %397, %398 : vector<2x512xf32>
    %c6 = arith.constant 6 : index
    %c0_85 = arith.constant 0 : index
    %c0_86 = arith.constant 0 : index
    %400 = vector.load %arg0[%c6, %c0_85, %c0_86] : memref<8x2x512xf32, #tpu.memory_space<vmem>>, vector<1x2x512xf32>
    %401 = vector.shape_cast %400 : vector<1x2x512xf32> to vector<2x512xf32>
    %cst_87 = arith.constant dense<0.000000e+00> : vector<2x512xf32>
    %402 = tpu.matmul %363, %0, %cst_87 {dimension_numbers = #tpu.dot_dimension_numbers<[1], [0], [0], [1], [0, 0, 1, 1], [], []>} : vector<2x128xf32>, vector<128x512xf32>, vector<2x512xf32> -> vector<2x512xf32>
    %403 = arith.addf %401, %402 : vector<2x512xf32>
    %404 = vector.extract_strided_slice %403 {offsets = [0, 0], sizes = [2, 128], strides = [1, 1]} : vector<2x512xf32> to vector<2x128xf32>
    %405 = arith.negf %404 : vector<2x128xf32>
    %406 = math.exp %405 : vector<2x128xf32>
    %cst_88 = arith.constant 1.000000e+00 : f32
    %407 = vector.broadcast %cst_88 : f32 to vector<2x128xf32>
    %408 = arith.addf %407, %406 : vector<2x128xf32>
    %409 = arith.divf %407, %408 : vector<2x128xf32>
    %410 = vector.extract_strided_slice %403 {offsets = [0, 128], sizes = [2, 128], strides = [1, 1]} : vector<2x512xf32> to vector<2x128xf32>
    %411 = arith.negf %410 : vector<2x128xf32>
    %412 = math.exp %411 : vector<2x128xf32>
    %cst_89 = arith.constant 1.000000e+00 : f32
    %413 = vector.broadcast %cst_89 : f32 to vector<2x128xf32>
    %414 = arith.addf %413, %412 : vector<2x128xf32>
    %415 = arith.divf %413, %414 : vector<2x128xf32>
    %416 = vector.extract_strided_slice %403 {offsets = [0, 256], sizes = [2, 128], strides = [1, 1]} : vector<2x512xf32> to vector<2x128xf32>
    %417 = math.tanh %416 : vector<2x128xf32>
    %418 = vector.extract_strided_slice %403 {offsets = [0, 384], sizes = [2, 128], strides = [1, 1]} : vector<2x512xf32> to vector<2x128xf32>
    %419 = arith.negf %418 : vector<2x128xf32>
    %420 = math.exp %419 : vector<2x128xf32>
    %cst_90 = arith.constant 1.000000e+00 : f32
    %421 = vector.broadcast %cst_90 : f32 to vector<2x128xf32>
    %422 = arith.addf %421, %420 : vector<2x128xf32>
    %423 = arith.divf %421, %422 : vector<2x128xf32>
    %424 = arith.mulf %415, %361 : vector<2x128xf32>
    %425 = arith.mulf %409, %417 : vector<2x128xf32>
    %426 = arith.addf %424, %425 : vector<2x128xf32>
    %427 = math.tanh %426 : vector<2x128xf32>
    %428 = arith.mulf %423, %427 : vector<2x128xf32>
    %cst_91 = arith.constant dense<0.000000e+00> : vector<2x512xf32>
    %429 = tpu.matmul %428, %1, %cst_91 {dimension_numbers = #tpu.dot_dimension_numbers<[1], [0], [0], [1], [0, 0, 1, 1], [], []>} : vector<2x128xf32>, vector<128x512xf32>, vector<2x512xf32> -> vector<2x512xf32>
    %430 = arith.addf %429, %399 : vector<2x512xf32>
    %431 = vector.extract_strided_slice %430 {offsets = [0, 0], sizes = [2, 128], strides = [1, 1]} : vector<2x512xf32> to vector<2x128xf32>
    %432 = arith.negf %431 : vector<2x128xf32>
    %433 = math.exp %432 : vector<2x128xf32>
    %cst_92 = arith.constant 1.000000e+00 : f32
    %434 = vector.broadcast %cst_92 : f32 to vector<2x128xf32>
    %435 = arith.addf %434, %433 : vector<2x128xf32>
    %436 = arith.divf %434, %435 : vector<2x128xf32>
    %437 = vector.extract_strided_slice %430 {offsets = [0, 128], sizes = [2, 128], strides = [1, 1]} : vector<2x512xf32> to vector<2x128xf32>
    %438 = arith.negf %437 : vector<2x128xf32>
    %439 = math.exp %438 : vector<2x128xf32>
    %cst_93 = arith.constant 1.000000e+00 : f32
    %440 = vector.broadcast %cst_93 : f32 to vector<2x128xf32>
    %441 = arith.addf %440, %439 : vector<2x128xf32>
    %442 = arith.divf %440, %441 : vector<2x128xf32>
    %443 = vector.extract_strided_slice %430 {offsets = [0, 256], sizes = [2, 128], strides = [1, 1]} : vector<2x512xf32> to vector<2x128xf32>
    %444 = math.tanh %443 : vector<2x128xf32>
    %445 = vector.extract_strided_slice %430 {offsets = [0, 384], sizes = [2, 128], strides = [1, 1]} : vector<2x512xf32> to vector<2x128xf32>
    %446 = arith.negf %445 : vector<2x128xf32>
    %447 = math.exp %446 : vector<2x128xf32>
    %cst_94 = arith.constant 1.000000e+00 : f32
    %448 = vector.broadcast %cst_94 : f32 to vector<2x128xf32>
    %449 = arith.addf %448, %447 : vector<2x128xf32>
    %450 = arith.divf %448, %449 : vector<2x128xf32>
    %451 = arith.mulf %442, %388 : vector<2x128xf32>
    %452 = arith.mulf %436, %444 : vector<2x128xf32>
    %453 = arith.addf %451, %452 : vector<2x128xf32>
    %454 = math.tanh %453 : vector<2x128xf32>
    %455 = arith.mulf %450, %454 : vector<2x128xf32>
    %456 = vector.broadcast %4 : vector<1x128xf32> to vector<2x128xf32>
    %457 = arith.mulf %455, %456 : vector<2x128xf32>
    %cst_95 = arith.constant dense<0.000000e+00> : vector<2xf32>
    %458 = vector.multi_reduction <add>, %457, %cst_95 [1] : vector<2x128xf32> to vector<2xf32>
    %459 = vector.shape_cast %458 : vector<2xf32> to vector<2x1xf32>
    %460 = vector.broadcast %5 : vector<1x1xf32> to vector<2x1xf32>
    %461 = arith.addf %459, %460 : vector<2x1xf32>
    %cst_96 = arith.constant dense<0.000000e+00> : vector<2x512xf32>
    %462 = tpu.matmul %455, %2, %cst_96 {dimension_numbers = #tpu.dot_dimension_numbers<[1], [0], [0], [1], [0, 0, 1, 1], [], []>} : vector<2x128xf32>, vector<128x512xf32>, vector<2x512xf32> -> vector<2x512xf32>
    %463 = vector.broadcast %3 : vector<1x512xf32> to vector<2x512xf32>
    %464 = arith.addf %462, %463 : vector<2x512xf32>
    %c7 = arith.constant 7 : index
    %c0_97 = arith.constant 0 : index
    %c0_98 = arith.constant 0 : index
    %465 = vector.load %arg0[%c7, %c0_97, %c0_98] : memref<8x2x512xf32, #tpu.memory_space<vmem>>, vector<1x2x512xf32>
    %466 = vector.shape_cast %465 : vector<1x2x512xf32> to vector<2x512xf32>
    %cst_99 = arith.constant dense<0.000000e+00> : vector<2x512xf32>
    %467 = tpu.matmul %428, %0, %cst_99 {dimension_numbers = #tpu.dot_dimension_numbers<[1], [0], [0], [1], [0, 0, 1, 1], [], []>} : vector<2x128xf32>, vector<128x512xf32>, vector<2x512xf32> -> vector<2x512xf32>
    %468 = arith.addf %466, %467 : vector<2x512xf32>
    %469 = vector.extract_strided_slice %468 {offsets = [0, 0], sizes = [2, 128], strides = [1, 1]} : vector<2x512xf32> to vector<2x128xf32>
    %470 = arith.negf %469 : vector<2x128xf32>
    %471 = math.exp %470 : vector<2x128xf32>
    %cst_100 = arith.constant 1.000000e+00 : f32
    %472 = vector.broadcast %cst_100 : f32 to vector<2x128xf32>
    %473 = arith.addf %472, %471 : vector<2x128xf32>
    %474 = arith.divf %472, %473 : vector<2x128xf32>
    %475 = vector.extract_strided_slice %468 {offsets = [0, 128], sizes = [2, 128], strides = [1, 1]} : vector<2x512xf32> to vector<2x128xf32>
    %476 = arith.negf %475 : vector<2x128xf32>
    %477 = math.exp %476 : vector<2x128xf32>
    %cst_101 = arith.constant 1.000000e+00 : f32
    %478 = vector.broadcast %cst_101 : f32 to vector<2x128xf32>
    %479 = arith.addf %478, %477 : vector<2x128xf32>
    %480 = arith.divf %478, %479 : vector<2x128xf32>
    %481 = vector.extract_strided_slice %468 {offsets = [0, 256], sizes = [2, 128], strides = [1, 1]} : vector<2x512xf32> to vector<2x128xf32>
    %482 = math.tanh %481 : vector<2x128xf32>
    %483 = vector.extract_strided_slice %468 {offsets = [0, 384], sizes = [2, 128], strides = [1, 1]} : vector<2x512xf32> to vector<2x128xf32>
    %484 = arith.negf %483 : vector<2x128xf32>
    %485 = math.exp %484 : vector<2x128xf32>
    %cst_102 = arith.constant 1.000000e+00 : f32
    %486 = vector.broadcast %cst_102 : f32 to vector<2x128xf32>
    %487 = arith.addf %486, %485 : vector<2x128xf32>
    %488 = arith.divf %486, %487 : vector<2x128xf32>
    %489 = arith.mulf %480, %426 : vector<2x128xf32>
    %490 = arith.mulf %474, %482 : vector<2x128xf32>
    %491 = arith.addf %489, %490 : vector<2x128xf32>
    %492 = math.tanh %491 : vector<2x128xf32>
    %493 = arith.mulf %488, %492 : vector<2x128xf32>
    %cst_103 = arith.constant dense<0.000000e+00> : vector<2x512xf32>
    %494 = tpu.matmul %493, %1, %cst_103 {dimension_numbers = #tpu.dot_dimension_numbers<[1], [0], [0], [1], [0, 0, 1, 1], [], []>} : vector<2x128xf32>, vector<128x512xf32>, vector<2x512xf32> -> vector<2x512xf32>
    %495 = arith.addf %494, %464 : vector<2x512xf32>
    %496 = vector.extract_strided_slice %495 {offsets = [0, 0], sizes = [2, 128], strides = [1, 1]} : vector<2x512xf32> to vector<2x128xf32>
    %497 = arith.negf %496 : vector<2x128xf32>
    %498 = math.exp %497 : vector<2x128xf32>
    %cst_104 = arith.constant 1.000000e+00 : f32
    %499 = vector.broadcast %cst_104 : f32 to vector<2x128xf32>
    %500 = arith.addf %499, %498 : vector<2x128xf32>
    %501 = arith.divf %499, %500 : vector<2x128xf32>
    %502 = vector.extract_strided_slice %495 {offsets = [0, 128], sizes = [2, 128], strides = [1, 1]} : vector<2x512xf32> to vector<2x128xf32>
    %503 = arith.negf %502 : vector<2x128xf32>
    %504 = math.exp %503 : vector<2x128xf32>
    %cst_105 = arith.constant 1.000000e+00 : f32
    %505 = vector.broadcast %cst_105 : f32 to vector<2x128xf32>
    %506 = arith.addf %505, %504 : vector<2x128xf32>
    %507 = arith.divf %505, %506 : vector<2x128xf32>
    %508 = vector.extract_strided_slice %495 {offsets = [0, 256], sizes = [2, 128], strides = [1, 1]} : vector<2x512xf32> to vector<2x128xf32>
    %509 = math.tanh %508 : vector<2x128xf32>
    %510 = vector.extract_strided_slice %495 {offsets = [0, 384], sizes = [2, 128], strides = [1, 1]} : vector<2x512xf32> to vector<2x128xf32>
    %511 = arith.negf %510 : vector<2x128xf32>
    %512 = math.exp %511 : vector<2x128xf32>
    %cst_106 = arith.constant 1.000000e+00 : f32
    %513 = vector.broadcast %cst_106 : f32 to vector<2x128xf32>
    %514 = arith.addf %513, %512 : vector<2x128xf32>
    %515 = arith.divf %513, %514 : vector<2x128xf32>
    %516 = arith.mulf %507, %453 : vector<2x128xf32>
    %517 = arith.mulf %501, %509 : vector<2x128xf32>
    %518 = arith.addf %516, %517 : vector<2x128xf32>
    %519 = math.tanh %518 : vector<2x128xf32>
    %520 = arith.mulf %515, %519 : vector<2x128xf32>
    %521 = vector.broadcast %4 : vector<1x128xf32> to vector<2x128xf32>
    %522 = arith.mulf %520, %521 : vector<2x128xf32>
    %cst_107 = arith.constant dense<0.000000e+00> : vector<2xf32>
    %523 = vector.multi_reduction <add>, %522, %cst_107 [1] : vector<2x128xf32> to vector<2xf32>
    %524 = vector.shape_cast %523 : vector<2xf32> to vector<2x1xf32>
    %525 = vector.broadcast %5 : vector<1x1xf32> to vector<2x1xf32>
    %526 = arith.addf %524, %525 : vector<2x1xf32>
    %cst_108 = arith.constant 0.000000e+00 : f32
    %527 = vector.broadcast %cst_108 : f32 to vector<2x120xf32>
    %528 = tpu.concatenate %71, %136, %201, %266, %331, %396, %461, %526, %527 in 1 : vector<2x1xf32>, vector<2x1xf32>, vector<2x1xf32>, vector<2x1xf32>, vector<2x1xf32>, vector<2x1xf32>, vector<2x1xf32>, vector<2x1xf32>, vector<2x120xf32> -> vector<2x128xf32>
    %c0_109 = arith.constant 0 : index
    %c0_110 = arith.constant 0 : index
    %529 = vector.load %arg9[%c0_109, %c0_110] : memref<2x128xf32, #tpu.memory_space<vmem>>, vector<2x128xf32>
    tpu.vector_store %arg9[%c0_109, %c0_110], %528 {strides = array<i32>} : memref<2x128xf32, #tpu.memory_space<vmem>>, vector<2x128xf32>,
    return
  }
}

</mosaic_0001>

<llo_original>
// kernel: sequence_forward.1
$region0: #{sequence_forward.1}
  #allocation0 [shape = 'u32[]', space=smem, size = 0x4, offset = 0x4, fixed_abs, tag = 'smem constant byte address 0x4 - core index']
  #allocation1 [shape = 'u32[144,128]{1,0:T(1,128)}', space=vmem, size = 0x12000, scoped, tag = 'internal scratch']
  #allocation2 [shape = 'f32[1,1]{1,0:T(1,128)S(1)}', space=vmem, size = 0x200, scoped, tag = 'scoped memory for sequence_forward.1']
  %s0 = inlined_call_operand.vmem [shape: f32[8,2,512], index: 0, kind: input, shape index: {}]
  %s1 = inlined_call_operand.hbm [shape: f32[128,512], index: 1, kind: input, shape index: {}]
  %s2 = inlined_call_operand.hbm [shape: f32[128,512], index: 2, kind: input, shape index: {}]
  %s3 = inlined_call_operand.hbm [shape: f32[128,512], index: 3, kind: input, shape index: {}]
  %s4 = inlined_call_operand.vmem [shape: f32[1,512], index: 4, kind: input, shape index: {}]
  %s5 = inlined_call_operand.hbm [shape: f32[128,512], index: 5, kind: input, shape index: {}]
  %s6 = inlined_call_operand.vmem [shape: f32[1,512], index: 6, kind: input, shape index: {}]
  %s7 = inlined_call_operand.vmem [shape: f32[1,128], index: 7, kind: input, shape index: {}]
  %s8 = inlined_call_operand.<no memory space> [shape: f32[1,1], index: 8, kind: input, shape index: {}]
  %s9 = inlined_call_operand.hbm [shape: f32[2,128], index: 9, kind: output, shape index: {}]
  %s10 = sld [smem:[#allocation0]]
  $region62: #{sequence_forward.1} parent=0
    _
  %s12 = ssub.s32 1, %s10
  %s13 = scalar_select 0, %s12, %s10
  %v14 = vstv %s8
  %15 = vst [vmem:[#allocation2] sm:$0x1] %v14
  $region1: #{sequence_forward.1} parent=0
    #allocation3 [shape = 'u8[262144]{0}', space=vmem, size = 0x40000, scoped, tag = 'input window, operand 1, single buffered']
    #allocation4 [shape = 's32[1]{0}', space=sflag, size = 0x4, scoped, tag = 'scoped memory for sequence_forward.1']
    #allocation5 [shape = 's32[1]{0}', space=sflag, size = 0x4, scoped, tag = 'scoped memory for sequence_forward.1']
    #allocation6 [shape = 'u8[262144]{0}', space=vmem, size = 0x40000, scoped, tag = 'input window, operand 2, single buffered']
    #allocation7 [shape = 's32[1]{0}', space=sflag, size = 0x4, scoped, tag = 'scoped memory for sequence_forward.1']
    #allocation8 [shape = 'u8[262144]{0}', space=vmem, size = 0x40000, scoped, tag = 'input window, operand 3, single buffered']
    #allocation9 [shape = 'u8[262144]{0}', space=vmem, size = 0x40000, scoped, tag = 'input window, operand 5, single buffered']
    #allocation10 [shape = 's32[1]{0}', space=sflag, size = 0x4, scoped, tag = 'scoped memory for sequence_forward.1']
    #allocation11 [shape = 'u8[1024]{0}', space=vmem, size = 0x400, scoped, tag = 'output window, operand 0, single buffered']
    %16 = vsyncpa [#allocation4], 0
    %17 = vsyncpa [#allocation7], 0
    %18 = vsyncpa [#allocation10], 0
    %19 = vsyncpa [#allocation5], 0
    // Predicated region
    $region2: #{sequence_forward.1} parent=1 // pred_check
      _
    $region3: #{sequence_forward.1} parent=1 // pred_check_branch
      %21 = sbr.rel (0) target = $region5
    $region4: #{sequence_forward.1} parent=1 // pred_region
      _
    $region5: #{sequence_forward.1} parent=1 // pred_fallthru
      _
    // Predicated region
    $region6: #{sequence_forward.1} parent=1 // pred_check
      _
    $region7: #{sequence_forward.1} parent=1 // pred_check_branch
      %23 = sbr.rel (0) target = $region9
    $region8: #{sequence_forward.1} parent=1 // pred_region
      %s25 = ssub.s32 8192, 8192
      %26 = vsyncadd [#allocation4], %s25
      %s27 = sshll.u32 [#allocation3], 4
      %s28 = int_to_ptr.vmem [resolvable:$true] %s27
      %33 = dma.hbm_to_vmem [thread:$0]  %s1, 8192, %s28, [#allocation4], 512, 512, 32
    $region9: #{sequence_forward.1} parent=1 // pred_fallthru
      _
    // Predicated region
    $region10: #{sequence_forward.1} parent=1 // pred_check
      _
    $region11: #{sequence_forward.1} parent=1 // pred_check_branch
      %35 = sbr.rel (0) target = $region13
    $region12: #{sequence_forward.1} parent=1 // pred_region
      %s37 = ssub.s32 8192, 8192
      %38 = vsyncadd [#allocation7], %s37
      %s39 = sshll.u32 [#allocation6], 4
      %s40 = int_to_ptr.vmem [resolvable:$true] %s39
      %45 = dma.hbm_to_vmem [thread:$0]  %s2, 8192, %s40, [#allocation7], 512, 512, 32
    $region13: #{sequence_forward.1} parent=1 // pred_fallthru
      _
    // Predicated region
    $region14: #{sequence_forward.1} parent=1 // pred_check
      _
    $region15: #{sequence_forward.1} parent=1 // pred_check_branch
      %47 = sbr.rel (0) target = $region17
    $region16: #{sequence_forward.1} parent=1 // pred_region
      %s49 = ssub.s32 8192, 8192
      %50 = vsyncadd [#allocation7], %s49
      %s51 = sshll.u32 [#allocation8], 4
      %s52 = int_to_ptr.vmem [resolvable:$true] %s51
      %57 = dma.hbm_to_vmem [thread:$0]  %s3, 8192, %s52, [#allocation7], 512, 512, 32
    $region17: #{sequence_forward.1} parent=1 // pred_fallthru
      _
    // Predicated region
    $region18: #{sequence_forward.1} parent=1 // pred_check
      _
    $region19: #{sequence_forward.1} parent=1 // pred_check_branch
      %59 = sbr.rel (0) target = $region21
    $region20: #{sequence_forward.1} parent=1 // pred_region
      _
    $region21: #{sequence_forward.1} parent=1 // pred_fallthru
      _
    // Predicated region
    $region22: #{sequence_forward.1} parent=1 // pred_check
      _
    $region23: #{sequence_forward.1} parent=1 // pred_check_branch
      %61 = sbr.rel (0) target = $region25
    $region24: #{sequence_forward.1} parent=1 // pred_region
      %s63 = ssub.s32 8192, 8192
      %64 = vsyncadd [#allocation10], %s63
      %s65 = sshll.u32 [#allocation9], 4
      %s66 = int_to_ptr.vmem [resolvable:$true] %s65
      %71 = dma.hbm_to_vmem [thread:$0]  %s5, 8192, %s66, [#allocation10], 512, 512, 32
    $region25: #{sequence_forward.1} parent=1 // pred_fallthru
      _
    // Predicated region
    $region26: #{sequence_forward.1} parent=1 // pred_check
      _
    $region27: #{sequence_forward.1} parent=1 // pred_check_branch
      %73 = sbr.rel (0) target = $region29
    $region28: #{sequence_forward.1} parent=1 // pred_region
      _
    $region29: #{sequence_forward.1} parent=1 // pred_fallthru
      _
    // Predicated region
    $region30: #{sequence_forward.1} parent=1 // pred_check
      _
    $region31: #{sequence_forward.1} parent=1 // pred_check_branch
      %75 = sbr.rel (0) target = $region33
    $region32: #{sequence_forward.1} parent=1 // pred_region
      _
    $region33: #{sequence_forward.1} parent=1 // pred_fallthru
      _
    // Predicated region
    $region34: #{sequence_forward.1} parent=1 // pred_check
      _
    $region35: #{sequence_forward.1} parent=1 // pred_check_branch
      %77 = sbr.rel (0) target = $region37
    $region36: #{sequence_forward.1} parent=1 // pred_region
      _
    $region37: #{sequence_forward.1} parent=1 // pred_fallthru
      _
    // Predicated region
    $region38: #{sequence_forward.1} parent=1 // pred_check
      _
    $region39: #{sequence_forward.1} parent=1 // pred_check_branch
      %79 = sbr.rel (0) target = $region41
    $region40: #{sequence_forward.1} parent=1 // pred_region
      %80 = dma.done [#allocation4], 8192
    $region41: #{sequence_forward.1} parent=1 // pred_fallthru
      _
    // Predicated region
    $region42: #{sequence_forward.1} parent=1 // pred_check
      _
    $region43: #{sequence_forward.1} parent=1 // pred_check_branch
      %82 = sbr.rel (0) target = $region45
    $region44: #{sequence_forward.1} parent=1 // pred_region
      %83 = dma.done [#allocation7], 8192
    $region45: #{sequence_forward.1} parent=1 // pred_fallthru
      _
    // Predicated region
    $region46: #{sequence_forward.1} parent=1 // pred_check
      _
    $region47: #{sequence_forward.1} parent=1 // pred_check_branch
      %85 = sbr.rel (0) target = $region49
    $region48: #{sequence_forward.1} parent=1 // pred_region
      %86 = dma.done [#allocation7], 8192
    $region49: #{sequence_forward.1} parent=1 // pred_fallthru
      _
    // Predicated region
    $region50: #{sequence_forward.1} parent=1 // pred_check
      _
    $region51: #{sequence_forward.1} parent=1 // pred_check_branch
      %88 = sbr.rel (0) target = $region53
    $region52: #{sequence_forward.1} parent=1 // pred_region
      %89 = dma.done [#allocation10], 8192
    $region53: #{sequence_forward.1} parent=1 // pred_fallthru
      _
    %v90 = vld [vmem:[#allocation3] sm:$0xff]
    %v91 = vld [vmem:[#allocation3 + $0x8] sm:$0xff]
    %v92 = vld [vmem:[#allocation3 + $0x10] sm:$0xff]
    %v93 = vld [vmem:[#allocation3 + $0x18] sm:$0xff]
    %v94 = vld [vmem:[#allocation3 + $0x20] sm:$0xff]
    %v95 = vld [vmem:[#allocation3 + $0x28] sm:$0xff]
    %v96 = vld [vmem:[#allocation3 + $0x30] sm:$0xff]
    %v97 = vld [vmem:[#allocation3 + $0x38] sm:$0xff]
    %v98 = vld [vmem:[#allocation3 + $0x40] sm:$0xff]
    %v99 = vld [vmem:[#allocation3 + $0x48] sm:$0xff]
    %v100 = vld [vmem:[#allocation3 + $0x50] sm:$0xff]
    %v101 = vld [vmem:[#allocation3 + $0x58] sm:$0xff]
    %v102 = vld [vmem:[#allocation3 + $0x60] sm:$0xff]
    %v103 = vld [vmem:[#allocation3 + $0x68] sm:$0xff]
    %v104 = vld [vmem:[#allocation3 + $0x70] sm:$0xff]
    %v105 = vld [vmem:[#allocation3 + $0x78] sm:$0xff]
    %v106 = vld [vmem:[#allocation3 + $0x80] sm:$0xff]
    %v107 = vld [vmem:[#allocation3 + $0x88] sm:$0xff]
    %v108 = vld [vmem:[#allocation3 + $0x90] sm:$0xff]
    %v109 = vld [vmem:[#allocation3 + $0x98] sm:$0xff]
    %v110 = vld [vmem:[#allocation3 + $0xa0] sm:$0xff]
    %v111 = vld [vmem:[#allocation3 + $0xa8] sm:$0xff]
    %v112 = vld [vmem:[#allocation3 + $0xb0] sm:$0xff]
    %v113 = vld [vmem:[#allocation3 + $0xb8] sm:$0xff]
    %v114 = vld [vmem:[#allocation3 + $0xc0] sm:$0xff]
    %v115 = vld [vmem:[#allocation3 + $0xc8] sm:$0xff]
    %v116 = vld [vmem:[#allocation3 + $0xd0] sm:$0xff]
    %v117 = vld [vmem:[#allocation3 + $0xd8] sm:$0xff]
    %v118 = vld [vmem:[#allocation3 + $0xe0] sm:$0xff]
    %v119 = vld [vmem:[#allocation3 + $0xe8] sm:$0xff]
    %v120 = vld [vmem:[#allocation3 + $0xf0] sm:$0xff]
    %v121 = vld [vmem:[#allocation3 + $0xf8] sm:$0xff]
    %v122 = vld [vmem:[#allocation3 + $0x100] sm:$0xff]
    %v123 = vld [vmem:[#allocation3 + $0x108] sm:$0xff]
    %v124 = vld [vmem:[#allocation3 + $0x110] sm:$0xff]
    %v125 = vld [vmem:[#allocation3 + $0x118] sm:$0xff]
    %v126 = vld [vmem:[#allocation3 + $0x120] sm:$0xff]
    %v127 = vld [vmem:[#allocation3 + $0x128] sm:$0xff]
    %v128 = vld [vmem:[#allocation3 + $0x130] sm:$0xff]
    %v129 = vld [vmem:[#allocation3 + $0x138] sm:$0xff]
    %v130 = vld [vmem:[#allocation3 + $0x140] sm:$0xff]
    %v131 = vld [vmem:[#allocation3 + $0x148] sm:$0xff]
    %v132 = vld [vmem:[#allocation3 + $0x150] sm:$0xff]
    %v133 = vld [vmem:[#allocation3 + $0x158] sm:$0xff]
    %v134 = vld [vmem:[#allocation3 + $0x160] sm:$0xff]
    %v135 = vld [vmem:[#allocation3 + $0x168] sm:$0xff]
    %v136 = vld [vmem:[#allocation3 + $0x170] sm:$0xff]
    %v137 = vld [vmem:[#allocation3 + $0x178] sm:$0xff]
    %v138 = vld [vmem:[#allocation3 + $0x180] sm:$0xff]
    %v139 = vld [vmem:[#allocation3 + $0x188] sm:$0xff]
    %v140 = vld [vmem:[#allocation3 + $0x190] sm:$0xff]
    %v141 = vld [vmem:[#allocation3 + $0x198] sm:$0xff]
    %v142 = vld [vmem:[#allocation3 + $0x1a0] sm:$0xff]
    %v143 = vld [vmem:[#allocation3 + $0x1a8] sm:$0xff]
    %v144 = vld [vmem:[#allocation3 + $0x1b0] sm:$0xff]
    %v145 = vld [vmem:[#allocation3 + $0x1b8] sm:$0xff]
    %v146 = vld [vmem:[#allocation3 + $0x1c0] sm:$0xff]
    %v147 = vld [vmem:[#allocation3 + $0x1c8] sm:$0xff]
    %v148 = vld [vmem:[#allocation3 + $0x1d0] sm:$0xff]
    %v149 = vld [vmem:[#allocation3 + $0x1d8] sm:$0xff]
    %v150 = vld [vmem:[#allocation3 + $0x1e0] sm:$0xff]
    %v151 = vld [vmem:[#allocation3 + $0x1e8] sm:$0xff]
    %v152 = vld [vmem:[#allocation3 + $0x1f0] sm:$0xff]
    %v153 = vld [vmem:[#allocation3 + $0x1f8] sm:$0xff]
    %v154 = vld [vmem:[#allocation6] sm:$0xff]
    %v155 = vld [vmem:[#allocation6 + $0x8] sm:$0xff]
    %v156 = vld [vmem:[#allocation6 + $0x10] sm:$0xff]
    %v157 = vld [vmem:[#allocation6 + $0x18] sm:$0xff]
    %v158 = vld [vmem:[#allocation6 + $0x20] sm:$0xff]
    %v159 = vld [vmem:[#allocation6 + $0x28] sm:$0xff]
    %v160 = vld [vmem:[#allocation6 + $0x30] sm:$0xff]
    %v161 = vld [vmem:[#allocation6 + $0x38] sm:$0xff]
    %v162 = vld [vmem:[#allocation6 + $0x40] sm:$0xff]
    %v163 = vld [vmem:[#allocation6 + $0x48] sm:$0xff]
    %v164 = vld [vmem:[#allocation6 + $0x50] sm:$0xff]
    %v165 = vld [vmem:[#allocation6 + $0x58] sm:$0xff]
    %v166 = vld [vmem:[#allocation6 + $0x60] sm:$0xff]
    %v167 = vld [vmem:[#allocation6 + $0x68] sm:$0xff]
    %v168 = vld [vmem:[#allocation6 + $0x70] sm:$0xff]
    %v169 = vld [vmem:[#allocation6 + $0x78] sm:$0xff]
    %v170 = vld [vmem:[#allocation6 + $0x80] sm:$0xff]
    %v171 = vld [vmem:[#allocation6 + $0x88] sm:$0xff]
    %v172 = vld [vmem:[#allocation6 + $0x90] sm:$0xff]
    %v173 = vld [vmem:[#allocation6 + $0x98] sm:$0xff]
    %v174 = vld [vmem:[#allocation6 + $0xa0] sm:$0xff]
    %v175 = vld [vmem:[#allocation6 + $0xa8] sm:$0xff]
    %v176 = vld [vmem:[#allocation6 + $0xb0] sm:$0xff]
    %v177 = vld [vmem:[#allocation6 + $0xb8] sm:$0xff]
    %v178 = vld [vmem:[#allocation6 + $0xc0] sm:$0xff]
    %v179 = vld [vmem:[#allocation6 + $0xc8] sm:$0xff]
    %v180 = vld [vmem:[#allocation6 + $0xd0] sm:$0xff]
    %v181 = vld [vmem:[#allocation6 + $0xd8] sm:$0xff]
    %v182 = vld [vmem:[#allocation6 + $0xe0] sm:$0xff]
    %v183 = vld [vmem:[#allocation6 + $0xe8] sm:$0xff]
    %v184 = vld [vmem:[#allocation6 + $0xf0] sm:$0xff]
    %v185 = vld [vmem:[#allocation6 + $0xf8] sm:$0xff]
    %v186 = vld [vmem:[#allocation6 + $0x100] sm:$0xff]
    %v187 = vld [vmem:[#allocation6 + $0x108] sm:$0xff]
    %v188 = vld [vmem:[#allocation6 + $0x110] sm:$0xff]
    %v189 = vld [vmem:[#allocation6 + $0x118] sm:$0xff]
    %v190 = vld [vmem:[#allocation6 + $0x120] sm:$0xff]
    %v191 = vld [vmem:[#allocation6 + $0x128] sm:$0xff]
    %v192 = vld [vmem:[#allocation6 + $0x130] sm:$0xff]
    %v193 = vld [vmem:[#allocation6 + $0x138] sm:$0xff]
    %v194 = vld [vmem:[#allocation6 + $0x140] sm:$0xff]
    %v195 = vld [vmem:[#allocation6 + $0x148] sm:$0xff]
    %v196 = vld [vmem:[#allocation6 + $0x150] sm:$0xff]
    %v197 = vld [vmem:[#allocation6 + $0x158] sm:$0xff]
    %v198 = vld [vmem:[#allocation6 + $0x160] sm:$0xff]
    %v199 = vld [vmem:[#allocation6 + $0x168] sm:$0xff]
    %v200 = vld [vmem:[#allocation6 + $0x170] sm:$0xff]
    %v201 = vld [vmem:[#allocation6 + $0x178] sm:$0xff]
    %v202 = vld [vmem:[#allocation6 + $0x180] sm:$0xff]
    %v203 = vld [vmem:[#allocation6 + $0x188] sm:$0xff]
    %v204 = vld [vmem:[#allocation6 + $0x190] sm:$0xff]
    %v205 = vld [vmem:[#allocation6 + $0x198] sm:$0xff]
    %v206 = vld [vmem:[#allocation6 + $0x1a0] sm:$0xff]
    %v207 = vld [vmem:[#allocation6 + $0x1a8] sm:$0xff]
    %v208 = vld [vmem:[#allocation6 + $0x1b0] sm:$0xff]
    %v209 = vld [vmem:[#allocation6 + $0x1b8] sm:$0xff]
    %v210 = vld [vmem:[#allocation6 + $0x1c0] sm:$0xff]
    %v211 = vld [vmem:[#allocation6 + $0x1c8] sm:$0xff]
    %v212 = vld [vmem:[#allocation6 + $0x1d0] sm:$0xff]
    %v213 = vld [vmem:[#allocation6 + $0x1d8] sm:$0xff]
    %v214 = vld [vmem:[#allocation6 + $0x1e0] sm:$0xff]
    %v215 = vld [vmem:[#allocation6 + $0x1e8] sm:$0xff]
    %v216 = vld [vmem:[#allocation6 + $0x1f0] sm:$0xff]
    %v217 = vld [vmem:[#allocation6 + $0x1f8] sm:$0xff]
    %v218 = vld [vmem:[#allocation8] sm:$0xff]
    %v219 = vld [vmem:[#allocation8 + $0x8] sm:$0xff]
    %v220 = vld [vmem:[#allocation8 + $0x10] sm:$0xff]
    %v221 = vld [vmem:[#allocation8 + $0x18] sm:$0xff]
    %v222 = vld [vmem:[#allocation8 + $0x20] sm:$0xff]
    %v223 = vld [vmem:[#allocation8 + $0x28] sm:$0xff]
    %v224 = vld [vmem:[#allocation8 + $0x30] sm:$0xff]
    %v225 = vld [vmem:[#allocation8 + $0x38] sm:$0xff]
    %v226 = vld [vmem:[#allocation8 + $0x40] sm:$0xff]
    %v227 = vld [vmem:[#allocation8 + $0x48] sm:$0xff]
    %v228 = vld [vmem:[#allocation8 + $0x50] sm:$0xff]
    %v229 = vld [vmem:[#allocation8 + $0x58] sm:$0xff]
    %v230 = vld [vmem:[#allocation8 + $0x60] sm:$0xff]
    %v231 = vld [vmem:[#allocation8 + $0x68] sm:$0xff]
    %v232 = vld [vmem:[#allocation8 + $0x70] sm:$0xff]
    %v233 = vld [vmem:[#allocation8 + $0x78] sm:$0xff]
    %v234 = vld [vmem:[#allocation8 + $0x80] sm:$0xff]
    %v235 = vld [vmem:[#allocation8 + $0x88] sm:$0xff]
    %v236 = vld [vmem:[#allocation8 + $0x90] sm:$0xff]
    %v237 = vld [vmem:[#allocation8 + $0x98] sm:$0xff]
    %v238 = vld [vmem:[#allocation8 + $0xa0] sm:$0xff]
    %v239 = vld [vmem:[#allocation8 + $0xa8] sm:$0xff]
    %v240 = vld [vmem:[#allocation8 + $0xb0] sm:$0xff]
    %v241 = vld [vmem:[#allocation8 + $0xb8] sm:$0xff]
    %v242 = vld [vmem:[#allocation8 + $0xc0] sm:$0xff]
    %v243 = vld [vmem:[#allocation8 + $0xc8] sm:$0xff]
    %v244 = vld [vmem:[#allocation8 + $0xd0] sm:$0xff]
    %v245 = vld [vmem:[#allocation8 + $0xd8] sm:$0xff]
    %v246 = vld [vmem:[#allocation8 + $0xe0] sm:$0xff]
    %v247 = vld [vmem:[#allocation8 + $0xe8] sm:$0xff]
    %v248 = vld [vmem:[#allocation8 + $0xf0] sm:$0xff]
    %v249 = vld [vmem:[#allocation8 + $0xf8] sm:$0xff]
    %v250 = vld [vmem:[#allocation8 + $0x100] sm:$0xff]
    %v251 = vld [vmem:[#allocation8 + $0x108] sm:$0xff]
    %v252 = vld [vmem:[#allocation8 + $0x110] sm:$0xff]
    %v253 = vld [vmem:[#allocation8 + $0x118] sm:$0xff]
    %v254 = vld [vmem:[#allocation8 + $0x120] sm:$0xff]
    %v255 = vld [vmem:[#allocation8 + $0x128] sm:$0xff]
    %v256 = vld [vmem:[#allocation8 + $0x130] sm:$0xff]
    %v257 = vld [vmem:[#allocation8 + $0x138] sm:$0xff]
    %v258 = vld [vmem:[#allocation8 + $0x140] sm:$0xff]
    %v259 = vld [vmem:[#allocation8 + $0x148] sm:$0xff]
    %v260 = vld [vmem:[#allocation8 + $0x150] sm:$0xff]
    %v261 = vld [vmem:[#allocation8 + $0x158] sm:$0xff]
    %v262 = vld [vmem:[#allocation8 + $0x160] sm:$0xff]
    %v263 = vld [vmem:[#allocation8 + $0x168] sm:$0xff]
    %v264 = vld [vmem:[#allocation8 + $0x170] sm:$0xff]
    %v265 = vld [vmem:[#allocation8 + $0x178] sm:$0xff]
    %v266 = vld [vmem:[#allocation8 + $0x180] sm:$0xff]
    %v267 = vld [vmem:[#allocation8 + $0x188] sm:$0xff]
    %v268 = vld [vmem:[#allocation8 + $0x190] sm:$0xff]
    %v269 = vld [vmem:[#allocation8 + $0x198] sm:$0xff]
    %v270 = vld [vmem:[#allocation8 + $0x1a0] sm:$0xff]
    %v271 = vld [vmem:[#allocation8 + $0x1a8] sm:$0xff]
    %v272 = vld [vmem:[#allocation8 + $0x1b0] sm:$0xff]
    %v273 = vld [vmem:[#allocation8 + $0x1b8] sm:$0xff]
    %v274 = vld [vmem:[#allocation8 + $0x1c0] sm:$0xff]
    %v275 = vld [vmem:[#allocation8 + $0x1c8] sm:$0xff]
    %v276 = vld [vmem:[#allocation8 + $0x1d0] sm:$0xff]
    %v277 = vld [vmem:[#allocation8 + $0x1d8] sm:$0xff]
    %v278 = vld [vmem:[#allocation8 + $0x1e0] sm:$0xff]
    %v279 = vld [vmem:[#allocation8 + $0x1e8] sm:$0xff]
    %v280 = vld [vmem:[#allocation8 + $0x1f0] sm:$0xff]
    %v281 = vld [vmem:[#allocation8 + $0x1f8] sm:$0xff]
    %v282 = vld [vmem:[%s4] sm:$0xf]
    %v283 = vld [vmem:[%s7] sm:$0x1]
    %v284 = vld [vmem:[#allocation2] sm:$0x1]
    %v286 = vlaneseq
    %v287 = vshrl.u32 %v286, 7
    %v288 = vsub.s32 0, %v287
    %v289 = vrot.slane %v282, %v288
    %v290 = vlaneseq
    %v291 = vshrl.u32 %v290, 7
    %v292 = vsub.s32 1, %v291
    %v293 = vrot.slane %v282, %v292
    %v294 = vlaneseq
    %v295 = vshrl.u32 %v294, 7
    %v296 = vsub.s32 2, %v295
    %v297 = vrot.slane %v282, %v296
    %v298 = vlaneseq
    %v299 = vshrl.u32 %v298, 7
    %v300 = vsub.s32 3, %v299
    %v301 = vrot.slane %v282, %v300
    %306 = vmatprep.subr.mxu0 %v219
    %307 = vmatpush1.msra.mxu0 %v218
    %308 = vmatprep.subr.mxu0 %v223
    %309 = vmatpush1.msra.mxu0 %v222
    %310 = vmatprep.subr.mxu0 %v227
    %311 = vmatpush1.msra.mxu0 %v226
    %312 = vmatprep.subr.mxu0 %v231
    %313 = vmatpush1.msra.mxu0 %v230
    %314 = vmatprep.subr.mxu0 %v235
    %315 = vmatpush1.msra.mxu0 %v234
    %316 = vmatprep.subr.mxu0 %v239
    %317 = vmatpush1.msra.mxu0 %v238
    %318 = vmatprep.subr.mxu0 %v243
    %319 = vmatpush1.msra.mxu0 %v242
    %320 = vmatprep.subr.mxu0 %v247
    %321 = vmatpush1.msra.mxu0 %v246
    %322 = vmatprep.subr.mxu0 %v251
    %323 = vmatpush1.msra.mxu0 %v250
    %324 = vmatprep.subr.mxu0 %v255
    %325 = vmatpush1.msra.mxu0 %v254
    %326 = vmatprep.subr.mxu0 %v259
    %327 = vmatpush1.msra.mxu0 %v258
    %328 = vmatprep.subr.mxu0 %v263
    %329 = vmatpush1.msra.mxu0 %v262
    %330 = vmatprep.subr.mxu0 %v267
    %331 = vmatpush1.msra.mxu0 %v266
    %332 = vmatprep.subr.mxu0 %v271
    %333 = vmatpush1.msra.mxu0 %v270
    %334 = vmatprep.subr.mxu0 %v275
    %335 = vmatpush1.msra.mxu0 %v274
    %336 = vmatprep.subr.mxu0 %v279
    %337 = vmatpush1.msra.mxu0 %v278
    %338 = vmatprep.subr.mxu0 0.0
    %339 = vmatpush1.msra.mxu0 0.0
    %340 = vmatprep.subr.mxu0 0.0
    %341 = vmatpush1.msra.mxu0 0.0
    %342 = vmatprep.subr.mxu0 0.0
    %343 = vmatpush1.msra.mxu0 0.0
    %344 = vmatprep.subr.mxu0 0.0
    %345 = vmatpush1.msra.mxu0 0.0
    %346 = vmatprep.subr.mxu0 0.0
    %347 = vmatpush1.msra.mxu0 0.0
    %348 = vmatprep.subr.mxu0 0.0
    %349 = vmatpush1.msra.mxu0 0.0
    %350 = vmatprep.subr.mxu0 0.0
    %351 = vmatpush1.msra.mxu0 0.0
    %352 = vmatprep.subr.mxu0 0.0
    %353 = vmatpush1.msra.mxu0 0.0
    %354 = vmatprep.subr.mxu0 0.0
    %355 = vmatpush1.msra.mxu0 0.0
    %356 = vmatprep.subr.mxu0 0.0
    %357 = vmatpush1.msra.mxu0 0.0
    %358 = vmatprep.subr.mxu0 0.0
    %359 = vmatpush1.msra.mxu0 0.0
    %360 = vmatprep.subr.mxu0 0.0
    %361 = vmatpush1.msra.mxu0 0.0
    %362 = vmatprep.subr.mxu0 0.0
    %363 = vmatpush1.msra.mxu0 0.0
    %364 = vmatprep.subr.mxu0 0.0
    %365 = vmatpush1.msra.mxu0 0.0
    %366 = vmatprep.subr.mxu0 0.0
    %367 = vmatpush1.msra.mxu0 0.0
    %368 = vmatprep.subr.mxu0 0.0
    %369 = vmatpush1.msra.mxu0 0.0
    %370 = vmatprep.mubr.f32.mxu0 0.0
    %371 = vmatmul.mubr.f32.gmra.mrb[0].mxu0 1.0
    %v372 = vpop.f32.mrb[0].mxu0
    %v373 = vadd.f32 %v289, %v372
    %v374 = vpop.f32.mrb[0].mxu0
    %v375 = vadd.f32 %v293, %v374
    %376 = vdwg.mxu0
    %377 = vmatprep.subr.mxu0 %v221
    %378 = vmatpush1.msra.mxu0 %v220
    %379 = vmatprep.subr.mxu0 %v225
    %380 = vmatpush1.msra.mxu0 %v224
    %381 = vmatprep.subr.mxu0 %v229
    %382 = vmatpush1.msra.mxu0 %v228
    %383 = vmatprep.subr.mxu0 %v233
    %384 = vmatpush1.msra.mxu0 %v232
    %385 = vmatprep.subr.mxu0 %v237
    %386 = vmatpush1.msra.mxu0 %v236
    %387 = vmatprep.subr.mxu0 %v241
    %388 = vmatpush1.msra.mxu0 %v240
    %389 = vmatprep.subr.mxu0 %v245
    %390 = vmatpush1.msra.mxu0 %v244
    %391 = vmatprep.subr.mxu0 %v249
    %392 = vmatpush1.msra.mxu0 %v248
    %393 = vmatprep.subr.mxu0 %v253
    %394 = vmatpush1.msra.mxu0 %v252
    %395 = vmatprep.subr.mxu0 %v257
    %396 = vmatpush1.msra.mxu0 %v256
    %397 = vmatprep.subr.mxu0 %v261
    %398 = vmatpush1.msra.mxu0 %v260
    %399 = vmatprep.subr.mxu0 %v265
    %400 = vmatpush1.msra.mxu0 %v264
    %401 = vmatprep.subr.mxu0 %v269
    %402 = vmatpush1.msra.mxu0 %v268
    %403 = vmatprep.subr.mxu0 %v273
    %404 = vmatpush1.msra.mxu0 %v272
    %405 = vmatprep.subr.mxu0 %v277
    %406 = vmatpush1.msra.mxu0 %v276
    %407 = vmatprep.subr.mxu0 %v281
    %408 = vmatpush1.msra.mxu0 %v280
    %409 = vmatprep.subr.mxu0 0.0
    %410 = vmatpush1.msra.mxu0 0.0
    %411 = vmatprep.subr.mxu0 0.0
    %412 = vmatpush1.msra.mxu0 0.0
    %413 = vmatprep.subr.mxu0 0.0
    %414 = vmatpush1.msra.mxu0 0.0
    %415 = vmatprep.subr.mxu0 0.0
    %416 = vmatpush1.msra.mxu0 0.0
    %417 = vmatprep.subr.mxu0 0.0
    %418 = vmatpush1.msra.mxu0 0.0
    %419 = vmatprep.subr.mxu0 0.0
    %420 = vmatpush1.msra.mxu0 0.0
    %421 = vmatprep.subr.mxu0 0.0
    %422 = vmatpush1.msra.mxu0 0.0
    %423 = vmatprep.subr.mxu0 0.0
    %424 = vmatpush1.msra.mxu0 0.0
    %425 = vmatprep.subr.mxu0 0.0
    %426 = vmatpush1.msra.mxu0 0.0
    %427 = vmatprep.subr.mxu0 0.0
    %428 = vmatpush1.msra.mxu0 0.0
    %429 = vmatprep.subr.mxu0 0.0
    %430 = vmatpush1.msra.mxu0 0.0
    %431 = vmatprep.subr.mxu0 0.0
    %432 = vmatpush1.msra.mxu0 0.0
    %433 = vmatprep.subr.mxu0 0.0
    %434 = vmatpush1.msra.mxu0 0.0
    %435 = vmatprep.subr.mxu0 0.0
    %436 = vmatpush1.msra.mxu0 0.0
    %437 = vmatprep.subr.mxu0 0.0
    %438 = vmatpush1.msra.mxu0 0.0
    %439 = vmatprep.subr.mxu0 0.0
    %440 = vmatpush1.msra.mxu0 0.0
    %441 = vmatprep.mubr.f32.mxu0 0.0
    %442 = vmatmul.mubr.f32.gmra.mrb[0].mxu0 1.0
    %v443 = vpop.f32.mrb[0].mxu0
    %v444 = vadd.f32 %v297, %v443
    %v445 = vpop.f32.mrb[0].mxu0
    %v446 = vadd.f32 %v301, %v445
    %447 = vdwg.mxu0
    %v448 = vld [vmem:[%s0] sm:$0xff]
    %449 = vmatprep.subr.mxu0 %v91
    %450 = vmatpush1.msra.mxu0 %v90
    %451 = vmatprep.subr.mxu0 %v95
    %452 = vmatpush1.msra.mxu0 %v94
    %453 = vmatprep.subr.mxu0 %v99
    %454 = vmatpush1.msra.mxu0 %v98
    %455 = vmatprep.subr.mxu0 %v103
    %456 = vmatpush1.msra.mxu0 %v102
    %457 = vmatprep.subr.mxu0 %v107
    %458 = vmatpush1.msra.mxu0 %v106
    %459 = vmatprep.subr.mxu0 %v111
    %460 = vmatpush1.msra.mxu0 %v110
    %461 = vmatprep.subr.mxu0 %v115
    %462 = vmatpush1.msra.mxu0 %v114
    %463 = vmatprep.subr.mxu0 %v119
    %464 = vmatpush1.msra.mxu0 %v118
    %465 = vmatprep.subr.mxu0 %v123
    %466 = vmatpush1.msra.mxu0 %v122
    %467 = vmatprep.subr.mxu0 %v127
    %468 = vmatpush1.msra.mxu0 %v126
    %469 = vmatprep.subr.mxu0 %v131
    %470 = vmatpush1.msra.mxu0 %v130
    %471 = vmatprep.subr.mxu0 %v135
    %472 = vmatpush1.msra.mxu0 %v134
    %473 = vmatprep.subr.mxu0 %v139
    %474 = vmatpush1.msra.mxu0 %v138
    %475 = vmatprep.subr.mxu0 %v143
    %476 = vmatpush1.msra.mxu0 %v142
    %477 = vmatprep.subr.mxu0 %v147
    %478 = vmatpush1.msra.mxu0 %v146
    %479 = vmatprep.subr.mxu0 %v151
    %480 = vmatpush1.msra.mxu0 %v150
    %481 = vmatprep.subr.mxu0 0.0
    %482 = vmatpush1.msra.mxu0 0.0
    %483 = vmatprep.subr.mxu0 0.0
    %484 = vmatpush1.msra.mxu0 0.0
    %485 = vmatprep.subr.mxu0 0.0
    %486 = vmatpush1.msra.mxu0 0.0
    %487 = vmatprep.subr.mxu0 0.0
    %488 = vmatpush1.msra.mxu0 0.0
    %489 = vmatprep.subr.mxu0 0.0
    %490 = vmatpush1.msra.mxu0 0.0
    %491 = vmatprep.subr.mxu0 0.0
    %492 = vmatpush1.msra.mxu0 0.0
    %493 = vmatprep.subr.mxu0 0.0
    %494 = vmatpush1.msra.mxu0 0.0
    %495 = vmatprep.subr.mxu0 0.0
    %496 = vmatpush1.msra.mxu0 0.0
    %497 = vmatprep.subr.mxu0 0.0
    %498 = vmatpush1.msra.mxu0 0.0
    %499 = vmatprep.subr.mxu0 0.0
    %500 = vmatpush1.msra.mxu0 0.0
    %501 = vmatprep.subr.mxu0 0.0
    %502 = vmatpush1.msra.mxu0 0.0
    %503 = vmatprep.subr.mxu0 0.0
    %504 = vmatpush1.msra.mxu0 0.0
    %505 = vmatprep.subr.mxu0 0.0
    %506 = vmatpush1.msra.mxu0 0.0
    %507 = vmatprep.subr.mxu0 0.0
    %508 = vmatpush1.msra.mxu0 0.0
    %509 = vmatprep.subr.mxu0 0.0
    %510 = vmatpush1.msra.mxu0 0.0
    %511 = vmatprep.subr.mxu0 0.0
    %512 = vmatpush1.msra.mxu0 0.0
    %513 = vmatprep.mubr.f32.mxu0 0.0
    %514 = vmatmul.mubr.f32.gmra.mrb[0].mxu0 1.0
    %v515 = vpop.f32.mrb[0].mxu0
    %v516 = vadd.f32 0.0, %v515
    %v517 = vpop.f32.mrb[0].mxu0
    %v518 = vadd.f32 0.0, %v517
    %519 = vdwg.mxu0
    %520 = vmatprep.subr.mxu0 %v93
    %521 = vmatpush1.msra.mxu0 %v92
    %522 = vmatprep.subr.mxu0 %v97
    %523 = vmatpush1.msra.mxu0 %v96
    %524 = vmatprep.subr.mxu0 %v101
    %525 = vmatpush1.msra.mxu0 %v100
    %526 = vmatprep.subr.mxu0 %v105
    %527 = vmatpush1.msra.mxu0 %v104
    %528 = vmatprep.subr.mxu0 %v109
    %529 = vmatpush1.msra.mxu0 %v108
    %530 = vmatprep.subr.mxu0 %v113
    %531 = vmatpush1.msra.mxu0 %v112
    %532 = vmatprep.subr.mxu0 %v117
    %533 = vmatpush1.msra.mxu0 %v116
    %534 = vmatprep.subr.mxu0 %v121
    %535 = vmatpush1.msra.mxu0 %v120
    %536 = vmatprep.subr.mxu0 %v125
    %537 = vmatpush1.msra.mxu0 %v124
    %538 = vmatprep.subr.mxu0 %v129
    %539 = vmatpush1.msra.mxu0 %v128
    %540 = vmatprep.subr.mxu0 %v133
    %541 = vmatpush1.msra.mxu0 %v132
    %542 = vmatprep.subr.mxu0 %v137
    %543 = vmatpush1.msra.mxu0 %v136
    %544 = vmatprep.subr.mxu0 %v141
    %545 = vmatpush1.msra.mxu0 %v140
    %546 = vmatprep.subr.mxu0 %v145
    %547 = vmatpush1.msra.mxu0 %v144
    %548 = vmatprep.subr.mxu0 %v149
    %549 = vmatpush1.msra.mxu0 %v148
    %550 = vmatprep.subr.mxu0 %v153
    %551 = vmatpush1.msra.mxu0 %v152
    %552 = vmatprep.subr.mxu0 0.0
    %553 = vmatpush1.msra.mxu0 0.0
    %554 = vmatprep.subr.mxu0 0.0
    %555 = vmatpush1.msra.mxu0 0.0
    %556 = vmatprep.subr.mxu0 0.0
    %557 = vmatpush1.msra.mxu0 0.0
    %558 = vmatprep.subr.mxu0 0.0
    %559 = vmatpush1.msra.mxu0 0.0
    %560 = vmatprep.subr.mxu0 0.0
    %561 = vmatpush1.msra.mxu0 0.0
    %562 = vmatprep.subr.mxu0 0.0
    %563 = vmatpush1.msra.mxu0 0.0
    %564 = vmatprep.subr.mxu0 0.0
    %565 = vmatpush1.msra.mxu0 0.0
    %566 = vmatprep.subr.mxu0 0.0
    %567 = vmatpush1.msra.mxu0 0.0
    %568 = vmatprep.subr.mxu0 0.0
    %569 = vmatpush1.msra.mxu0 0.0
    %570 = vmatprep.subr.mxu0 0.0
    %571 = vmatpush1.msra.mxu0 0.0
    %572 = vmatprep.subr.mxu0 0.0
    %573 = vmatpush1.msra.mxu0 0.0
    %574 = vmatprep.subr.mxu0 0.0
    %575 = vmatpush1.msra.mxu0 0.0
    %576 = vmatprep.subr.mxu0 0.0
    %577 = vmatpush1.msra.mxu0 0.0
    %578 = vmatprep.subr.mxu0 0.0
    %579 = vmatpush1.msra.mxu0 0.0
    %580 = vmatprep.subr.mxu0 0.0
    %581 = vmatpush1.msra.mxu0 0.0
    %582 = vmatprep.subr.mxu0 0.0
    %583 = vmatpush1.msra.mxu0 0.0
    %584 = vmatprep.mubr.f32.mxu0 0.0
    %585 = vmatmul.mubr.f32.gmra.mrb[0].mxu0 1.0
    %v586 = vpop.f32.mrb[0].mxu0
    %v587 = vadd.f32 0.0, %v586
    %v588 = vpop.f32.mrb[0].mxu0
    %v589 = vadd.f32 0.0, %v588
    %590 = vdwg.mxu0
    %v595 = vcombine.low %v516, %v518
    %v596 = vcombine.low %v587, %v589
    %v598 = vunpack.c.l.s4 1983009808
    %v599 = vunpack.c.0.s8 %v598
    %v600 = vlaneseq
    %v601 = vshrl.u32 %v600, 7
    %v602 = vsub.s32 %v599, %v601
    %v603 = vrot.slane %v595, %v602
    %v605 = vunpack.c.l.s4 1983009808
    %v606 = vunpack.c.0.s8 %v605
    %v607 = vlaneseq
    %v608 = vshrl.u32 %v607, 7
    %v609 = vsub.s32 %v606, %v608
    %v610 = vrot.slane %v596, %v609
    %v611 = vcombine.low %v603, %v610
    %v613 = vadd.f32 %v448, %v611
    %v614 = vxor.u32 %v613, 2147483648
    %v615 = vmul.f32 %v614, 1.442695
    %v616 = vpow.pop %v615
    %v617 = vadd.f32 %v616, 1.0
    %v618 = vrcp.pop %v617
    %v619 = vmul.f32 1.0, %v618
    %v621 = vrot.slane %v613, 2
    %v623 = vxor.u32 %v621, 2147483648
    %v624 = vmul.f32 %v623, 1.442695
    %v625 = vpow.pop %v624
    %v626 = vadd.f32 %v625, 1.0
    %v627 = vrcp.pop %v626
    %v628 = vmul.f32 1.0, %v627
    %v629 = vrot.slane %v613, 4
    %v631 = vtanh.pop %v629
    %v632 = vrot.slane %v613, 6
    %v634 = vxor.u32 %v632, 2147483648
    %v635 = vmul.f32 %v634, 1.442695
    %v636 = vpow.pop %v635
    %v637 = vadd.f32 %v636, 1.0
    %v638 = vrcp.pop %v637
    %v639 = vmul.f32 1.0, %v638
    %v640 = vmul.f32 %v619, %v631
    %v641 = vadd.f32 %v628, %v640
    %v642 = vtanh.pop %v641
    %v643 = vmul.f32 %v639, %v642
    %644 = vmatprep.subr.mxu0 %v155
    %645 = vmatpush1.msra.mxu0 %v154
    %646 = vmatprep.subr.mxu0 %v159
    %647 = vmatpush1.msra.mxu0 %v158
    %648 = vmatprep.subr.mxu0 %v163
    %649 = vmatpush1.msra.mxu0 %v162
    %650 = vmatprep.subr.mxu0 %v167
    %651 = vmatpush1.msra.mxu0 %v166
    %652 = vmatprep.subr.mxu0 %v171
    %653 = vmatpush1.msra.mxu0 %v170
    %654 = vmatprep.subr.mxu0 %v175
    %655 = vmatpush1.msra.mxu0 %v174
    %656 = vmatprep.subr.mxu0 %v179
    %657 = vmatpush1.msra.mxu0 %v178
    %658 = vmatprep.subr.mxu0 %v183
    %659 = vmatpush1.msra.mxu0 %v182
    %660 = vmatprep.subr.mxu0 %v187
    %661 = vmatpush1.msra.mxu0 %v186
    %662 = vmatprep.subr.mxu0 %v191
    %663 = vmatpush1.msra.mxu0 %v190
    %664 = vmatprep.subr.mxu0 %v195
    %665 = vmatpush1.msra.mxu0 %v194
    %666 = vmatprep.subr.mxu0 %v199
    %667 = vmatpush1.msra.mxu0 %v198
    %668 = vmatprep.subr.mxu0 %v203
    %669 = vmatpush1.msra.mxu0 %v202
    %670 = vmatprep.subr.mxu0 %v207
    %671 = vmatpush1.msra.mxu0 %v206
    %672 = vmatprep.subr.mxu0 %v211
    %673 = vmatpush1.msra.mxu0 %v210
    %674 = vmatprep.subr.mxu0 %v215
    %675 = vmatpush1.msra.mxu0 %v214
    %676 = vmatprep.subr.mxu0 0.0
    %677 = vmatpush1.msra.mxu0 0.0
    %678 = vmatprep.subr.mxu0 0.0
    %679 = vmatpush1.msra.mxu0 0.0
    %680 = vmatprep.subr.mxu0 0.0
    %681 = vmatpush1.msra.mxu0 0.0
    %682 = vmatprep.subr.mxu0 0.0
    %683 = vmatpush1.msra.mxu0 0.0
    %684 = vmatprep.subr.mxu0 0.0
    %685 = vmatpush1.msra.mxu0 0.0
    %686 = vmatprep.subr.mxu0 0.0
    %687 = vmatpush1.msra.mxu0 0.0
    %688 = vmatprep.subr.mxu0 0.0
    %689 = vmatpush1.msra.mxu0 0.0
    %690 = vmatprep.subr.mxu0 0.0
    %691 = vmatpush1.msra.mxu0 0.0
    %692 = vmatprep.subr.mxu0 0.0
    %693 = vmatpush1.msra.mxu0 0.0
    %694 = vmatprep.subr.mxu0 0.0
    %695 = vmatpush1.msra.mxu0 0.0
    %696 = vmatprep.subr.mxu0 0.0
    %697 = vmatpush1.msra.mxu0 0.0
    %698 = vmatprep.subr.mxu0 0.0
    %699 = vmatpush1.msra.mxu0 0.0
    %700 = vmatprep.subr.mxu0 0.0
    %701 = vmatpush1.msra.mxu0 0.0
    %702 = vmatprep.subr.mxu0 0.0
    %703 = vmatpush1.msra.mxu0 0.0
    %704 = vmatprep.subr.mxu0 0.0
    %705 = vmatpush1.msra.mxu0 0.0
    %706 = vmatprep.subr.mxu0 0.0
    %707 = vmatpush1.msra.mxu0 0.0
    %708 = vmatprep.mubr.f32.mxu0 0.0
    %709 = vmatmul.mubr.f32.gmra.mrb[0].mxu0 %v643
    %v710 = vpop.f32.mrb[0].mxu0
    %v711 = vadd.f32 %v373, %v710
    %v712 = vpop.f32.mrb[0].mxu0
    %v713 = vadd.f32 %v375, %v712
    %714 = vdwg.mxu0
    %715 = vmatprep.subr.mxu0 %v157
    %716 = vmatpush1.msra.mxu0 %v156
    %717 = vmatprep.subr.mxu0 %v161
    %718 = vmatpush1.msra.mxu0 %v160
    %719 = vmatprep.subr.mxu0 %v165
    %720 = vmatpush1.msra.mxu0 %v164
    %721 = vmatprep.subr.mxu0 %v169
    %722 = vmatpush1.msra.mxu0 %v168
    %723 = vmatprep.subr.mxu0 %v173
    %724 = vmatpush1.msra.mxu0 %v172
    %725 = vmatprep.subr.mxu0 %v177
    %726 = vmatpush1.msra.mxu0 %v176
    %727 = vmatprep.subr.mxu0 %v181
    %728 = vmatpush1.msra.mxu0 %v180
    %729 = vmatprep.subr.mxu0 %v185
    %730 = vmatpush1.msra.mxu0 %v184
    %731 = vmatprep.subr.mxu0 %v189
    %732 = vmatpush1.msra.mxu0 %v188
    %733 = vmatprep.subr.mxu0 %v193
    %734 = vmatpush1.msra.mxu0 %v192
    %735 = vmatprep.subr.mxu0 %v197
    %736 = vmatpush1.msra.mxu0 %v196
    %737 = vmatprep.subr.mxu0 %v201
    %738 = vmatpush1.msra.mxu0 %v200
    %739 = vmatprep.subr.mxu0 %v205
    %740 = vmatpush1.msra.mxu0 %v204
    %741 = vmatprep.subr.mxu0 %v209
    %742 = vmatpush1.msra.mxu0 %v208
    %743 = vmatprep.subr.mxu0 %v213
    %744 = vmatpush1.msra.mxu0 %v212
    %745 = vmatprep.subr.mxu0 %v217
    %746 = vmatpush1.msra.mxu0 %v216
    %747 = vmatprep.subr.mxu0 0.0
    %748 = vmatpush1.msra.mxu0 0.0
    %749 = vmatprep.subr.mxu0 0.0
    %750 = vmatpush1.msra.mxu0 0.0
    %751 = vmatprep.subr.mxu0 0.0
    %752 = vmatpush1.msra.mxu0 0.0
    %753 = vmatprep.subr.mxu0 0.0
    %754 = vmatpush1.msra.mxu0 0.0
    %755 = vmatprep.subr.mxu0 0.0
    %756 = vmatpush1.msra.mxu0 0.0
    %757 = vmatprep.subr.mxu0 0.0
    %758 = vmatpush1.msra.mxu0 0.0
    %759 = vmatprep.subr.mxu0 0.0
    %760 = vmatpush1.msra.mxu0 0.0
    %761 = vmatprep.subr.mxu0 0.0
    %762 = vmatpush1.msra.mxu0 0.0
    %763 = vmatprep.subr.mxu0 0.0
    %764 = vmatpush1.msra.mxu0 0.0
    %765 = vmatprep.subr.mxu0 0.0
    %766 = vmatpush1.msra.mxu0 0.0
    %767 = vmatprep.subr.mxu0 0.0
    %768 = vmatpush1.msra.mxu0 0.0
    %769 = vmatprep.subr.mxu0 0.0
    %770 = vmatpush1.msra.mxu0 0.0
    %771 = vmatprep.subr.mxu0 0.0
    %772 = vmatpush1.msra.mxu0 0.0
    %773 = vmatprep.subr.mxu0 0.0
    %774 = vmatpush1.msra.mxu0 0.0
    %775 = vmatprep.subr.mxu0 0.0
    %776 = vmatpush1.msra.mxu0 0.0
    %777 = vmatprep.subr.mxu0 0.0
    %778 = vmatpush1.msra.mxu0 0.0
    %779 = vmatprep.mubr.f32.mxu0 0.0
    %780 = vmatmul.mubr.f32.gmra.mrb[0].mxu0 %v643
    %v781 = vpop.f32.mrb[0].mxu0
    %v782 = vadd.f32 %v444, %v781
    %v783 = vpop.f32.mrb[0].mxu0
    %v784 = vadd.f32 %v446, %v783
    %785 = vdwg.mxu0
    %v786 = vxor.u32 %v711, 2147483648
    %v787 = vmul.f32 %v786, 1.442695
    %v788 = vpow.pop %v787
    %v789 = vadd.f32 %v788, 1.0
    %v790 = vrcp.pop %v789
    %v791 = vmul.f32 1.0, %v790
    %v792 = vxor.u32 %v713, 2147483648
    %v793 = vmul.f32 %v792, 1.442695
    %v794 = vpow.pop %v793
    %v795 = vadd.f32 %v794, 1.0
    %v796 = vrcp.pop %v795
    %v797 = vmul.f32 1.0, %v796
    %v798 = vtanh.pop %v782
    %v799 = vxor.u32 %v784, 2147483648
    %v800 = vmul.f32 %v799, 1.442695
    %v801 = vpow.pop %v800
    %v802 = vadd.f32 %v801, 1.0
    %v803 = vrcp.pop %v802
    %v804 = vmul.f32 1.0, %v803
    %v805 = vmul.f32 %v791, %v798
    %v806 = vadd.f32 %v797, %v805
    %v807 = vtanh.pop %v806
    %v808 = vmul.f32 %v804, %v807
    %v810 = vlaneseq
    %v811 = vshrl.u32 %v810, 7
    %v812 = vsub.s32 0, %v811
    %v813 = vrot.slane %v283, %v812
    %v815 = vmul.f32 %v808, %v813
    %vm816 = vcmask 1041408
    %v817 = vsel %vm816, %v815, 0.0
    %818 = vadd.xlane.f32.xlu0 %v817
    %v819 = vpop.xlane.xlu0 %818
    %v821 = vlaneseq
    %v822 = vshrl.u32 %v821, 7
    %v823 = vsub.s32 0, %v822
    %v824 = vrot.slane %v284, %v823
    %v826 = vadd.f32 %v819, %v824
    %827 = vmatprep.subr.mxu0 %v219
    %828 = vmatpush1.msra.mxu0 %v218
    %829 = vmatprep.subr.mxu0 %v223
    %830 = vmatpush1.msra.mxu0 %v222
    %831 = vmatprep.subr.mxu0 %v227
    %832 = vmatpush1.msra.mxu0 %v226
    %833 = vmatprep.subr.mxu0 %v231
    %834 = vmatpush1.msra.mxu0 %v230
    %835 = vmatprep.subr.mxu0 %v235
    %836 = vmatpush1.msra.mxu0 %v234
    %837 = vmatprep.subr.mxu0 %v239
    %838 = vmatpush1.msra.mxu0 %v238
    %839 = vmatprep.subr.mxu0 %v243
    %840 = vmatpush1.msra.mxu0 %v242
    %841 = vmatprep.subr.mxu0 %v247
    %842 = vmatpush1.msra.mxu0 %v246
    %843 = vmatprep.subr.mxu0 %v251
    %844 = vmatpush1.msra.mxu0 %v250
    %845 = vmatprep.subr.mxu0 %v255
    %846 = vmatpush1.msra.mxu0 %v254
    %847 = vmatprep.subr.mxu0 %v259
    %848 = vmatpush1.msra.mxu0 %v258
    %849 = vmatprep.subr.mxu0 %v263
    %850 = vmatpush1.msra.mxu0 %v262
    %851 = vmatprep.subr.mxu0 %v267
    %852 = vmatpush1.msra.mxu0 %v266
    %853 = vmatprep.subr.mxu0 %v271
    %854 = vmatpush1.msra.mxu0 %v270
    %855 = vmatprep.subr.mxu0 %v275
    %856 = vmatpush1.msra.mxu0 %v274
    %857 = vmatprep.subr.mxu0 %v279
    %858 = vmatpush1.msra.mxu0 %v278
    %859 = vmatprep.subr.mxu0 0.0
    %860 = vmatpush1.msra.mxu0 0.0
    %861 = vmatprep.subr.mxu0 0.0
    %862 = vmatpush1.msra.mxu0 0.0
    %863 = vmatprep.subr.mxu0 0.0
    %864 = vmatpush1.msra.mxu0 0.0
    %865 = vmatprep.subr.mxu0 0.0
    %866 = vmatpush1.msra.mxu0 0.0
    %867 = vmatprep.subr.mxu0 0.0
    %868 = vmatpush1.msra.mxu0 0.0
    %869 = vmatprep.subr.mxu0 0.0
    %870 = vmatpush1.msra.mxu0 0.0
    %871 = vmatprep.subr.mxu0 0.0
    %872 = vmatpush1.msra.mxu0 0.0
    %873 = vmatprep.subr.mxu0 0.0
    %874 = vmatpush1.msra.mxu0 0.0
    %875 = vmatprep.subr.mxu0 0.0
    %876 = vmatpush1.msra.mxu0 0.0
    %877 = vmatprep.subr.mxu0 0.0
    %878 = vmatpush1.msra.mxu0 0.0
    %879 = vmatprep.subr.mxu0 0.0
    %880 = vmatpush1.msra.mxu0 0.0
    %881 = vmatprep.subr.mxu0 0.0
    %882 = vmatpush1.msra.mxu0 0.0
    %883 = vmatprep.subr.mxu0 0.0
    %884 = vmatpush1.msra.mxu0 0.0
    %885 = vmatprep.subr.mxu0 0.0
    %886 = vmatpush1.msra.mxu0 0.0
    %887 = vmatprep.subr.mxu0 0.0
    %888 = vmatpush1.msra.mxu0 0.0
    %889 = vmatprep.subr.mxu0 0.0
    %890 = vmatpush1.msra.mxu0 0.0
    %891 = vmatprep.mubr.f32.mxu0 0.0
    %892 = vmatmul.mubr.f32.gmra.mrb[0].mxu0 %v808
    %v893 = vpop.f32.mrb[0].mxu0
    %v894 = vadd.f32 %v289, %v893
    %v895 = vpop.f32.mrb[0].mxu0
    %v896 = vadd.f32 %v293, %v895
    %897 = vdwg.mxu0
    %898 = vmatprep.subr.mxu0 %v221
    %899 = vmatpush1.msra.mxu0 %v220
    %900 = vmatprep.subr.mxu0 %v225
    %901 = vmatpush1.msra.mxu0 %v224
    %902 = vmatprep.subr.mxu0 %v229
    %903 = vmatpush1.msra.mxu0 %v228
    %904 = vmatprep.subr.mxu0 %v233
    %905 = vmatpush1.msra.mxu0 %v232
    %906 = vmatprep.subr.mxu0 %v237
    %907 = vmatpush1.msra.mxu0 %v236
    %908 = vmatprep.subr.mxu0 %v241
    %909 = vmatpush1.msra.mxu0 %v240
    %910 = vmatprep.subr.mxu0 %v245
    %911 = vmatpush1.msra.mxu0 %v244
    %912 = vmatprep.subr.mxu0 %v249
    %913 = vmatpush1.msra.mxu0 %v248
    %914 = vmatprep.subr.mxu0 %v253
    %915 = vmatpush1.msra.mxu0 %v252
    %916 = vmatprep.subr.mxu0 %v257
    %917 = vmatpush1.msra.mxu0 %v256
    %918 = vmatprep.subr.mxu0 %v261
    %919 = vmatpush1.msra.mxu0 %v260
    %920 = vmatprep.subr.mxu0 %v265
    %921 = vmatpush1.msra.mxu0 %v264
    %922 = vmatprep.subr.mxu0 %v269
    %923 = vmatpush1.msra.mxu0 %v268
    %924 = vmatprep.subr.mxu0 %v273
    %925 = vmatpush1.msra.mxu0 %v272
    %926 = vmatprep.subr.mxu0 %v277
    %927 = vmatpush1.msra.mxu0 %v276
    %928 = vmatprep.subr.mxu0 %v281
    %929 = vmatpush1.msra.mxu0 %v280
    %930 = vmatprep.subr.mxu0 0.0
    %931 = vmatpush1.msra.mxu0 0.0
    %932 = vmatprep.subr.mxu0 0.0
    %933 = vmatpush1.msra.mxu0 0.0
    %934 = vmatprep.subr.mxu0 0.0
    %935 = vmatpush1.msra.mxu0 0.0
    %936 = vmatprep.subr.mxu0 0.0
    %937 = vmatpush1.msra.mxu0 0.0
    %938 = vmatprep.subr.mxu0 0.0
    %939 = vmatpush1.msra.mxu0 0.0
    %940 = vmatprep.subr.mxu0 0.0
    %941 = vmatpush1.msra.mxu0 0.0
    %942 = vmatprep.subr.mxu0 0.0
    %943 = vmatpush1.msra.mxu0 0.0
    %944 = vmatprep.subr.mxu0 0.0
    %945 = vmatpush1.msra.mxu0 0.0
    %946 = vmatprep.subr.mxu0 0.0
    %947 = vmatpush1.msra.mxu0 0.0
    %948 = vmatprep.subr.mxu0 0.0
    %949 = vmatpush1.msra.mxu0 0.0
    %950 = vmatprep.subr.mxu0 0.0
    %951 = vmatpush1.msra.mxu0 0.0
    %952 = vmatprep.subr.mxu0 0.0
    %953 = vmatpush1.msra.mxu0 0.0
    %954 = vmatprep.subr.mxu0 0.0
    %955 = vmatpush1.msra.mxu0 0.0
    %956 = vmatprep.subr.mxu0 0.0
    %957 = vmatpush1.msra.mxu0 0.0
    %958 = vmatprep.subr.mxu0 0.0
    %959 = vmatpush1.msra.mxu0 0.0
    %960 = vmatprep.subr.mxu0 0.0
    %961 = vmatpush1.msra.mxu0 0.0
    %962 = vmatprep.mubr.f32.mxu0 0.0
    %963 = vmatmul.mubr.f32.gmra.mrb[0].mxu0 %v808
    %v964 = vpop.f32.mrb[0].mxu0
    %v965 = vadd.f32 %v297, %v964
    %v966 = vpop.f32.mrb[0].mxu0
    %v967 = vadd.f32 %v301, %v966
    %968 = vdwg.mxu0
    %s969 = scalar_lea.vmem %s0, 8
    %v970 = vld [vmem:[%s969] sm:$0xff]
    %971 = vmatprep.subr.mxu0 %v91
    %972 = vmatpush1.msra.mxu0 %v90
    %973 = vmatprep.subr.mxu0 %v95
    %974 = vmatpush1.msra.mxu0 %v94
    %975 = vmatprep.subr.mxu0 %v99
    %976 = vmatpush1.msra.mxu0 %v98
    %977 = vmatprep.subr.mxu0 %v103
    %978 = vmatpush1.msra.mxu0 %v102
    %979 = vmatprep.subr.mxu0 %v107
    %980 = vmatpush1.msra.mxu0 %v106
    %981 = vmatprep.subr.mxu0 %v111
    %982 = vmatpush1.msra.mxu0 %v110
    %983 = vmatprep.subr.mxu0 %v115
    %984 = vmatpush1.msra.mxu0 %v114
    %985 = vmatprep.subr.mxu0 %v119
    %986 = vmatpush1.msra.mxu0 %v118
    %987 = vmatprep.subr.mxu0 %v123
    %988 = vmatpush1.msra.mxu0 %v122
    %989 = vmatprep.subr.mxu0 %v127
    %990 = vmatpush1.msra.mxu0 %v126
    %991 = vmatprep.subr.mxu0 %v131
    %992 = vmatpush1.msra.mxu0 %v130
    %993 = vmatprep.subr.mxu0 %v135
    %994 = vmatpush1.msra.mxu0 %v134
    %995 = vmatprep.subr.mxu0 %v139
    %996 = vmatpush1.msra.mxu0 %v138
    %997 = vmatprep.subr.mxu0 %v143
    %998 = vmatpush1.msra.mxu0 %v142
    %999 = vmatprep.subr.mxu0 %v147
    %1000 = vmatpush1.msra.mxu0 %v146
    %1001 = vmatprep.subr.mxu0 %v151
    %1002 = vmatpush1.msra.mxu0 %v150
    %1003 = vmatprep.subr.mxu0 0.0
    %1004 = vmatpush1.msra.mxu0 0.0
    %1005 = vmatprep.subr.mxu0 0.0
    %1006 = vmatpush1.msra.mxu0 0.0
    %1007 = vmatprep.subr.mxu0 0.0
    %1008 = vmatpush1.msra.mxu0 0.0
    %1009 = vmatprep.subr.mxu0 0.0
    %1010 = vmatpush1.msra.mxu0 0.0
    %1011 = vmatprep.subr.mxu0 0.0
    %1012 = vmatpush1.msra.mxu0 0.0
    %1013 = vmatprep.subr.mxu0 0.0
    %1014 = vmatpush1.msra.mxu0 0.0
    %1015 = vmatprep.subr.mxu0 0.0
    %1016 = vmatpush1.msra.mxu0 0.0
    %1017 = vmatprep.subr.mxu0 0.0
    %1018 = vmatpush1.msra.mxu0 0.0
    %1019 = vmatprep.subr.mxu0 0.0
    %1020 = vmatpush1.msra.mxu0 0.0
    %1021 = vmatprep.subr.mxu0 0.0
    %1022 = vmatpush1.msra.mxu0 0.0
    %1023 = vmatprep.subr.mxu0 0.0
    %1024 = vmatpush1.msra.mxu0 0.0
    %1025 = vmatprep.subr.mxu0 0.0
    %1026 = vmatpush1.msra.mxu0 0.0
    %1027 = vmatprep.subr.mxu0 0.0
    %1028 = vmatpush1.msra.mxu0 0.0
    %1029 = vmatprep.subr.mxu0 0.0
    %1030 = vmatpush1.msra.mxu0 0.0
    %1031 = vmatprep.subr.mxu0 0.0
    %1032 = vmatpush1.msra.mxu0 0.0
    %1033 = vmatprep.subr.mxu0 0.0
    %1034 = vmatpush1.msra.mxu0 0.0
    %1035 = vmatprep.mubr.f32.mxu0 0.0
    %1036 = vmatmul.mubr.f32.gmra.mrb[0].mxu0 %v643
    %v1037 = vpop.f32.mrb[0].mxu0
    %v1038 = vadd.f32 0.0, %v1037
    %v1039 = vpop.f32.mrb[0].mxu0
    %v1040 = vadd.f32 0.0, %v1039
    %1041 = vdwg.mxu0
    %1042 = vmatprep.subr.mxu0 %v93
    %1043 = vmatpush1.msra.mxu0 %v92
    %1044 = vmatprep.subr.mxu0 %v97
    %1045 = vmatpush1.msra.mxu0 %v96
    %1046 = vmatprep.subr.mxu0 %v101
    %1047 = vmatpush1.msra.mxu0 %v100
    %1048 = vmatprep.subr.mxu0 %v105
    %1049 = vmatpush1.msra.mxu0 %v104
    %1050 = vmatprep.subr.mxu0 %v109
    %1051 = vmatpush1.msra.mxu0 %v108
    %1052 = vmatprep.subr.mxu0 %v113
    %1053 = vmatpush1.msra.mxu0 %v112
    %1054 = vmatprep.subr.mxu0 %v117
    %1055 = vmatpush1.msra.mxu0 %v116
    %1056 = vmatprep.subr.mxu0 %v121
    %1057 = vmatpush1.msra.mxu0 %v120
    %1058 = vmatprep.subr.mxu0 %v125
    %1059 = vmatpush1.msra.mxu0 %v124
    %1060 = vmatprep.subr.mxu0 %v129
    %1061 = vmatpush1.msra.mxu0 %v128
    %1062 = vmatprep.subr.mxu0 %v133
    %1063 = vmatpush1.msra.mxu0 %v132
    %1064 = vmatprep.subr.mxu0 %v137
    %1065 = vmatpush1.msra.mxu0 %v136
    %1066 = vmatprep.subr.mxu0 %v141
    %1067 = vmatpush1.msra.mxu0 %v140
    %1068 = vmatprep.subr.mxu0 %v145
    %1069 = vmatpush1.msra.mxu0 %v144
    %1070 = vmatprep.subr.mxu0 %v149
    %1071 = vmatpush1.msra.mxu0 %v148
    %1072 = vmatprep.subr.mxu0 %v153
    %1073 = vmatpush1.msra.mxu0 %v152
    %1074 = vmatprep.subr.mxu0 0.0
    %1075 = vmatpush1.msra.mxu0 0.0
    %1076 = vmatprep.subr.mxu0 0.0
    %1077 = vmatpush1.msra.mxu0 0.0
    %1078 = vmatprep.subr.mxu0 0.0
    %1079 = vmatpush1.msra.mxu0 0.0
    %1080 = vmatprep.subr.mxu0 0.0
    %1081 = vmatpush1.msra.mxu0 0.0
    %1082 = vmatprep.subr.mxu0 0.0
    %1083 = vmatpush1.msra.mxu0 0.0
    %1084 = vmatprep.subr.mxu0 0.0
    %1085 = vmatpush1.msra.mxu0 0.0
    %1086 = vmatprep.subr.mxu0 0.0
    %1087 = vmatpush1.msra.mxu0 0.0
    %1088 = vmatprep.subr.mxu0 0.0
    %1089 = vmatpush1.msra.mxu0 0.0
    %1090 = vmatprep.subr.mxu0 0.0
    %1091 = vmatpush1.msra.mxu0 0.0
    %1092 = vmatprep.subr.mxu0 0.0
    %1093 = vmatpush1.msra.mxu0 0.0
    %1094 = vmatprep.subr.mxu0 0.0
    %1095 = vmatpush1.msra.mxu0 0.0
    %1096 = vmatprep.subr.mxu0 0.0
    %1097 = vmatpush1.msra.mxu0 0.0
    %1098 = vmatprep.subr.mxu0 0.0
    %1099 = vmatpush1.msra.mxu0 0.0
    %1100 = vmatprep.subr.mxu0 0.0
    %1101 = vmatpush1.msra.mxu0 0.0
    %1102 = vmatprep.subr.mxu0 0.0
    %1103 = vmatpush1.msra.mxu0 0.0
    %1104 = vmatprep.subr.mxu0 0.0
    %1105 = vmatpush1.msra.mxu0 0.0
    %1106 = vmatprep.mubr.f32.mxu0 0.0
    %1107 = vmatmul.mubr.f32.gmra.mrb[0].mxu0 %v643
    %v1108 = vpop.f32.mrb[0].mxu0
    %v1109 = vadd.f32 0.0, %v1108
    %v1110 = vpop.f32.mrb[0].mxu0
    %v1111 = vadd.f32 0.0, %v1110
    %1112 = vdwg.mxu0
    %v1117 = vcombine.low %v1038, %v1040
    %v1118 = vcombine.low %v1109, %v1111
    %v1120 = vunpack.c.l.s4 1983009808
    %v1121 = vunpack.c.0.s8 %v1120
    %v1122 = vlaneseq
    %v1123 = vshrl.u32 %v1122, 7
    %v1124 = vsub.s32 %v1121, %v1123
    %v1125 = vrot.slane %v1117, %v1124
    %v1127 = vunpack.c.l.s4 1983009808
    %v1128 = vunpack.c.0.s8 %v1127
    %v1129 = vlaneseq
    %v1130 = vshrl.u32 %v1129, 7
    %v1131 = vsub.s32 %v1128, %v1130
    %v1132 = vrot.slane %v1118, %v1131
    %v1133 = vcombine.low %v1125, %v1132
    %v1135 = vadd.f32 %v970, %v1133
    %v1136 = vxor.u32 %v1135, 2147483648
    %v1137 = vmul.f32 %v1136, 1.442695
    %v1138 = vpow.pop %v1137
    %v1139 = vadd.f32 %v1138, 1.0
    %v1140 = vrcp.pop %v1139
    %v1141 = vmul.f32 1.0, %v1140
    %v1143 = vrot.slane %v1135, 2
    %v1145 = vxor.u32 %v1143, 2147483648
    %v1146 = vmul.f32 %v1145, 1.442695
    %v1147 = vpow.pop %v1146
    %v1148 = vadd.f32 %v1147, 1.0
    %v1149 = vrcp.pop %v1148
    %v1150 = vmul.f32 1.0, %v1149
    %v1151 = vrot.slane %v1135, 4
    %v1153 = vtanh.pop %v1151
    %v1154 = vrot.slane %v1135, 6
    %v1156 = vxor.u32 %v1154, 2147483648
    %v1157 = vmul.f32 %v1156, 1.442695
    %v1158 = vpow.pop %v1157
    %v1159 = vadd.f32 %v1158, 1.0
    %v1160 = vrcp.pop %v1159
    %v1161 = vmul.f32 1.0, %v1160
    %v1162 = vmul.f32 %v1150, %v641
    %v1163 = vmul.f32 %v1141, %v1153
    %v1164 = vadd.f32 %v1162, %v1163
    %v1165 = vtanh.pop %v1164
    %v1166 = vmul.f32 %v1161, %v1165
    %1167 = vmatprep.subr.mxu0 %v155
    %1168 = vmatpush1.msra.mxu0 %v154
    %1169 = vmatprep.subr.mxu0 %v159
    %1170 = vmatpush1.msra.mxu0 %v158
    %1171 = vmatprep.subr.mxu0 %v163
    %1172 = vmatpush1.msra.mxu0 %v162
    %1173 = vmatprep.subr.mxu0 %v167
    %1174 = vmatpush1.msra.mxu0 %v166
    %1175 = vmatprep.subr.mxu0 %v171
    %1176 = vmatpush1.msra.mxu0 %v170
    %1177 = vmatprep.subr.mxu0 %v175
    %1178 = vmatpush1.msra.mxu0 %v174
    %1179 = vmatprep.subr.mxu0 %v179
    %1180 = vmatpush1.msra.mxu0 %v178
    %1181 = vmatprep.subr.mxu0 %v183
    %1182 = vmatpush1.msra.mxu0 %v182
    %1183 = vmatprep.subr.mxu0 %v187
    %1184 = vmatpush1.msra.mxu0 %v186
    %1185 = vmatprep.subr.mxu0 %v191
    %1186 = vmatpush1.msra.mxu0 %v190
    %1187 = vmatprep.subr.mxu0 %v195
    %1188 = vmatpush1.msra.mxu0 %v194
    %1189 = vmatprep.subr.mxu0 %v199
    %1190 = vmatpush1.msra.mxu0 %v198
    %1191 = vmatprep.subr.mxu0 %v203
    %1192 = vmatpush1.msra.mxu0 %v202
    %1193 = vmatprep.subr.mxu0 %v207
    %1194 = vmatpush1.msra.mxu0 %v206
    %1195 = vmatprep.subr.mxu0 %v211
    %1196 = vmatpush1.msra.mxu0 %v210
    %1197 = vmatprep.subr.mxu0 %v215
    %1198 = vmatpush1.msra.mxu0 %v214
    %1199 = vmatprep.subr.mxu0 0.0
    %1200 = vmatpush1.msra.mxu0 0.0
    %1201 = vmatprep.subr.mxu0 0.0
    %1202 = vmatpush1.msra.mxu0 0.0
    %1203 = vmatprep.subr.mxu0 0.0
    %1204 = vmatpush1.msra.mxu0 0.0
    %1205 = vmatprep.subr.mxu0 0.0
    %1206 = vmatpush1.msra.mxu0 0.0
    %1207 = vmatprep.subr.mxu0 0.0
    %1208 = vmatpush1.msra.mxu0 0.0
    %1209 = vmatprep.subr.mxu0 0.0
    %1210 = vmatpush1.msra.mxu0 0.0
    %1211 = vmatprep.subr.mxu0 0.0
    %1212 = vmatpush1.msra.mxu0 0.0
    %1213 = vmatprep.subr.mxu0 0.0
    %1214 = vmatpush1.msra.mxu0 0.0
    %1215 = vmatprep.subr.mxu0 0.0
    %1216 = vmatpush1.msra.mxu0 0.0
    %1217 = vmatprep.subr.mxu0 0.0
    %1218 = vmatpush1.msra.mxu0 0.0
    %1219 = vmatprep.subr.mxu0 0.0
    %1220 = vmatpush1.msra.mxu0 0.0
    %1221 = vmatprep.subr.mxu0 0.0
    %1222 = vmatpush1.msra.mxu0 0.0
    %1223 = vmatprep.subr.mxu0 0.0
    %1224 = vmatpush1.msra.mxu0 0.0
    %1225 = vmatprep.subr.mxu0 0.0
    %1226 = vmatpush1.msra.mxu0 0.0
    %1227 = vmatprep.subr.mxu0 0.0
    %1228 = vmatpush1.msra.mxu0 0.0
    %1229 = vmatprep.subr.mxu0 0.0
    %1230 = vmatpush1.msra.mxu0 0.0
    %1231 = vmatprep.mubr.f32.mxu0 0.0
    %1232 = vmatmul.mubr.f32.gmra.mrb[0].mxu0 %v1166
    %v1233 = vpop.f32.mrb[0].mxu0
    %v1234 = vadd.f32 %v894, %v1233
    %v1235 = vpop.f32.mrb[0].mxu0
    %v1236 = vadd.f32 %v896, %v1235
    %1237 = vdwg.mxu0
    %1238 = vmatprep.subr.mxu0 %v157
    %1239 = vmatpush1.msra.mxu0 %v156
    %1240 = vmatprep.subr.mxu0 %v161
    %1241 = vmatpush1.msra.mxu0 %v160
    %1242 = vmatprep.subr.mxu0 %v165
    %1243 = vmatpush1.msra.mxu0 %v164
    %1244 = vmatprep.subr.mxu0 %v169
    %1245 = vmatpush1.msra.mxu0 %v168
    %1246 = vmatprep.subr.mxu0 %v173
    %1247 = vmatpush1.msra.mxu0 %v172
    %1248 = vmatprep.subr.mxu0 %v177
    %1249 = vmatpush1.msra.mxu0 %v176
    %1250 = vmatprep.subr.mxu0 %v181
    %1251 = vmatpush1.msra.mxu0 %v180
    %1252 = vmatprep.subr.mxu0 %v185
    %1253 = vmatpush1.msra.mxu0 %v184
    %1254 = vmatprep.subr.mxu0 %v189
    %1255 = vmatpush1.msra.mxu0 %v188
    %1256 = vmatprep.subr.mxu0 %v193
    %1257 = vmatpush1.msra.mxu0 %v192
    %1258 = vmatprep.subr.mxu0 %v197
    %1259 = vmatpush1.msra.mxu0 %v196
    %1260 = vmatprep.subr.mxu0 %v201
    %1261 = vmatpush1.msra.mxu0 %v200
    %1262 = vmatprep.subr.mxu0 %v205
    %1263 = vmatpush1.msra.mxu0 %v204
    %1264 = vmatprep.subr.mxu0 %v209
    %1265 = vmatpush1.msra.mxu0 %v208
    %1266 = vmatprep.subr.mxu0 %v213
    %1267 = vmatpush1.msra.mxu0 %v212
    %1268 = vmatprep.subr.mxu0 %v217
    %1269 = vmatpush1.msra.mxu0 %v216
    %1270 = vmatprep.subr.mxu0 0.0
    %1271 = vmatpush1.msra.mxu0 0.0
    %1272 = vmatprep.subr.mxu0 0.0
    %1273 = vmatpush1.msra.mxu0 0.0
    %1274 = vmatprep.subr.mxu0 0.0
    %1275 = vmatpush1.msra.mxu0 0.0
    %1276 = vmatprep.subr.mxu0 0.0
    %1277 = vmatpush1.msra.mxu0 0.0
    %1278 = vmatprep.subr.mxu0 0.0
    %1279 = vmatpush1.msra.mxu0 0.0
    %1280 = vmatprep.subr.mxu0 0.0
    %1281 = vmatpush1.msra.mxu0 0.0
    %1282 = vmatprep.subr.mxu0 0.0
    %1283 = vmatpush1.msra.mxu0 0.0
    %1284 = vmatprep.subr.mxu0 0.0
    %1285 = vmatpush1.msra.mxu0 0.0
    %1286 = vmatprep.subr.mxu0 0.0
    %1287 = vmatpush1.msra.mxu0 0.0
    %1288 = vmatprep.subr.mxu0 0.0
    %1289 = vmatpush1.msra.mxu0 0.0
    %1290 = vmatprep.subr.mxu0 0.0
    %1291 = vmatpush1.msra.mxu0 0.0
    %1292 = vmatprep.subr.mxu0 0.0
    %1293 = vmatpush1.msra.mxu0 0.0
    %1294 = vmatprep.subr.mxu0 0.0
    %1295 = vmatpush1.msra.mxu0 0.0
    %1296 = vmatprep.subr.mxu0 0.0
    %1297 = vmatpush1.msra.mxu0 0.0
    %1298 = vmatprep.subr.mxu0 0.0
    %1299 = vmatpush1.msra.mxu0 0.0
    %1300 = vmatprep.subr.mxu0 0.0
    %1301 = vmatpush1.msra.mxu0 0.0
    %1302 = vmatprep.mubr.f32.mxu0 0.0
    %1303 = vmatmul.mubr.f32.gmra.mrb[0].mxu0 %v1166
    %v1304 = vpop.f32.mrb[0].mxu0
    %v1305 = vadd.f32 %v965, %v1304
    %v1306 = vpop.f32.mrb[0].mxu0
    %v1307 = vadd.f32 %v967, %v1306
    %1308 = vdwg.mxu0
    %v1309 = vxor.u32 %v1234, 2147483648
    %v1310 = vmul.f32 %v1309, 1.442695
    %v1311 = vpow.pop %v1310
    %v1312 = vadd.f32 %v1311, 1.0
    %v1313 = vrcp.pop %v1312
    %v1314 = vmul.f32 1.0, %v1313
    %v1315 = vxor.u32 %v1236, 2147483648
    %v1316 = vmul.f32 %v1315, 1.442695
    %v1317 = vpow.pop %v1316
    %v1318 = vadd.f32 %v1317, 1.0
    %v1319 = vrcp.pop %v1318
    %v1320 = vmul.f32 1.0, %v1319
    %v1321 = vtanh.pop %v1305
    %v1322 = vxor.u32 %v1307, 2147483648
    %v1323 = vmul.f32 %v1322, 1.442695
    %v1324 = vpow.pop %v1323
    %v1325 = vadd.f32 %v1324, 1.0
    %v1326 = vrcp.pop %v1325
    %v1327 = vmul.f32 1.0, %v1326
    %v1328 = vmul.f32 %v1320, %v806
    %v1329 = vmul.f32 %v1314, %v1321
    %v1330 = vadd.f32 %v1328, %v1329
    %v1331 = vtanh.pop %v1330
    %v1332 = vmul.f32 %v1327, %v1331
    %v1333 = vmul.f32 %v1332, %v813
    %v1334 = vsel %vm816, %v1333, 0.0
    %1335 = vadd.xlane.f32.xlu0 %v1334
    %v1336 = vpop.xlane.xlu0 %1335
    %v1337 = vadd.f32 %v1336, %v824
    %1338 = vmatprep.subr.mxu0 %v219
    %1339 = vmatpush1.msra.mxu0 %v218
    %1340 = vmatprep.subr.mxu0 %v223
    %1341 = vmatpush1.msra.mxu0 %v222
    %1342 = vmatprep.subr.mxu0 %v227
    %1343 = vmatpush1.msra.mxu0 %v226
    %1344 = vmatprep.subr.mxu0 %v231
    %1345 = vmatpush1.msra.mxu0 %v230
    %1346 = vmatprep.subr.mxu0 %v235
    %1347 = vmatpush1.msra.mxu0 %v234
    %1348 = vmatprep.subr.mxu0 %v239
    %1349 = vmatpush1.msra.mxu0 %v238
    %1350 = vmatprep.subr.mxu0 %v243
    %1351 = vmatpush1.msra.mxu0 %v242
    %1352 = vmatprep.subr.mxu0 %v247
    %1353 = vmatpush1.msra.mxu0 %v246
    %1354 = vmatprep.subr.mxu0 %v251
    %1355 = vmatpush1.msra.mxu0 %v250
    %1356 = vmatprep.subr.mxu0 %v255
    %1357 = vmatpush1.msra.mxu0 %v254
    %1358 = vmatprep.subr.mxu0 %v259
    %1359 = vmatpush1.msra.mxu0 %v258
    %1360 = vmatprep.subr.mxu0 %v263
    %1361 = vmatpush1.msra.mxu0 %v262
    %1362 = vmatprep.subr.mxu0 %v267
    %1363 = vmatpush1.msra.mxu0 %v266
    %1364 = vmatprep.subr.mxu0 %v271
    %1365 = vmatpush1.msra.mxu0 %v270
    %1366 = vmatprep.subr.mxu0 %v275
    %1367 = vmatpush1.msra.mxu0 %v274
    %1368 = vmatprep.subr.mxu0 %v279
    %1369 = vmatpush1.msra.mxu0 %v278
    %1370 = vmatprep.subr.mxu0 0.0
    %1371 = vmatpush1.msra.mxu0 0.0
    %1372 = vmatprep.subr.mxu0 0.0
    %1373 = vmatpush1.msra.mxu0 0.0
    %1374 = vmatprep.subr.mxu0 0.0
    %1375 = vmatpush1.msra.mxu0 0.0
    %1376 = vmatprep.subr.mxu0 0.0
    %1377 = vmatpush1.msra.mxu0 0.0
    %1378 = vmatprep.subr.mxu0 0.0
    %1379 = vmatpush1.msra.mxu0 0.0
    %1380 = vmatprep.subr.mxu0 0.0
    %1381 = vmatpush1.msra.mxu0 0.0
    %1382 = vmatprep.subr.mxu0 0.0
    %1383 = vmatpush1.msra.mxu0 0.0
    %1384 = vmatprep.subr.mxu0 0.0
    %1385 = vmatpush1.msra.mxu0 0.0
    %1386 = vmatprep.subr.mxu0 0.0
    %1387 = vmatpush1.msra.mxu0 0.0
    %1388 = vmatprep.subr.mxu0 0.0
    %1389 = vmatpush1.msra.mxu0 0.0
    %1390 = vmatprep.subr.mxu0 0.0
    %1391 = vmatpush1.msra.mxu0 0.0
    %1392 = vmatprep.subr.mxu0 0.0
    %1393 = vmatpush1.msra.mxu0 0.0
    %1394 = vmatprep.subr.mxu0 0.0
    %1395 = vmatpush1.msra.mxu0 0.0
    %1396 = vmatprep.subr.mxu0 0.0
    %1397 = vmatpush1.msra.mxu0 0.0
    %1398 = vmatprep.subr.mxu0 0.0
    %1399 = vmatpush1.msra.mxu0 0.0
    %1400 = vmatprep.subr.mxu0 0.0
    %1401 = vmatpush1.msra.mxu0 0.0
    %1402 = vmatprep.mubr.f32.mxu0 0.0
    %1403 = vmatmul.mubr.f32.gmra.mrb[0].mxu0 %v1332
    %v1404 = vpop.f32.mrb[0].mxu0
    %v1405 = vadd.f32 %v289, %v1404
    %v1406 = vpop.f32.mrb[0].mxu0
    %v1407 = vadd.f32 %v293, %v1406
    %1408 = vdwg.mxu0
    %1409 = vmatprep.subr.mxu0 %v221
    %1410 = vmatpush1.msra.mxu0 %v220
    %1411 = vmatprep.subr.mxu0 %v225
    %1412 = vmatpush1.msra.mxu0 %v224
    %1413 = vmatprep.subr.mxu0 %v229
    %1414 = vmatpush1.msra.mxu0 %v228
    %1415 = vmatprep.subr.mxu0 %v233
    %1416 = vmatpush1.msra.mxu0 %v232
    %1417 = vmatprep.subr.mxu0 %v237
    %1418 = vmatpush1.msra.mxu0 %v236
    %1419 = vmatprep.subr.mxu0 %v241
    %1420 = vmatpush1.msra.mxu0 %v240
    %1421 = vmatprep.subr.mxu0 %v245
    %1422 = vmatpush1.msra.mxu0 %v244
    %1423 = vmatprep.subr.mxu0 %v249
    %1424 = vmatpush1.msra.mxu0 %v248
    %1425 = vmatprep.subr.mxu0 %v253
    %1426 = vmatpush1.msra.mxu0 %v252
    %1427 = vmatprep.subr.mxu0 %v257
    %1428 = vmatpush1.msra.mxu0 %v256
    %1429 = vmatprep.subr.mxu0 %v261
    %1430 = vmatpush1.msra.mxu0 %v260
    %1431 = vmatprep.subr.mxu0 %v265
    %1432 = vmatpush1.msra.mxu0 %v264
    %1433 = vmatprep.subr.mxu0 %v269
    %1434 = vmatpush1.msra.mxu0 %v268
    %1435 = vmatprep.subr.mxu0 %v273
    %1436 = vmatpush1.msra.mxu0 %v272
    %1437 = vmatprep.subr.mxu0 %v277
    %1438 = vmatpush1.msra.mxu0 %v276
    %1439 = vmatprep.subr.mxu0 %v281
    %1440 = vmatpush1.msra.mxu0 %v280
    %1441 = vmatprep.subr.mxu0 0.0
    %1442 = vmatpush1.msra.mxu0 0.0
    %1443 = vmatprep.subr.mxu0 0.0
    %1444 = vmatpush1.msra.mxu0 0.0
    %1445 = vmatprep.subr.mxu0 0.0
    %1446 = vmatpush1.msra.mxu0 0.0
    %1447 = vmatprep.subr.mxu0 0.0
    %1448 = vmatpush1.msra.mxu0 0.0
    %1449 = vmatprep.subr.mxu0 0.0
    %1450 = vmatpush1.msra.mxu0 0.0
    %1451 = vmatprep.subr.mxu0 0.0
    %1452 = vmatpush1.msra.mxu0 0.0
    %1453 = vmatprep.subr.mxu0 0.0
    %1454 = vmatpush1.msra.mxu0 0.0
    %1455 = vmatprep.subr.mxu0 0.0
    %1456 = vmatpush1.msra.mxu0 0.0
    %1457 = vmatprep.subr.mxu0 0.0
    %1458 = vmatpush1.msra.mxu0 0.0
    %1459 = vmatprep.subr.mxu0 0.0
    %1460 = vmatpush1.msra.mxu0 0.0
    %1461 = vmatprep.subr.mxu0 0.0
    %1462 = vmatpush1.msra.mxu0 0.0
    %1463 = vmatprep.subr.mxu0 0.0
    %1464 = vmatpush1.msra.mxu0 0.0
    %1465 = vmatprep.subr.mxu0 0.0
    %1466 = vmatpush1.msra.mxu0 0.0
    %1467 = vmatprep.subr.mxu0 0.0
    %1468 = vmatpush1.msra.mxu0 0.0
    %1469 = vmatprep.subr.mxu0 0.0
    %1470 = vmatpush1.msra.mxu0 0.0
    %1471 = vmatprep.subr.mxu0 0.0
    %1472 = vmatpush1.msra.mxu0 0.0
    %1473 = vmatprep.mubr.f32.mxu0 0.0
    %1474 = vmatmul.mubr.f32.gmra.mrb[0].mxu0 %v1332
    %v1475 = vpop.f32.mrb[0].mxu0
    %v1476 = vadd.f32 %v297, %v1475
    %v1477 = vpop.f32.mrb[0].mxu0
    %v1478 = vadd.f32 %v301, %v1477
    %1479 = vdwg.mxu0
    %s1480 = scalar_lea.vmem %s0, 16
    %v1481 = vld [vmem:[%s1480] sm:$0xff]
    %1482 = vmatprep.subr.mxu0 %v91
    %1483 = vmatpush1.msra.mxu0 %v90
    %1484 = vmatprep.subr.mxu0 %v95
    %1485 = vmatpush1.msra.mxu0 %v94
    %1486 = vmatprep.subr.mxu0 %v99
    %1487 = vmatpush1.msra.mxu0 %v98
    %1488 = vmatprep.subr.mxu0 %v103
    %1489 = vmatpush1.msra.mxu0 %v102
    %1490 = vmatprep.subr.mxu0 %v107
    %1491 = vmatpush1.msra.mxu0 %v106
    %1492 = vmatprep.subr.mxu0 %v111
    %1493 = vmatpush1.msra.mxu0 %v110
    %1494 = vmatprep.subr.mxu0 %v115
    %1495 = vmatpush1.msra.mxu0 %v114
    %1496 = vmatprep.subr.mxu0 %v119
    %1497 = vmatpush1.msra.mxu0 %v118
    %1498 = vmatprep.subr.mxu0 %v123
    %1499 = vmatpush1.msra.mxu0 %v122
    %1500 = vmatprep.subr.mxu0 %v127
    %1501 = vmatpush1.msra.mxu0 %v126
    %1502 = vmatprep.subr.mxu0 %v131
    %1503 = vmatpush1.msra.mxu0 %v130
    %1504 = vmatprep.subr.mxu0 %v135
    %1505 = vmatpush1.msra.mxu0 %v134
    %1506 = vmatprep.subr.mxu0 %v139
    %1507 = vmatpush1.msra.mxu0 %v138
    %1508 = vmatprep.subr.mxu0 %v143
    %1509 = vmatpush1.msra.mxu0 %v142
    %1510 = vmatprep.subr.mxu0 %v147
    %1511 = vmatpush1.msra.mxu0 %v146
    %1512 = vmatprep.subr.mxu0 %v151
    %1513 = vmatpush1.msra.mxu0 %v150
    %1514 = vmatprep.subr.mxu0 0.0
    %1515 = vmatpush1.msra.mxu0 0.0
    %1516 = vmatprep.subr.mxu0 0.0
    %1517 = vmatpush1.msra.mxu0 0.0
    %1518 = vmatprep.subr.mxu0 0.0
    %1519 = vmatpush1.msra.mxu0 0.0
    %1520 = vmatprep.subr.mxu0 0.0
    %1521 = vmatpush1.msra.mxu0 0.0
    %1522 = vmatprep.subr.mxu0 0.0
    %1523 = vmatpush1.msra.mxu0 0.0
    %1524 = vmatprep.subr.mxu0 0.0
    %1525 = vmatpush1.msra.mxu0 0.0
    %1526 = vmatprep.subr.mxu0 0.0
    %1527 = vmatpush1.msra.mxu0 0.0
    %1528 = vmatprep.subr.mxu0 0.0
    %1529 = vmatpush1.msra.mxu0 0.0
    %1530 = vmatprep.subr.mxu0 0.0
    %1531 = vmatpush1.msra.mxu0 0.0
    %1532 = vmatprep.subr.mxu0 0.0
    %1533 = vmatpush1.msra.mxu0 0.0
    %1534 = vmatprep.subr.mxu0 0.0
    %1535 = vmatpush1.msra.mxu0 0.0
    %1536 = vmatprep.subr.mxu0 0.0
    %1537 = vmatpush1.msra.mxu0 0.0
    %1538 = vmatprep.subr.mxu0 0.0
    %1539 = vmatpush1.msra.mxu0 0.0
    %1540 = vmatprep.subr.mxu0 0.0
    %1541 = vmatpush1.msra.mxu0 0.0
    %1542 = vmatprep.subr.mxu0 0.0
    %1543 = vmatpush1.msra.mxu0 0.0
    %1544 = vmatprep.subr.mxu0 0.0
    %1545 = vmatpush1.msra.mxu0 0.0
    %1546 = vmatprep.mubr.f32.mxu0 0.0
    %1547 = vmatmul.mubr.f32.gmra.mrb[0].mxu0 %v1166
    %v1548 = vpop.f32.mrb[0].mxu0
    %v1549 = vadd.f32 0.0, %v1548
    %v1550 = vpop.f32.mrb[0].mxu0
    %v1551 = vadd.f32 0.0, %v1550
    %1552 = vdwg.mxu0
    %1553 = vmatprep.subr.mxu0 %v93
    %1554 = vmatpush1.msra.mxu0 %v92
    %1555 = vmatprep.subr.mxu0 %v97
    %1556 = vmatpush1.msra.mxu0 %v96
    %1557 = vmatprep.subr.mxu0 %v101
    %1558 = vmatpush1.msra.mxu0 %v100
    %1559 = vmatprep.subr.mxu0 %v105
    %1560 = vmatpush1.msra.mxu0 %v104
    %1561 = vmatprep.subr.mxu0 %v109
    %1562 = vmatpush1.msra.mxu0 %v108
    %1563 = vmatprep.subr.mxu0 %v113
    %1564 = vmatpush1.msra.mxu0 %v112
    %1565 = vmatprep.subr.mxu0 %v117
    %1566 = vmatpush1.msra.mxu0 %v116
    %1567 = vmatprep.subr.mxu0 %v121
    %1568 = vmatpush1.msra.mxu0 %v120
    %1569 = vmatprep.subr.mxu0 %v125
    %1570 = vmatpush1.msra.mxu0 %v124
    %1571 = vmatprep.subr.mxu0 %v129
    %1572 = vmatpush1.msra.mxu0 %v128
    %1573 = vmatprep.subr.mxu0 %v133
    %1574 = vmatpush1.msra.mxu0 %v132
    %1575 = vmatprep.subr.mxu0 %v137
    %1576 = vmatpush1.msra.mxu0 %v136
    %1577 = vmatprep.subr.mxu0 %v141
    %1578 = vmatpush1.msra.mxu0 %v140
    %1579 = vmatprep.subr.mxu0 %v145
    %1580 = vmatpush1.msra.mxu0 %v144
    %1581 = vmatprep.subr.mxu0 %v149
    %1582 = vmatpush1.msra.mxu0 %v148
    %1583 = vmatprep.subr.mxu0 %v153
    %1584 = vmatpush1.msra.mxu0 %v152
    %1585 = vmatprep.subr.mxu0 0.0
    %1586 = vmatpush1.msra.mxu0 0.0
    %1587 = vmatprep.subr.mxu0 0.0
    %1588 = vmatpush1.msra.mxu0 0.0
    %1589 = vmatprep.subr.mxu0 0.0
    %1590 = vmatpush1.msra.mxu0 0.0
    %1591 = vmatprep.subr.mxu0 0.0
    %1592 = vmatpush1.msra.mxu0 0.0
    %1593 = vmatprep.subr.mxu0 0.0
    %1594 = vmatpush1.msra.mxu0 0.0
    %1595 = vmatprep.subr.mxu0 0.0
    %1596 = vmatpush1.msra.mxu0 0.0
    %1597 = vmatprep.subr.mxu0 0.0
    %1598 = vmatpush1.msra.mxu0 0.0
    %1599 = vmatprep.subr.mxu0 0.0
    %1600 = vmatpush1.msra.mxu0 0.0
    %1601 = vmatprep.subr.mxu0 0.0
    %1602 = vmatpush1.msra.mxu0 0.0
    %1603 = vmatprep.subr.mxu0 0.0
    %1604 = vmatpush1.msra.mxu0 0.0
    %1605 = vmatprep.subr.mxu0 0.0
    %1606 = vmatpush1.msra.mxu0 0.0
    %1607 = vmatprep.subr.mxu0 0.0
    %1608 = vmatpush1.msra.mxu0 0.0
    %1609 = vmatprep.subr.mxu0 0.0
    %1610 = vmatpush1.msra.mxu0 0.0
    %1611 = vmatprep.subr.mxu0 0.0
    %1612 = vmatpush1.msra.mxu0 0.0
    %1613 = vmatprep.subr.mxu0 0.0
    %1614 = vmatpush1.msra.mxu0 0.0
    %1615 = vmatprep.subr.mxu0 0.0
    %1616 = vmatpush1.msra.mxu0 0.0
    %1617 = vmatprep.mubr.f32.mxu0 0.0
    %1618 = vmatmul.mubr.f32.gmra.mrb[0].mxu0 %v1166
    %v1619 = vpop.f32.mrb[0].mxu0
    %v1620 = vadd.f32 0.0, %v1619
    %v1621 = vpop.f32.mrb[0].mxu0
    %v1622 = vadd.f32 0.0, %v1621
    %1623 = vdwg.mxu0
    %v1628 = vcombine.low %v1549, %v1551
    %v1629 = vcombine.low %v1620, %v1622
    %v1631 = vunpack.c.l.s4 1983009808
    %v1632 = vunpack.c.0.s8 %v1631
    %v1633 = vlaneseq
    %v1634 = vshrl.u32 %v1633, 7
    %v1635 = vsub.s32 %v1632, %v1634
    %v1636 = vrot.slane %v1628, %v1635
    %v1638 = vunpack.c.l.s4 1983009808
    %v1639 = vunpack.c.0.s8 %v1638
    %v1640 = vlaneseq
    %v1641 = vshrl.u32 %v1640, 7
    %v1642 = vsub.s32 %v1639, %v1641
    %v1643 = vrot.slane %v1629, %v1642
    %v1644 = vcombine.low %v1636, %v1643
    %v1646 = vadd.f32 %v1481, %v1644
    %v1647 = vxor.u32 %v1646, 2147483648
    %v1648 = vmul.f32 %v1647, 1.442695
    %v1649 = vpow.pop %v1648
    %v1650 = vadd.f32 %v1649, 1.0
    %v1651 = vrcp.pop %v1650
    %v1652 = vmul.f32 1.0, %v1651
    %v1654 = vrot.slane %v1646, 2
    %v1656 = vxor.u32 %v1654, 2147483648
    %v1657 = vmul.f32 %v1656, 1.442695
    %v1658 = vpow.pop %v1657
    %v1659 = vadd.f32 %v1658, 1.0
    %v1660 = vrcp.pop %v1659
    %v1661 = vmul.f32 1.0, %v1660
    %v1662 = vrot.slane %v1646, 4
    %v1664 = vtanh.pop %v1662
    %v1665 = vrot.slane %v1646, 6
    %v1667 = vxor.u32 %v1665, 2147483648
    %v1668 = vmul.f32 %v1667, 1.442695
    %v1669 = vpow.pop %v1668
    %v1670 = vadd.f32 %v1669, 1.0
    %v1671 = vrcp.pop %v1670
    %v1672 = vmul.f32 1.0, %v1671
    %v1673 = vmul.f32 %v1661, %v1164
    %v1674 = vmul.f32 %v1652, %v1664
    %v1675 = vadd.f32 %v1673, %v1674
    %v1676 = vtanh.pop %v1675
    %v1677 = vmul.f32 %v1672, %v1676
    %1678 = vmatprep.subr.mxu0 %v155
    %1679 = vmatpush1.msra.mxu0 %v154
    %1680 = vmatprep.subr.mxu0 %v159
    %1681 = vmatpush1.msra.mxu0 %v158
    %1682 = vmatprep.subr.mxu0 %v163
    %1683 = vmatpush1.msra.mxu0 %v162
    %1684 = vmatprep.subr.mxu0 %v167
    %1685 = vmatpush1.msra.mxu0 %v166
    %1686 = vmatprep.subr.mxu0 %v171
    %1687 = vmatpush1.msra.mxu0 %v170
    %1688 = vmatprep.subr.mxu0 %v175
    %1689 = vmatpush1.msra.mxu0 %v174
    %1690 = vmatprep.subr.mxu0 %v179
    %1691 = vmatpush1.msra.mxu0 %v178
    %1692 = vmatprep.subr.mxu0 %v183
    %1693 = vmatpush1.msra.mxu0 %v182
    %1694 = vmatprep.subr.mxu0 %v187
    %1695 = vmatpush1.msra.mxu0 %v186
    %1696 = vmatprep.subr.mxu0 %v191
    %1697 = vmatpush1.msra.mxu0 %v190
    %1698 = vmatprep.subr.mxu0 %v195
    %1699 = vmatpush1.msra.mxu0 %v194
    %1700 = vmatprep.subr.mxu0 %v199
    %1701 = vmatpush1.msra.mxu0 %v198
    %1702 = vmatprep.subr.mxu0 %v203
    %1703 = vmatpush1.msra.mxu0 %v202
    %1704 = vmatprep.subr.mxu0 %v207
    %1705 = vmatpush1.msra.mxu0 %v206
    %1706 = vmatprep.subr.mxu0 %v211
    %1707 = vmatpush1.msra.mxu0 %v210
    %1708 = vmatprep.subr.mxu0 %v215
    %1709 = vmatpush1.msra.mxu0 %v214
    %1710 = vmatprep.subr.mxu0 0.0
    %1711 = vmatpush1.msra.mxu0 0.0
    %1712 = vmatprep.subr.mxu0 0.0
    %1713 = vmatpush1.msra.mxu0 0.0
    %1714 = vmatprep.subr.mxu0 0.0
    %1715 = vmatpush1.msra.mxu0 0.0
    %1716 = vmatprep.subr.mxu0 0.0
    %1717 = vmatpush1.msra.mxu0 0.0
    %1718 = vmatprep.subr.mxu0 0.0
    %1719 = vmatpush1.msra.mxu0 0.0
    %1720 = vmatprep.subr.mxu0 0.0
    %1721 = vmatpush1.msra.mxu0 0.0
    %1722 = vmatprep.subr.mxu0 0.0
    %1723 = vmatpush1.msra.mxu0 0.0
    %1724 = vmatprep.subr.mxu0 0.0
    %1725 = vmatpush1.msra.mxu0 0.0
    %1726 = vmatprep.subr.mxu0 0.0
    %1727 = vmatpush1.msra.mxu0 0.0
    %1728 = vmatprep.subr.mxu0 0.0
    %1729 = vmatpush1.msra.mxu0 0.0
    %1730 = vmatprep.subr.mxu0 0.0
    %1731 = vmatpush1.msra.mxu0 0.0
    %1732 = vmatprep.subr.mxu0 0.0
    %1733 = vmatpush1.msra.mxu0 0.0
    %1734 = vmatprep.subr.mxu0 0.0
    %1735 = vmatpush1.msra.mxu0 0.0
    %1736 = vmatprep.subr.mxu0 0.0
    %1737 = vmatpush1.msra.mxu0 0.0
    %1738 = vmatprep.subr.mxu0 0.0
    %1739 = vmatpush1.msra.mxu0 0.0
    %1740 = vmatprep.subr.mxu0 0.0
    %1741 = vmatpush1.msra.mxu0 0.0
    %1742 = vmatprep.mubr.f32.mxu0 0.0
    %1743 = vmatmul.mubr.f32.gmra.mrb[0].mxu0 %v1677
    %v1744 = vpop.f32.mrb[0].mxu0
    %v1745 = vadd.f32 %v1405, %v1744
    %v1746 = vpop.f32.mrb[0].mxu0
    %v1747 = vadd.f32 %v1407, %v1746
    %1748 = vdwg.mxu0
    %1749 = vmatprep.subr.mxu0 %v157
    %1750 = vmatpush1.msra.mxu0 %v156
    %1751 = vmatprep.subr.mxu0 %v161
    %1752 = vmatpush1.msra.mxu0 %v160
    %1753 = vmatprep.subr.mxu0 %v165
    %1754 = vmatpush1.msra.mxu0 %v164
    %1755 = vmatprep.subr.mxu0 %v169
    %1756 = vmatpush1.msra.mxu0 %v168
    %1757 = vmatprep.subr.mxu0 %v173
    %1758 = vmatpush1.msra.mxu0 %v172
    %1759 = vmatprep.subr.mxu0 %v177
    %1760 = vmatpush1.msra.mxu0 %v176
    %1761 = vmatprep.subr.mxu0 %v181
    %1762 = vmatpush1.msra.mxu0 %v180
    %1763 = vmatprep.subr.mxu0 %v185
    %1764 = vmatpush1.msra.mxu0 %v184
    %1765 = vmatprep.subr.mxu0 %v189
    %1766 = vmatpush1.msra.mxu0 %v188
    %1767 = vmatprep.subr.mxu0 %v193
    %1768 = vmatpush1.msra.mxu0 %v192
    %1769 = vmatprep.subr.mxu0 %v197
    %1770 = vmatpush1.msra.mxu0 %v196
    %1771 = vmatprep.subr.mxu0 %v201
    %1772 = vmatpush1.msra.mxu0 %v200
    %1773 = vmatprep.subr.mxu0 %v205
    %1774 = vmatpush1.msra.mxu0 %v204
    %1775 = vmatprep.subr.mxu0 %v209
    %1776 = vmatpush1.msra.mxu0 %v208
    %1777 = vmatprep.subr.mxu0 %v213
    %1778 = vmatpush1.msra.mxu0 %v212
    %1779 = vmatprep.subr.mxu0 %v217
    %1780 = vmatpush1.msra.mxu0 %v216
    %1781 = vmatprep.subr.mxu0 0.0
    %1782 = vmatpush1.msra.mxu0 0.0
    %1783 = vmatprep.subr.mxu0 0.0
    %1784 = vmatpush1.msra.mxu0 0.0
    %1785 = vmatprep.subr.mxu0 0.0
    %1786 = vmatpush1.msra.mxu0 0.0
    %1787 = vmatprep.subr.mxu0 0.0
    %1788 = vmatpush1.msra.mxu0 0.0
    %1789 = vmatprep.subr.mxu0 0.0
    %1790 = vmatpush1.msra.mxu0 0.0
    %1791 = vmatprep.subr.mxu0 0.0
    %1792 = vmatpush1.msra.mxu0 0.0
    %1793 = vmatprep.subr.mxu0 0.0
    %1794 = vmatpush1.msra.mxu0 0.0
    %1795 = vmatprep.subr.mxu0 0.0
    %1796 = vmatpush1.msra.mxu0 0.0
    %1797 = vmatprep.subr.mxu0 0.0
    %1798 = vmatpush1.msra.mxu0 0.0
    %1799 = vmatprep.subr.mxu0 0.0
    %1800 = vmatpush1.msra.mxu0 0.0
    %1801 = vmatprep.subr.mxu0 0.0
    %1802 = vmatpush1.msra.mxu0 0.0
    %1803 = vmatprep.subr.mxu0 0.0
    %1804 = vmatpush1.msra.mxu0 0.0
    %1805 = vmatprep.subr.mxu0 0.0
    %1806 = vmatpush1.msra.mxu0 0.0
    %1807 = vmatprep.subr.mxu0 0.0
    %1808 = vmatpush1.msra.mxu0 0.0
    %1809 = vmatprep.subr.mxu0 0.0
    %1810 = vmatpush1.msra.mxu0 0.0
    %1811 = vmatprep.subr.mxu0 0.0
    %1812 = vmatpush1.msra.mxu0 0.0
    %1813 = vmatprep.mubr.f32.mxu0 0.0
    %1814 = vmatmul.mubr.f32.gmra.mrb[0].mxu0 %v1677
    %v1815 = vpop.f32.mrb[0].mxu0
    %v1816 = vadd.f32 %v1476, %v1815
    %v1817 = vpop.f32.mrb[0].mxu0
    %v1818 = vadd.f32 %v1478, %v1817
    %1819 = vdwg.mxu0
    %v1820 = vxor.u32 %v1745, 2147483648
    %v1821 = vmul.f32 %v1820, 1.442695
    %v1822 = vpow.pop %v1821
    %v1823 = vadd.f32 %v1822, 1.0
    %v1824 = vrcp.pop %v1823
    %v1825 = vmul.f32 1.0, %v1824
    %v1826 = vxor.u32 %v1747, 2147483648
    %v1827 = vmul.f32 %v1826, 1.442695
    %v1828 = vpow.pop %v1827
    %v1829 = vadd.f32 %v1828, 1.0
    %v1830 = vrcp.pop %v1829
    %v1831 = vmul.f32 1.0, %v1830
    %v1832 = vtanh.pop %v1816
    %v1833 = vxor.u32 %v1818, 2147483648
    %v1834 = vmul.f32 %v1833, 1.442695
    %v1835 = vpow.pop %v1834
    %v1836 = vadd.f32 %v1835, 1.0
    %v1837 = vrcp.pop %v1836
    %v1838 = vmul.f32 1.0, %v1837
    %v1839 = vmul.f32 %v1831, %v1330
    %v1840 = vmul.f32 %v1825, %v1832
    %v1841 = vadd.f32 %v1839, %v1840
    %v1842 = vtanh.pop %v1841
    %v1843 = vmul.f32 %v1838, %v1842
    %v1844 = vmul.f32 %v1843, %v813
    %v1845 = vsel %vm816, %v1844, 0.0
    %1846 = vadd.xlane.f32.xlu0 %v1845
    %v1847 = vpop.xlane.xlu0 %1846
    %v1848 = vadd.f32 %v1847, %v824
    %1849 = vmatprep.subr.mxu0 %v219
    %1850 = vmatpush1.msra.mxu0 %v218
    %1851 = vmatprep.subr.mxu0 %v223
    %1852 = vmatpush1.msra.mxu0 %v222
    %1853 = vmatprep.subr.mxu0 %v227
    %1854 = vmatpush1.msra.mxu0 %v226
    %1855 = vmatprep.subr.mxu0 %v231
    %1856 = vmatpush1.msra.mxu0 %v230
    %1857 = vmatprep.subr.mxu0 %v235
    %1858 = vmatpush1.msra.mxu0 %v234
    %1859 = vmatprep.subr.mxu0 %v239
    %1860 = vmatpush1.msra.mxu0 %v238
    %1861 = vmatprep.subr.mxu0 %v243
    %1862 = vmatpush1.msra.mxu0 %v242
    %1863 = vmatprep.subr.mxu0 %v247
    %1864 = vmatpush1.msra.mxu0 %v246
    %1865 = vmatprep.subr.mxu0 %v251
    %1866 = vmatpush1.msra.mxu0 %v250
    %1867 = vmatprep.subr.mxu0 %v255
    %1868 = vmatpush1.msra.mxu0 %v254
    %1869 = vmatprep.subr.mxu0 %v259
    %1870 = vmatpush1.msra.mxu0 %v258
    %1871 = vmatprep.subr.mxu0 %v263
    %1872 = vmatpush1.msra.mxu0 %v262
    %1873 = vmatprep.subr.mxu0 %v267
    %1874 = vmatpush1.msra.mxu0 %v266
    %1875 = vmatprep.subr.mxu0 %v271
    %1876 = vmatpush1.msra.mxu0 %v270
    %1877 = vmatprep.subr.mxu0 %v275
    %1878 = vmatpush1.msra.mxu0 %v274
    %1879 = vmatprep.subr.mxu0 %v279
    %1880 = vmatpush1.msra.mxu0 %v278
    %1881 = vmatprep.subr.mxu0 0.0
    %1882 = vmatpush1.msra.mxu0 0.0
    %1883 = vmatprep.subr.mxu0 0.0
    %1884 = vmatpush1.msra.mxu0 0.0
    %1885 = vmatprep.subr.mxu0 0.0
    %1886 = vmatpush1.msra.mxu0 0.0
    %1887 = vmatprep.subr.mxu0 0.0
    %1888 = vmatpush1.msra.mxu0 0.0
    %1889 = vmatprep.subr.mxu0 0.0
    %1890 = vmatpush1.msra.mxu0 0.0
    %1891 = vmatprep.subr.mxu0 0.0
    %1892 = vmatpush1.msra.mxu0 0.0
    %1893 = vmatprep.subr.mxu0 0.0
    %1894 = vmatpush1.msra.mxu0 0.0
    %1895 = vmatprep.subr.mxu0 0.0
    %1896 = vmatpush1.msra.mxu0 0.0
    %1897 = vmatprep.subr.mxu0 0.0
    %1898 = vmatpush1.msra.mxu0 0.0
    %1899 = vmatprep.subr.mxu0 0.0
    %1900 = vmatpush1.msra.mxu0 0.0
    %1901 = vmatprep.subr.mxu0 0.0
    %1902 = vmatpush1.msra.mxu0 0.0
    %1903 = vmatprep.subr.mxu0 0.0
    %1904 = vmatpush1.msra.mxu0 0.0
    %1905 = vmatprep.subr.mxu0 0.0
    %1906 = vmatpush1.msra.mxu0 0.0
    %1907 = vmatprep.subr.mxu0 0.0
    %1908 = vmatpush1.msra.mxu0 0.0
    %1909 = vmatprep.subr.mxu0 0.0
    %1910 = vmatpush1.msra.mxu0 0.0
    %1911 = vmatprep.subr.mxu0 0.0
    %1912 = vmatpush1.msra.mxu0 0.0
    %1913 = vmatprep.mubr.f32.mxu0 0.0
    %1914 = vmatmul.mubr.f32.gmra.mrb[0].mxu0 %v1843
    %v1915 = vpop.f32.mrb[0].mxu0
    %v1916 = vadd.f32 %v289, %v1915
    %v1917 = vpop.f32.mrb[0].mxu0
    %v1918 = vadd.f32 %v293, %v1917
    %1919 = vdwg.mxu0
    %1920 = vmatprep.subr.mxu0 %v221
    %1921 = vmatpush1.msra.mxu0 %v220
    %1922 = vmatprep.subr.mxu0 %v225
    %1923 = vmatpush1.msra.mxu0 %v224
    %1924 = vmatprep.subr.mxu0 %v229
    %1925 = vmatpush1.msra.mxu0 %v228
    %1926 = vmatprep.subr.mxu0 %v233
    %1927 = vmatpush1.msra.mxu0 %v232
    %1928 = vmatprep.subr.mxu0 %v237
    %1929 = vmatpush1.msra.mxu0 %v236
    %1930 = vmatprep.subr.mxu0 %v241
    %1931 = vmatpush1.msra.mxu0 %v240
    %1932 = vmatprep.subr.mxu0 %v245
    %1933 = vmatpush1.msra.mxu0 %v244
    %1934 = vmatprep.subr.mxu0 %v249
    %1935 = vmatpush1.msra.mxu0 %v248
    %1936 = vmatprep.subr.mxu0 %v253
    %1937 = vmatpush1.msra.mxu0 %v252
    %1938 = vmatprep.subr.mxu0 %v257
    %1939 = vmatpush1.msra.mxu0 %v256
    %1940 = vmatprep.subr.mxu0 %v261
    %1941 = vmatpush1.msra.mxu0 %v260
    %1942 = vmatprep.subr.mxu0 %v265
    %1943 = vmatpush1.msra.mxu0 %v264
    %1944 = vmatprep.subr.mxu0 %v269
    %1945 = vmatpush1.msra.mxu0 %v268
    %1946 = vmatprep.subr.mxu0 %v273
    %1947 = vmatpush1.msra.mxu0 %v272
    %1948 = vmatprep.subr.mxu0 %v277
    %1949 = vmatpush1.msra.mxu0 %v276
    %1950 = vmatprep.subr.mxu0 %v281
    %1951 = vmatpush1.msra.mxu0 %v280
    %1952 = vmatprep.subr.mxu0 0.0
    %1953 = vmatpush1.msra.mxu0 0.0
    %1954 = vmatprep.subr.mxu0 0.0
    %1955 = vmatpush1.msra.mxu0 0.0
    %1956 = vmatprep.subr.mxu0 0.0
    %1957 = vmatpush1.msra.mxu0 0.0
    %1958 = vmatprep.subr.mxu0 0.0
    %1959 = vmatpush1.msra.mxu0 0.0
    %1960 = vmatprep.subr.mxu0 0.0
    %1961 = vmatpush1.msra.mxu0 0.0
    %1962 = vmatprep.subr.mxu0 0.0
    %1963 = vmatpush1.msra.mxu0 0.0
    %1964 = vmatprep.subr.mxu0 0.0
    %1965 = vmatpush1.msra.mxu0 0.0
    %1966 = vmatprep.subr.mxu0 0.0
    %1967 = vmatpush1.msra.mxu0 0.0
    %1968 = vmatprep.subr.mxu0 0.0
    %1969 = vmatpush1.msra.mxu0 0.0
    %1970 = vmatprep.subr.mxu0 0.0
    %1971 = vmatpush1.msra.mxu0 0.0
    %1972 = vmatprep.subr.mxu0 0.0
    %1973 = vmatpush1.msra.mxu0 0.0
    %1974 = vmatprep.subr.mxu0 0.0
    %1975 = vmatpush1.msra.mxu0 0.0
    %1976 = vmatprep.subr.mxu0 0.0
    %1977 = vmatpush1.msra.mxu0 0.0
    %1978 = vmatprep.subr.mxu0 0.0
    %1979 = vmatpush1.msra.mxu0 0.0
    %1980 = vmatprep.subr.mxu0 0.0
    %1981 = vmatpush1.msra.mxu0 0.0
    %1982 = vmatprep.subr.mxu0 0.0
    %1983 = vmatpush1.msra.mxu0 0.0
    %1984 = vmatprep.mubr.f32.mxu0 0.0
    %1985 = vmatmul.mubr.f32.gmra.mrb[0].mxu0 %v1843
    %v1986 = vpop.f32.mrb[0].mxu0
    %v1987 = vadd.f32 %v297, %v1986
    %v1988 = vpop.f32.mrb[0].mxu0
    %v1989 = vadd.f32 %v301, %v1988
    %1990 = vdwg.mxu0
    %s1991 = scalar_lea.vmem %s0, 24
    %v1992 = vld [vmem:[%s1991] sm:$0xff]
    %1993 = vmatprep.subr.mxu0 %v91
    %1994 = vmatpush1.msra.mxu0 %v90
    %1995 = vmatprep.subr.mxu0 %v95
    %1996 = vmatpush1.msra.mxu0 %v94
    %1997 = vmatprep.subr.mxu0 %v99
    %1998 = vmatpush1.msra.mxu0 %v98
    %1999 = vmatprep.subr.mxu0 %v103
    %2000 = vmatpush1.msra.mxu0 %v102
    %2001 = vmatprep.subr.mxu0 %v107
    %2002 = vmatpush1.msra.mxu0 %v106
    %2003 = vmatprep.subr.mxu0 %v111
    %2004 = vmatpush1.msra.mxu0 %v110
    %2005 = vmatprep.subr.mxu0 %v115
    %2006 = vmatpush1.msra.mxu0 %v114
    %2007 = vmatprep.subr.mxu0 %v119
    %2008 = vmatpush1.msra.mxu0 %v118
    %2009 = vmatprep.subr.mxu0 %v123
    %2010 = vmatpush1.msra.mxu0 %v122
    %2011 = vmatprep.subr.mxu0 %v127
    %2012 = vmatpush1.msra.mxu0 %v126
    %2013 = vmatprep.subr.mxu0 %v131
    %2014 = vmatpush1.msra.mxu0 %v130
    %2015 = vmatprep.subr.mxu0 %v135
    %2016 = vmatpush1.msra.mxu0 %v134
    %2017 = vmatprep.subr.mxu0 %v139
    %2018 = vmatpush1.msra.mxu0 %v138
    %2019 = vmatprep.subr.mxu0 %v143
    %2020 = vmatpush1.msra.mxu0 %v142
    %2021 = vmatprep.subr.mxu0 %v147
    %2022 = vmatpush1.msra.mxu0 %v146
    %2023 = vmatprep.subr.mxu0 %v151
    %2024 = vmatpush1.msra.mxu0 %v150
    %2025 = vmatprep.subr.mxu0 0.0
    %2026 = vmatpush1.msra.mxu0 0.0
    %2027 = vmatprep.subr.mxu0 0.0
    %2028 = vmatpush1.msra.mxu0 0.0
    %2029 = vmatprep.subr.mxu0 0.0
    %2030 = vmatpush1.msra.mxu0 0.0
    %2031 = vmatprep.subr.mxu0 0.0
    %2032 = vmatpush1.msra.mxu0 0.0
    %2033 = vmatprep.subr.mxu0 0.0
    %2034 = vmatpush1.msra.mxu0 0.0
    %2035 = vmatprep.subr.mxu0 0.0
    %2036 = vmatpush1.msra.mxu0 0.0
    %2037 = vmatprep.subr.mxu0 0.0
    %2038 = vmatpush1.msra.mxu0 0.0
    %2039 = vmatprep.subr.mxu0 0.0
    %2040 = vmatpush1.msra.mxu0 0.0
    %2041 = vmatprep.subr.mxu0 0.0
    %2042 = vmatpush1.msra.mxu0 0.0
    %2043 = vmatprep.subr.mxu0 0.0
    %2044 = vmatpush1.msra.mxu0 0.0
    %2045 = vmatprep.subr.mxu0 0.0
    %2046 = vmatpush1.msra.mxu0 0.0
    %2047 = vmatprep.subr.mxu0 0.0
    %2048 = vmatpush1.msra.mxu0 0.0
    %2049 = vmatprep.subr.mxu0 0.0
    %2050 = vmatpush1.msra.mxu0 0.0
    %2051 = vmatprep.subr.mxu0 0.0
    %2052 = vmatpush1.msra.mxu0 0.0
    %2053 = vmatprep.subr.mxu0 0.0
    %2054 = vmatpush1.msra.mxu0 0.0
    %2055 = vmatprep.subr.mxu0 0.0
    %2056 = vmatpush1.msra.mxu0 0.0
    %2057 = vmatprep.mubr.f32.mxu0 0.0
    %2058 = vmatmul.mubr.f32.gmra.mrb[0].mxu0 %v1677
    %v2059 = vpop.f32.mrb[0].mxu0
    %v2060 = vadd.f32 0.0, %v2059
    %v2061 = vpop.f32.mrb[0].mxu0
    %v2062 = vadd.f32 0.0, %v2061
    %2063 = vdwg.mxu0
    %2064 = vmatprep.subr.mxu0 %v93
    %2065 = vmatpush1.msra.mxu0 %v92
    %2066 = vmatprep.subr.mxu0 %v97
    %2067 = vmatpush1.msra.mxu0 %v96
    %2068 = vmatprep.subr.mxu0 %v101
    %2069 = vmatpush1.msra.mxu0 %v100
    %2070 = vmatprep.subr.mxu0 %v105
    %2071 = vmatpush1.msra.mxu0 %v104
    %2072 = vmatprep.subr.mxu0 %v109
    %2073 = vmatpush1.msra.mxu0 %v108
    %2074 = vmatprep.subr.mxu0 %v113
    %2075 = vmatpush1.msra.mxu0 %v112
    %2076 = vmatprep.subr.mxu0 %v117
    %2077 = vmatpush1.msra.mxu0 %v116
    %2078 = vmatprep.subr.mxu0 %v121
    %2079 = vmatpush1.msra.mxu0 %v120
    %2080 = vmatprep.subr.mxu0 %v125
    %2081 = vmatpush1.msra.mxu0 %v124
    %2082 = vmatprep.subr.mxu0 %v129
    %2083 = vmatpush1.msra.mxu0 %v128
    %2084 = vmatprep.subr.mxu0 %v133
    %2085 = vmatpush1.msra.mxu0 %v132
    %2086 = vmatprep.subr.mxu0 %v137
    %2087 = vmatpush1.msra.mxu0 %v136
    %2088 = vmatprep.subr.mxu0 %v141
    %2089 = vmatpush1.msra.mxu0 %v140
    %2090 = vmatprep.subr.mxu0 %v145
    %2091 = vmatpush1.msra.mxu0 %v144
    %2092 = vmatprep.subr.mxu0 %v149
    %2093 = vmatpush1.msra.mxu0 %v148
    %2094 = vmatprep.subr.mxu0 %v153
    %2095 = vmatpush1.msra.mxu0 %v152
    %2096 = vmatprep.subr.mxu0 0.0
    %2097 = vmatpush1.msra.mxu0 0.0
    %2098 = vmatprep.subr.mxu0 0.0
    %2099 = vmatpush1.msra.mxu0 0.0
    %2100 = vmatprep.subr.mxu0 0.0
    %2101 = vmatpush1.msra.mxu0 0.0
    %2102 = vmatprep.subr.mxu0 0.0
    %2103 = vmatpush1.msra.mxu0 0.0
    %2104 = vmatprep.subr.mxu0 0.0
    %2105 = vmatpush1.msra.mxu0 0.0
    %2106 = vmatprep.subr.mxu0 0.0
    %2107 = vmatpush1.msra.mxu0 0.0
    %2108 = vmatprep.subr.mxu0 0.0
    %2109 = vmatpush1.msra.mxu0 0.0
    %2110 = vmatprep.subr.mxu0 0.0
    %2111 = vmatpush1.msra.mxu0 0.0
    %2112 = vmatprep.subr.mxu0 0.0
    %2113 = vmatpush1.msra.mxu0 0.0
    %2114 = vmatprep.subr.mxu0 0.0
    %2115 = vmatpush1.msra.mxu0 0.0
    %2116 = vmatprep.subr.mxu0 0.0
    %2117 = vmatpush1.msra.mxu0 0.0
    %2118 = vmatprep.subr.mxu0 0.0
    %2119 = vmatpush1.msra.mxu0 0.0
    %2120 = vmatprep.subr.mxu0 0.0
    %2121 = vmatpush1.msra.mxu0 0.0
    %2122 = vmatprep.subr.mxu0 0.0
    %2123 = vmatpush1.msra.mxu0 0.0
    %2124 = vmatprep.subr.mxu0 0.0
    %2125 = vmatpush1.msra.mxu0 0.0
    %2126 = vmatprep.subr.mxu0 0.0
    %2127 = vmatpush1.msra.mxu0 0.0
    %2128 = vmatprep.mubr.f32.mxu0 0.0
    %2129 = vmatmul.mubr.f32.gmra.mrb[0].mxu0 %v1677
    %v2130 = vpop.f32.mrb[0].mxu0
    %v2131 = vadd.f32 0.0, %v2130
    %v2132 = vpop.f32.mrb[0].mxu0
    %v2133 = vadd.f32 0.0, %v2132
    %2134 = vdwg.mxu0
    %v2139 = vcombine.low %v2060, %v2062
    %v2140 = vcombine.low %v2131, %v2133
    %v2142 = vunpack.c.l.s4 1983009808
    %v2143 = vunpack.c.0.s8 %v2142
    %v2144 = vlaneseq
    %v2145 = vshrl.u32 %v2144, 7
    %v2146 = vsub.s32 %v2143, %v2145
    %v2147 = vrot.slane %v2139, %v2146
    %v2149 = vunpack.c.l.s4 1983009808
    %v2150 = vunpack.c.0.s8 %v2149
    %v2151 = vlaneseq
    %v2152 = vshrl.u32 %v2151, 7
    %v2153 = vsub.s32 %v2150, %v2152
    %v2154 = vrot.slane %v2140, %v2153
    %v2155 = vcombine.low %v2147, %v2154
    %v2157 = vadd.f32 %v1992, %v2155
    %v2158 = vxor.u32 %v2157, 2147483648
    %v2159 = vmul.f32 %v2158, 1.442695
    %v2160 = vpow.pop %v2159
    %v2161 = vadd.f32 %v2160, 1.0
    %v2162 = vrcp.pop %v2161
    %v2163 = vmul.f32 1.0, %v2162
    %v2165 = vrot.slane %v2157, 2
    %v2167 = vxor.u32 %v2165, 2147483648
    %v2168 = vmul.f32 %v2167, 1.442695
    %v2169 = vpow.pop %v2168
    %v2170 = vadd.f32 %v2169, 1.0
    %v2171 = vrcp.pop %v2170
    %v2172 = vmul.f32 1.0, %v2171
    %v2173 = vrot.slane %v2157, 4
    %v2175 = vtanh.pop %v2173
    %v2176 = vrot.slane %v2157, 6
    %v2178 = vxor.u32 %v2176, 2147483648
    %v2179 = vmul.f32 %v2178, 1.442695
    %v2180 = vpow.pop %v2179
    %v2181 = vadd.f32 %v2180, 1.0
    %v2182 = vrcp.pop %v2181
    %v2183 = vmul.f32 1.0, %v2182
    %v2184 = vmul.f32 %v2172, %v1675
    %v2185 = vmul.f32 %v2163, %v2175
    %v2186 = vadd.f32 %v2184, %v2185
    %v2187 = vtanh.pop %v2186
    %v2188 = vmul.f32 %v2183, %v2187
    %2189 = vmatprep.subr.mxu0 %v155
    %2190 = vmatpush1.msra.mxu0 %v154
    %2191 = vmatprep.subr.mxu0 %v159
    %2192 = vmatpush1.msra.mxu0 %v158
    %2193 = vmatprep.subr.mxu0 %v163
    %2194 = vmatpush1.msra.mxu0 %v162
    %2195 = vmatprep.subr.mxu0 %v167
    %2196 = vmatpush1.msra.mxu0 %v166
    %2197 = vmatprep.subr.mxu0 %v171
    %2198 = vmatpush1.msra.mxu0 %v170
    %2199 = vmatprep.subr.mxu0 %v175
    %2200 = vmatpush1.msra.mxu0 %v174
    %2201 = vmatprep.subr.mxu0 %v179
    %2202 = vmatpush1.msra.mxu0 %v178
    %2203 = vmatprep.subr.mxu0 %v183
    %2204 = vmatpush1.msra.mxu0 %v182
    %2205 = vmatprep.subr.mxu0 %v187
    %2206 = vmatpush1.msra.mxu0 %v186
    %2207 = vmatprep.subr.mxu0 %v191
    %2208 = vmatpush1.msra.mxu0 %v190
    %2209 = vmatprep.subr.mxu0 %v195
    %2210 = vmatpush1.msra.mxu0 %v194
    %2211 = vmatprep.subr.mxu0 %v199
    %2212 = vmatpush1.msra.mxu0 %v198
    %2213 = vmatprep.subr.mxu0 %v203
    %2214 = vmatpush1.msra.mxu0 %v202
    %2215 = vmatprep.subr.mxu0 %v207
    %2216 = vmatpush1.msra.mxu0 %v206
    %2217 = vmatprep.subr.mxu0 %v211
    %2218 = vmatpush1.msra.mxu0 %v210
    %2219 = vmatprep.subr.mxu0 %v215
    %2220 = vmatpush1.msra.mxu0 %v214
    %2221 = vmatprep.subr.mxu0 0.0
    %2222 = vmatpush1.msra.mxu0 0.0
    %2223 = vmatprep.subr.mxu0 0.0
    %2224 = vmatpush1.msra.mxu0 0.0
    %2225 = vmatprep.subr.mxu0 0.0
    %2226 = vmatpush1.msra.mxu0 0.0
    %2227 = vmatprep.subr.mxu0 0.0
    %2228 = vmatpush1.msra.mxu0 0.0
    %2229 = vmatprep.subr.mxu0 0.0
    %2230 = vmatpush1.msra.mxu0 0.0
    %2231 = vmatprep.subr.mxu0 0.0
    %2232 = vmatpush1.msra.mxu0 0.0
    %2233 = vmatprep.subr.mxu0 0.0
    %2234 = vmatpush1.msra.mxu0 0.0
    %2235 = vmatprep.subr.mxu0 0.0
    %2236 = vmatpush1.msra.mxu0 0.0
    %2237 = vmatprep.subr.mxu0 0.0
    %2238 = vmatpush1.msra.mxu0 0.0
    %2239 = vmatprep.subr.mxu0 0.0
    %2240 = vmatpush1.msra.mxu0 0.0
    %2241 = vmatprep.subr.mxu0 0.0
    %2242 = vmatpush1.msra.mxu0 0.0
    %2243 = vmatprep.subr.mxu0 0.0
    %2244 = vmatpush1.msra.mxu0 0.0
    %2245 = vmatprep.subr.mxu0 0.0
    %2246 = vmatpush1.msra.mxu0 0.0
    %2247 = vmatprep.subr.mxu0 0.0
    %2248 = vmatpush1.msra.mxu0 0.0
    %2249 = vmatprep.subr.mxu0 0.0
    %2250 = vmatpush1.msra.mxu0 0.0
    %2251 = vmatprep.subr.mxu0 0.0
    %2252 = vmatpush1.msra.mxu0 0.0
    %2253 = vmatprep.mubr.f32.mxu0 0.0
    %2254 = vmatmul.mubr.f32.gmra.mrb[0].mxu0 %v2188
    %v2255 = vpop.f32.mrb[0].mxu0
    %v2256 = vadd.f32 %v1916, %v2255
    %v2257 = vpop.f32.mrb[0].mxu0
    %v2258 = vadd.f32 %v1918, %v2257
    %2259 = vdwg.mxu0
    %2260 = vmatprep.subr.mxu0 %v157
    %2261 = vmatpush1.msra.mxu0 %v156
    %2262 = vmatprep.subr.mxu0 %v161
    %2263 = vmatpush1.msra.mxu0 %v160
    %2264 = vmatprep.subr.mxu0 %v165
    %2265 = vmatpush1.msra.mxu0 %v164
    %2266 = vmatprep.subr.mxu0 %v169
    %2267 = vmatpush1.msra.mxu0 %v168
    %2268 = vmatprep.subr.mxu0 %v173
    %2269 = vmatpush1.msra.mxu0 %v172
    %2270 = vmatprep.subr.mxu0 %v177
    %2271 = vmatpush1.msra.mxu0 %v176
    %2272 = vmatprep.subr.mxu0 %v181
    %2273 = vmatpush1.msra.mxu0 %v180
    %2274 = vmatprep.subr.mxu0 %v185
    %2275 = vmatpush1.msra.mxu0 %v184
    %2276 = vmatprep.subr.mxu0 %v189
    %2277 = vmatpush1.msra.mxu0 %v188
    %2278 = vmatprep.subr.mxu0 %v193
    %2279 = vmatpush1.msra.mxu0 %v192
    %2280 = vmatprep.subr.mxu0 %v197
    %2281 = vmatpush1.msra.mxu0 %v196
    %2282 = vmatprep.subr.mxu0 %v201
    %2283 = vmatpush1.msra.mxu0 %v200
    %2284 = vmatprep.subr.mxu0 %v205
    %2285 = vmatpush1.msra.mxu0 %v204
    %2286 = vmatprep.subr.mxu0 %v209
    %2287 = vmatpush1.msra.mxu0 %v208
    %2288 = vmatprep.subr.mxu0 %v213
    %2289 = vmatpush1.msra.mxu0 %v212
    %2290 = vmatprep.subr.mxu0 %v217
    %2291 = vmatpush1.msra.mxu0 %v216
    %2292 = vmatprep.subr.mxu0 0.0
    %2293 = vmatpush1.msra.mxu0 0.0
    %2294 = vmatprep.subr.mxu0 0.0
    %2295 = vmatpush1.msra.mxu0 0.0
    %2296 = vmatprep.subr.mxu0 0.0
    %2297 = vmatpush1.msra.mxu0 0.0
    %2298 = vmatprep.subr.mxu0 0.0
    %2299 = vmatpush1.msra.mxu0 0.0
    %2300 = vmatprep.subr.mxu0 0.0
    %2301 = vmatpush1.msra.mxu0 0.0
    %2302 = vmatprep.subr.mxu0 0.0
    %2303 = vmatpush1.msra.mxu0 0.0
    %2304 = vmatprep.subr.mxu0 0.0
    %2305 = vmatpush1.msra.mxu0 0.0
    %2306 = vmatprep.subr.mxu0 0.0
    %2307 = vmatpush1.msra.mxu0 0.0
    %2308 = vmatprep.subr.mxu0 0.0
    %2309 = vmatpush1.msra.mxu0 0.0
    %2310 = vmatprep.subr.mxu0 0.0
    %2311 = vmatpush1.msra.mxu0 0.0
    %2312 = vmatprep.subr.mxu0 0.0
    %2313 = vmatpush1.msra.mxu0 0.0
    %2314 = vmatprep.subr.mxu0 0.0
    %2315 = vmatpush1.msra.mxu0 0.0
    %2316 = vmatprep.subr.mxu0 0.0
    %2317 = vmatpush1.msra.mxu0 0.0
    %2318 = vmatprep.subr.mxu0 0.0
    %2319 = vmatpush1.msra.mxu0 0.0
    %2320 = vmatprep.subr.mxu0 0.0
    %2321 = vmatpush1.msra.mxu0 0.0
    %2322 = vmatprep.subr.mxu0 0.0
    %2323 = vmatpush1.msra.mxu0 0.0
    %2324 = vmatprep.mubr.f32.mxu0 0.0
    %2325 = vmatmul.mubr.f32.gmra.mrb[0].mxu0 %v2188
    %v2326 = vpop.f32.mrb[0].mxu0
    %v2327 = vadd.f32 %v1987, %v2326
    %v2328 = vpop.f32.mrb[0].mxu0
    %v2329 = vadd.f32 %v1989, %v2328
    %2330 = vdwg.mxu0
    %v2331 = vxor.u32 %v2256, 2147483648
    %v2332 = vmul.f32 %v2331, 1.442695
    %v2333 = vpow.pop %v2332
    %v2334 = vadd.f32 %v2333, 1.0
    %v2335 = vrcp.pop %v2334
    %v2336 = vmul.f32 1.0, %v2335
    %v2337 = vxor.u32 %v2258, 2147483648
    %v2338 = vmul.f32 %v2337, 1.442695
    %v2339 = vpow.pop %v2338
    %v2340 = vadd.f32 %v2339, 1.0
    %v2341 = vrcp.pop %v2340
    %v2342 = vmul.f32 1.0, %v2341
    %v2343 = vtanh.pop %v2327
    %v2344 = vxor.u32 %v2329, 2147483648
    %v2345 = vmul.f32 %v2344, 1.442695
    %v2346 = vpow.pop %v2345
    %v2347 = vadd.f32 %v2346, 1.0
    %v2348 = vrcp.pop %v2347
    %v2349 = vmul.f32 1.0, %v2348
    %v2350 = vmul.f32 %v2342, %v1841
    %v2351 = vmul.f32 %v2336, %v2343
    %v2352 = vadd.f32 %v2350, %v2351
    %v2353 = vtanh.pop %v2352
    %v2354 = vmul.f32 %v2349, %v2353
    %v2355 = vmul.f32 %v2354, %v813
    %v2356 = vsel %vm816, %v2355, 0.0
    %2357 = vadd.xlane.f32.xlu0 %v2356
    %v2358 = vpop.xlane.xlu0 %2357
    %v2359 = vadd.f32 %v2358, %v824
    %2360 = vmatprep.subr.mxu0 %v219
    %2361 = vmatpush1.msra.mxu0 %v218
    %2362 = vmatprep.subr.mxu0 %v223
    %2363 = vmatpush1.msra.mxu0 %v222
    %2364 = vmatprep.subr.mxu0 %v227
    %2365 = vmatpush1.msra.mxu0 %v226
    %2366 = vmatprep.subr.mxu0 %v231
    %2367 = vmatpush1.msra.mxu0 %v230
    %2368 = vmatprep.subr.mxu0 %v235
    %2369 = vmatpush1.msra.mxu0 %v234
    %2370 = vmatprep.subr.mxu0 %v239
    %2371 = vmatpush1.msra.mxu0 %v238
    %2372 = vmatprep.subr.mxu0 %v243
    %2373 = vmatpush1.msra.mxu0 %v242
    %2374 = vmatprep.subr.mxu0 %v247
    %2375 = vmatpush1.msra.mxu0 %v246
    %2376 = vmatprep.subr.mxu0 %v251
    %2377 = vmatpush1.msra.mxu0 %v250
    %2378 = vmatprep.subr.mxu0 %v255
    %2379 = vmatpush1.msra.mxu0 %v254
    %2380 = vmatprep.subr.mxu0 %v259
    %2381 = vmatpush1.msra.mxu0 %v258
    %2382 = vmatprep.subr.mxu0 %v263
    %2383 = vmatpush1.msra.mxu0 %v262
    %2384 = vmatprep.subr.mxu0 %v267
    %2385 = vmatpush1.msra.mxu0 %v266
    %2386 = vmatprep.subr.mxu0 %v271
    %2387 = vmatpush1.msra.mxu0 %v270
    %2388 = vmatprep.subr.mxu0 %v275
    %2389 = vmatpush1.msra.mxu0 %v274
    %2390 = vmatprep.subr.mxu0 %v279
    %2391 = vmatpush1.msra.mxu0 %v278
    %2392 = vmatprep.subr.mxu0 0.0
    %2393 = vmatpush1.msra.mxu0 0.0
    %2394 = vmatprep.subr.mxu0 0.0
    %2395 = vmatpush1.msra.mxu0 0.0
    %2396 = vmatprep.subr.mxu0 0.0
    %2397 = vmatpush1.msra.mxu0 0.0
    %2398 = vmatprep.subr.mxu0 0.0
    %2399 = vmatpush1.msra.mxu0 0.0
    %2400 = vmatprep.subr.mxu0 0.0
    %2401 = vmatpush1.msra.mxu0 0.0
    %2402 = vmatprep.subr.mxu0 0.0
    %2403 = vmatpush1.msra.mxu0 0.0
    %2404 = vmatprep.subr.mxu0 0.0
    %2405 = vmatpush1.msra.mxu0 0.0
    %2406 = vmatprep.subr.mxu0 0.0
    %2407 = vmatpush1.msra.mxu0 0.0
    %2408 = vmatprep.subr.mxu0 0.0
    %2409 = vmatpush1.msra.mxu0 0.0
    %2410 = vmatprep.subr.mxu0 0.0
    %2411 = vmatpush1.msra.mxu0 0.0
    %2412 = vmatprep.subr.mxu0 0.0
    %2413 = vmatpush1.msra.mxu0 0.0
    %2414 = vmatprep.subr.mxu0 0.0
    %2415 = vmatpush1.msra.mxu0 0.0
    %2416 = vmatprep.subr.mxu0 0.0
    %2417 = vmatpush1.msra.mxu0 0.0
    %2418 = vmatprep.subr.mxu0 0.0
    %2419 = vmatpush1.msra.mxu0 0.0
    %2420 = vmatprep.subr.mxu0 0.0
    %2421 = vmatpush1.msra.mxu0 0.0
    %2422 = vmatprep.subr.mxu0 0.0
    %2423 = vmatpush1.msra.mxu0 0.0
    %2424 = vmatprep.mubr.f32.mxu0 0.0
    %2425 = vmatmul.mubr.f32.gmra.mrb[0].mxu0 %v2354
    %v2426 = vpop.f32.mrb[0].mxu0
    %v2427 = vadd.f32 %v289, %v2426
    %v2428 = vpop.f32.mrb[0].mxu0
    %v2429 = vadd.f32 %v293, %v2428
    %2430 = vdwg.mxu0
    %2431 = vmatprep.subr.mxu0 %v221
    %2432 = vmatpush1.msra.mxu0 %v220
    %2433 = vmatprep.subr.mxu0 %v225
    %2434 = vmatpush1.msra.mxu0 %v224
    %2435 = vmatprep.subr.mxu0 %v229
    %2436 = vmatpush1.msra.mxu0 %v228
    %2437 = vmatprep.subr.mxu0 %v233
    %2438 = vmatpush1.msra.mxu0 %v232
    %2439 = vmatprep.subr.mxu0 %v237
    %2440 = vmatpush1.msra.mxu0 %v236
    %2441 = vmatprep.subr.mxu0 %v241
    %2442 = vmatpush1.msra.mxu0 %v240
    %2443 = vmatprep.subr.mxu0 %v245
    %2444 = vmatpush1.msra.mxu0 %v244
    %2445 = vmatprep.subr.mxu0 %v249
    %2446 = vmatpush1.msra.mxu0 %v248
    %2447 = vmatprep.subr.mxu0 %v253
    %2448 = vmatpush1.msra.mxu0 %v252
    %2449 = vmatprep.subr.mxu0 %v257
    %2450 = vmatpush1.msra.mxu0 %v256
    %2451 = vmatprep.subr.mxu0 %v261
    %2452 = vmatpush1.msra.mxu0 %v260
    %2453 = vmatprep.subr.mxu0 %v265
    %2454 = vmatpush1.msra.mxu0 %v264
    %2455 = vmatprep.subr.mxu0 %v269
    %2456 = vmatpush1.msra.mxu0 %v268
    %2457 = vmatprep.subr.mxu0 %v273
    %2458 = vmatpush1.msra.mxu0 %v272
    %2459 = vmatprep.subr.mxu0 %v277
    %2460 = vmatpush1.msra.mxu0 %v276
    %2461 = vmatprep.subr.mxu0 %v281
    %2462 = vmatpush1.msra.mxu0 %v280
    %2463 = vmatprep.subr.mxu0 0.0
    %2464 = vmatpush1.msra.mxu0 0.0
    %2465 = vmatprep.subr.mxu0 0.0
    %2466 = vmatpush1.msra.mxu0 0.0
    %2467 = vmatprep.subr.mxu0 0.0
    %2468 = vmatpush1.msra.mxu0 0.0
    %2469 = vmatprep.subr.mxu0 0.0
    %2470 = vmatpush1.msra.mxu0 0.0
    %2471 = vmatprep.subr.mxu0 0.0
    %2472 = vmatpush1.msra.mxu0 0.0
    %2473 = vmatprep.subr.mxu0 0.0
    %2474 = vmatpush1.msra.mxu0 0.0
    %2475 = vmatprep.subr.mxu0 0.0
    %2476 = vmatpush1.msra.mxu0 0.0
    %2477 = vmatprep.subr.mxu0 0.0
    %2478 = vmatpush1.msra.mxu0 0.0
    %2479 = vmatprep.subr.mxu0 0.0
    %2480 = vmatpush1.msra.mxu0 0.0
    %2481 = vmatprep.subr.mxu0 0.0
    %2482 = vmatpush1.msra.mxu0 0.0
    %2483 = vmatprep.subr.mxu0 0.0
    %2484 = vmatpush1.msra.mxu0 0.0
    %2485 = vmatprep.subr.mxu0 0.0
    %2486 = vmatpush1.msra.mxu0 0.0
    %2487 = vmatprep.subr.mxu0 0.0
    %2488 = vmatpush1.msra.mxu0 0.0
    %2489 = vmatprep.subr.mxu0 0.0
    %2490 = vmatpush1.msra.mxu0 0.0
    %2491 = vmatprep.subr.mxu0 0.0
    %2492 = vmatpush1.msra.mxu0 0.0
    %2493 = vmatprep.subr.mxu0 0.0
    %2494 = vmatpush1.msra.mxu0 0.0
    %2495 = vmatprep.mubr.f32.mxu0 0.0
    %2496 = vmatmul.mubr.f32.gmra.mrb[0].mxu0 %v2354
    %v2497 = vpop.f32.mrb[0].mxu0
    %v2498 = vadd.f32 %v297, %v2497
    %v2499 = vpop.f32.mrb[0].mxu0
    %v2500 = vadd.f32 %v301, %v2499
    %2501 = vdwg.mxu0
    %s2502 = scalar_lea.vmem %s0, 32
    %v2503 = vld [vmem:[%s2502] sm:$0xff]
    %2504 = vmatprep.subr.mxu0 %v91
    %2505 = vmatpush1.msra.mxu0 %v90
    %2506 = vmatprep.subr.mxu0 %v95
    %2507 = vmatpush1.msra.mxu0 %v94
    %2508 = vmatprep.subr.mxu0 %v99
    %2509 = vmatpush1.msra.mxu0 %v98
    %2510 = vmatprep.subr.mxu0 %v103
    %2511 = vmatpush1.msra.mxu0 %v102
    %2512 = vmatprep.subr.mxu0 %v107
    %2513 = vmatpush1.msra.mxu0 %v106
    %2514 = vmatprep.subr.mxu0 %v111
    %2515 = vmatpush1.msra.mxu0 %v110
    %2516 = vmatprep.subr.mxu0 %v115
    %2517 = vmatpush1.msra.mxu0 %v114
    %2518 = vmatprep.subr.mxu0 %v119
    %2519 = vmatpush1.msra.mxu0 %v118
    %2520 = vmatprep.subr.mxu0 %v123
    %2521 = vmatpush1.msra.mxu0 %v122
    %2522 = vmatprep.subr.mxu0 %v127
    %2523 = vmatpush1.msra.mxu0 %v126
    %2524 = vmatprep.subr.mxu0 %v131
    %2525 = vmatpush1.msra.mxu0 %v130
    %2526 = vmatprep.subr.mxu0 %v135
    %2527 = vmatpush1.msra.mxu0 %v134
    %2528 = vmatprep.subr.mxu0 %v139
    %2529 = vmatpush1.msra.mxu0 %v138
    %2530 = vmatprep.subr.mxu0 %v143
    %2531 = vmatpush1.msra.mxu0 %v142
    %2532 = vmatprep.subr.mxu0 %v147
    %2533 = vmatpush1.msra.mxu0 %v146
    %2534 = vmatprep.subr.mxu0 %v151
    %2535 = vmatpush1.msra.mxu0 %v150
    %2536 = vmatprep.subr.mxu0 0.0
    %2537 = vmatpush1.msra.mxu0 0.0
    %2538 = vmatprep.subr.mxu0 0.0
    %2539 = vmatpush1.msra.mxu0 0.0
    %2540 = vmatprep.subr.mxu0 0.0
    %2541 = vmatpush1.msra.mxu0 0.0
    %2542 = vmatprep.subr.mxu0 0.0
    %2543 = vmatpush1.msra.mxu0 0.0
    %2544 = vmatprep.subr.mxu0 0.0
    %2545 = vmatpush1.msra.mxu0 0.0
    %2546 = vmatprep.subr.mxu0 0.0
    %2547 = vmatpush1.msra.mxu0 0.0
    %2548 = vmatprep.subr.mxu0 0.0
    %2549 = vmatpush1.msra.mxu0 0.0
    %2550 = vmatprep.subr.mxu0 0.0
    %2551 = vmatpush1.msra.mxu0 0.0
    %2552 = vmatprep.subr.mxu0 0.0
    %2553 = vmatpush1.msra.mxu0 0.0
    %2554 = vmatprep.subr.mxu0 0.0
    %2555 = vmatpush1.msra.mxu0 0.0
    %2556 = vmatprep.subr.mxu0 0.0
    %2557 = vmatpush1.msra.mxu0 0.0
    %2558 = vmatprep.subr.mxu0 0.0
    %2559 = vmatpush1.msra.mxu0 0.0
    %2560 = vmatprep.subr.mxu0 0.0
    %2561 = vmatpush1.msra.mxu0 0.0
    %2562 = vmatprep.subr.mxu0 0.0
    %2563 = vmatpush1.msra.mxu0 0.0
    %2564 = vmatprep.subr.mxu0 0.0
    %2565 = vmatpush1.msra.mxu0 0.0
    %2566 = vmatprep.subr.mxu0 0.0
    %2567 = vmatpush1.msra.mxu0 0.0
    %2568 = vmatprep.mubr.f32.mxu0 0.0
    %2569 = vmatmul.mubr.f32.gmra.mrb[0].mxu0 %v2188
    %v2570 = vpop.f32.mrb[0].mxu0
    %v2571 = vadd.f32 0.0, %v2570
    %v2572 = vpop.f32.mrb[0].mxu0
    %v2573 = vadd.f32 0.0, %v2572
    %2574 = vdwg.mxu0
    %2575 = vmatprep.subr.mxu0 %v93
    %2576 = vmatpush1.msra.mxu0 %v92
    %2577 = vmatprep.subr.mxu0 %v97
    %2578 = vmatpush1.msra.mxu0 %v96
    %2579 = vmatprep.subr.mxu0 %v101
    %2580 = vmatpush1.msra.mxu0 %v100
    %2581 = vmatprep.subr.mxu0 %v105
    %2582 = vmatpush1.msra.mxu0 %v104
    %2583 = vmatprep.subr.mxu0 %v109
    %2584 = vmatpush1.msra.mxu0 %v108
    %2585 = vmatprep.subr.mxu0 %v113
    %2586 = vmatpush1.msra.mxu0 %v112
    %2587 = vmatprep.subr.mxu0 %v117
    %2588 = vmatpush1.msra.mxu0 %v116
    %2589 = vmatprep.subr.mxu0 %v121
    %2590 = vmatpush1.msra.mxu0 %v120
    %2591 = vmatprep.subr.mxu0 %v125
    %2592 = vmatpush1.msra.mxu0 %v124
    %2593 = vmatprep.subr.mxu0 %v129
    %2594 = vmatpush1.msra.mxu0 %v128
    %2595 = vmatprep.subr.mxu0 %v133
    %2596 = vmatpush1.msra.mxu0 %v132
    %2597 = vmatprep.subr.mxu0 %v137
    %2598 = vmatpush1.msra.mxu0 %v136
    %2599 = vmatprep.subr.mxu0 %v141
    %2600 = vmatpush1.msra.mxu0 %v140
    %2601 = vmatprep.subr.mxu0 %v145
    %2602 = vmatpush1.msra.mxu0 %v144
    %2603 = vmatprep.subr.mxu0 %v149
    %2604 = vmatpush1.msra.mxu0 %v148
    %2605 = vmatprep.subr.mxu0 %v153
    %2606 = vmatpush1.msra.mxu0 %v152
    %2607 = vmatprep.subr.mxu0 0.0
    %2608 = vmatpush1.msra.mxu0 0.0
    %2609 = vmatprep.subr.mxu0 0.0
    %2610 = vmatpush1.msra.mxu0 0.0
    %2611 = vmatprep.subr.mxu0 0.0
    %2612 = vmatpush1.msra.mxu0 0.0
    %2613 = vmatprep.subr.mxu0 0.0
    %2614 = vmatpush1.msra.mxu0 0.0
    %2615 = vmatprep.subr.mxu0 0.0
    %2616 = vmatpush1.msra.mxu0 0.0
    %2617 = vmatprep.subr.mxu0 0.0
    %2618 = vmatpush1.msra.mxu0 0.0
    %2619 = vmatprep.subr.mxu0 0.0
    %2620 = vmatpush1.msra.mxu0 0.0
    %2621 = vmatprep.subr.mxu0 0.0
    %2622 = vmatpush1.msra.mxu0 0.0
    %2623 = vmatprep.subr.mxu0 0.0
    %2624 = vmatpush1.msra.mxu0 0.0
    %2625 = vmatprep.subr.mxu0 0.0
    %2626 = vmatpush1.msra.mxu0 0.0
    %2627 = vmatprep.subr.mxu0 0.0
    %2628 = vmatpush1.msra.mxu0 0.0
    %2629 = vmatprep.subr.mxu0 0.0
    %2630 = vmatpush1.msra.mxu0 0.0
    %2631 = vmatprep.subr.mxu0 0.0
    %2632 = vmatpush1.msra.mxu0 0.0
    %2633 = vmatprep.subr.mxu0 0.0
    %2634 = vmatpush1.msra.mxu0 0.0
    %2635 = vmatprep.subr.mxu0 0.0
    %2636 = vmatpush1.msra.mxu0 0.0
    %2637 = vmatprep.subr.mxu0 0.0
    %2638 = vmatpush1.msra.mxu0 0.0
    %2639 = vmatprep.mubr.f32.mxu0 0.0
    %2640 = vmatmul.mubr.f32.gmra.mrb[0].mxu0 %v2188
    %v2641 = vpop.f32.mrb[0].mxu0
    %v2642 = vadd.f32 0.0, %v2641
    %v2643 = vpop.f32.mrb[0].mxu0
    %v2644 = vadd.f32 0.0, %v2643
    %2645 = vdwg.mxu0
    %v2650 = vcombine.low %v2571, %v2573
    %v2651 = vcombine.low %v2642, %v2644
    %v2653 = vunpack.c.l.s4 1983009808
    %v2654 = vunpack.c.0.s8 %v2653
    %v2655 = vlaneseq
    %v2656 = vshrl.u32 %v2655, 7
    %v2657 = vsub.s32 %v2654, %v2656
    %v2658 = vrot.slane %v2650, %v2657
    %v2660 = vunpack.c.l.s4 1983009808
    %v2661 = vunpack.c.0.s8 %v2660
    %v2662 = vlaneseq
    %v2663 = vshrl.u32 %v2662, 7
    %v2664 = vsub.s32 %v2661, %v2663
    %v2665 = vrot.slane %v2651, %v2664
    %v2666 = vcombine.low %v2658, %v2665
    %v2668 = vadd.f32 %v2503, %v2666
    %v2669 = vxor.u32 %v2668, 2147483648
    %v2670 = vmul.f32 %v2669, 1.442695
    %v2671 = vpow.pop %v2670
    %v2672 = vadd.f32 %v2671, 1.0
    %v2673 = vrcp.pop %v2672
    %v2674 = vmul.f32 1.0, %v2673
    %v2676 = vrot.slane %v2668, 2
    %v2678 = vxor.u32 %v2676, 2147483648
    %v2679 = vmul.f32 %v2678, 1.442695
    %v2680 = vpow.pop %v2679
    %v2681 = vadd.f32 %v2680, 1.0
    %v2682 = vrcp.pop %v2681
    %v2683 = vmul.f32 1.0, %v2682
    %v2684 = vrot.slane %v2668, 4
    %v2686 = vtanh.pop %v2684
    %v2687 = vrot.slane %v2668, 6
    %v2689 = vxor.u32 %v2687, 2147483648
    %v2690 = vmul.f32 %v2689, 1.442695
    %v2691 = vpow.pop %v2690
    %v2692 = vadd.f32 %v2691, 1.0
    %v2693 = vrcp.pop %v2692
    %v2694 = vmul.f32 1.0, %v2693
    %v2695 = vmul.f32 %v2683, %v2186
    %v2696 = vmul.f32 %v2674, %v2686
    %v2697 = vadd.f32 %v2695, %v2696
    %v2698 = vtanh.pop %v2697
    %v2699 = vmul.f32 %v2694, %v2698
    %2700 = vmatprep.subr.mxu0 %v155
    %2701 = vmatpush1.msra.mxu0 %v154
    %2702 = vmatprep.subr.mxu0 %v159
    %2703 = vmatpush1.msra.mxu0 %v158
    %2704 = vmatprep.subr.mxu0 %v163
    %2705 = vmatpush1.msra.mxu0 %v162
    %2706 = vmatprep.subr.mxu0 %v167
    %2707 = vmatpush1.msra.mxu0 %v166
    %2708 = vmatprep.subr.mxu0 %v171
    %2709 = vmatpush1.msra.mxu0 %v170
    %2710 = vmatprep.subr.mxu0 %v175
    %2711 = vmatpush1.msra.mxu0 %v174
    %2712 = vmatprep.subr.mxu0 %v179
    %2713 = vmatpush1.msra.mxu0 %v178
    %2714 = vmatprep.subr.mxu0 %v183
    %2715 = vmatpush1.msra.mxu0 %v182
    %2716 = vmatprep.subr.mxu0 %v187
    %2717 = vmatpush1.msra.mxu0 %v186
    %2718 = vmatprep.subr.mxu0 %v191
    %2719 = vmatpush1.msra.mxu0 %v190
    %2720 = vmatprep.subr.mxu0 %v195
    %2721 = vmatpush1.msra.mxu0 %v194
    %2722 = vmatprep.subr.mxu0 %v199
    %2723 = vmatpush1.msra.mxu0 %v198
    %2724 = vmatprep.subr.mxu0 %v203
    %2725 = vmatpush1.msra.mxu0 %v202
    %2726 = vmatprep.subr.mxu0 %v207
    %2727 = vmatpush1.msra.mxu0 %v206
    %2728 = vmatprep.subr.mxu0 %v211
    %2729 = vmatpush1.msra.mxu0 %v210
    %2730 = vmatprep.subr.mxu0 %v215
    %2731 = vmatpush1.msra.mxu0 %v214
    %2732 = vmatprep.subr.mxu0 0.0
    %2733 = vmatpush1.msra.mxu0 0.0
    %2734 = vmatprep.subr.mxu0 0.0
    %2735 = vmatpush1.msra.mxu0 0.0
    %2736 = vmatprep.subr.mxu0 0.0
    %2737 = vmatpush1.msra.mxu0 0.0
    %2738 = vmatprep.subr.mxu0 0.0
    %2739 = vmatpush1.msra.mxu0 0.0
    %2740 = vmatprep.subr.mxu0 0.0
    %2741 = vmatpush1.msra.mxu0 0.0
    %2742 = vmatprep.subr.mxu0 0.0
    %2743 = vmatpush1.msra.mxu0 0.0
    %2744 = vmatprep.subr.mxu0 0.0
    %2745 = vmatpush1.msra.mxu0 0.0
    %2746 = vmatprep.subr.mxu0 0.0
    %2747 = vmatpush1.msra.mxu0 0.0
    %2748 = vmatprep.subr.mxu0 0.0
    %2749 = vmatpush1.msra.mxu0 0.0
    %2750 = vmatprep.subr.mxu0 0.0
    %2751 = vmatpush1.msra.mxu0 0.0
    %2752 = vmatprep.subr.mxu0 0.0
    %2753 = vmatpush1.msra.mxu0 0.0
    %2754 = vmatprep.subr.mxu0 0.0
    %2755 = vmatpush1.msra.mxu0 0.0
    %2756 = vmatprep.subr.mxu0 0.0
    %2757 = vmatpush1.msra.mxu0 0.0
    %2758 = vmatprep.subr.mxu0 0.0
    %2759 = vmatpush1.msra.mxu0 0.0
    %2760 = vmatprep.subr.mxu0 0.0
    %2761 = vmatpush1.msra.mxu0 0.0
    %2762 = vmatprep.subr.mxu0 0.0
    %2763 = vmatpush1.msra.mxu0 0.0
    %2764 = vmatprep.mubr.f32.mxu0 0.0
    %2765 = vmatmul.mubr.f32.gmra.mrb[0].mxu0 %v2699
    %v2766 = vpop.f32.mrb[0].mxu0
    %v2767 = vadd.f32 %v2427, %v2766
    %v2768 = vpop.f32.mrb[0].mxu0
    %v2769 = vadd.f32 %v2429, %v2768
    %2770 = vdwg.mxu0
    %2771 = vmatprep.subr.mxu0 %v157
    %2772 = vmatpush1.msra.mxu0 %v156
    %2773 = vmatprep.subr.mxu0 %v161
    %2774 = vmatpush1.msra.mxu0 %v160
    %2775 = vmatprep.subr.mxu0 %v165
    %2776 = vmatpush1.msra.mxu0 %v164
    %2777 = vmatprep.subr.mxu0 %v169
    %2778 = vmatpush1.msra.mxu0 %v168
    %2779 = vmatprep.subr.mxu0 %v173
    %2780 = vmatpush1.msra.mxu0 %v172
    %2781 = vmatprep.subr.mxu0 %v177
    %2782 = vmatpush1.msra.mxu0 %v176
    %2783 = vmatprep.subr.mxu0 %v181
    %2784 = vmatpush1.msra.mxu0 %v180
    %2785 = vmatprep.subr.mxu0 %v185
    %2786 = vmatpush1.msra.mxu0 %v184
    %2787 = vmatprep.subr.mxu0 %v189
    %2788 = vmatpush1.msra.mxu0 %v188
    %2789 = vmatprep.subr.mxu0 %v193
    %2790 = vmatpush1.msra.mxu0 %v192
    %2791 = vmatprep.subr.mxu0 %v197
    %2792 = vmatpush1.msra.mxu0 %v196
    %2793 = vmatprep.subr.mxu0 %v201
    %2794 = vmatpush1.msra.mxu0 %v200
    %2795 = vmatprep.subr.mxu0 %v205
    %2796 = vmatpush1.msra.mxu0 %v204
    %2797 = vmatprep.subr.mxu0 %v209
    %2798 = vmatpush1.msra.mxu0 %v208
    %2799 = vmatprep.subr.mxu0 %v213
    %2800 = vmatpush1.msra.mxu0 %v212
    %2801 = vmatprep.subr.mxu0 %v217
    %2802 = vmatpush1.msra.mxu0 %v216
    %2803 = vmatprep.subr.mxu0 0.0
    %2804 = vmatpush1.msra.mxu0 0.0
    %2805 = vmatprep.subr.mxu0 0.0
    %2806 = vmatpush1.msra.mxu0 0.0
    %2807 = vmatprep.subr.mxu0 0.0
    %2808 = vmatpush1.msra.mxu0 0.0
    %2809 = vmatprep.subr.mxu0 0.0
    %2810 = vmatpush1.msra.mxu0 0.0
    %2811 = vmatprep.subr.mxu0 0.0
    %2812 = vmatpush1.msra.mxu0 0.0
    %2813 = vmatprep.subr.mxu0 0.0
    %2814 = vmatpush1.msra.mxu0 0.0
    %2815 = vmatprep.subr.mxu0 0.0
    %2816 = vmatpush1.msra.mxu0 0.0
    %2817 = vmatprep.subr.mxu0 0.0
    %2818 = vmatpush1.msra.mxu0 0.0
    %2819 = vmatprep.subr.mxu0 0.0
    %2820 = vmatpush1.msra.mxu0 0.0
    %2821 = vmatprep.subr.mxu0 0.0
    %2822 = vmatpush1.msra.mxu0 0.0
    %2823 = vmatprep.subr.mxu0 0.0
    %2824 = vmatpush1.msra.mxu0 0.0
    %2825 = vmatprep.subr.mxu0 0.0
    %2826 = vmatpush1.msra.mxu0 0.0
    %2827 = vmatprep.subr.mxu0 0.0
    %2828 = vmatpush1.msra.mxu0 0.0
    %2829 = vmatprep.subr.mxu0 0.0
    %2830 = vmatpush1.msra.mxu0 0.0
    %2831 = vmatprep.subr.mxu0 0.0
    %2832 = vmatpush1.msra.mxu0 0.0
    %2833 = vmatprep.subr.mxu0 0.0
    %2834 = vmatpush1.msra.mxu0 0.0
    %2835 = vmatprep.mubr.f32.mxu0 0.0
    %2836 = vmatmul.mubr.f32.gmra.mrb[0].mxu0 %v2699
    %v2837 = vpop.f32.mrb[0].mxu0
    %v2838 = vadd.f32 %v2498, %v2837
    %v2839 = vpop.f32.mrb[0].mxu0
    %v2840 = vadd.f32 %v2500, %v2839
    %2841 = vdwg.mxu0
    %v2842 = vxor.u32 %v2767, 2147483648
    %v2843 = vmul.f32 %v2842, 1.442695
    %v2844 = vpow.pop %v2843
    %v2845 = vadd.f32 %v2844, 1.0
    %v2846 = vrcp.pop %v2845
    %v2847 = vmul.f32 1.0, %v2846
    %v2848 = vxor.u32 %v2769, 2147483648
    %v2849 = vmul.f32 %v2848, 1.442695
    %v2850 = vpow.pop %v2849
    %v2851 = vadd.f32 %v2850, 1.0
    %v2852 = vrcp.pop %v2851
    %v2853 = vmul.f32 1.0, %v2852
    %v2854 = vtanh.pop %v2838
    %v2855 = vxor.u32 %v2840, 2147483648
    %v2856 = vmul.f32 %v2855, 1.442695
    %v2857 = vpow.pop %v2856
    %v2858 = vadd.f32 %v2857, 1.0
    %v2859 = vrcp.pop %v2858
    %v2860 = vmul.f32 1.0, %v2859
    %v2861 = vmul.f32 %v2853, %v2352
    %v2862 = vmul.f32 %v2847, %v2854
    %v2863 = vadd.f32 %v2861, %v2862
    %v2864 = vtanh.pop %v2863
    %v2865 = vmul.f32 %v2860, %v2864
    %v2866 = vmul.f32 %v2865, %v813
    %v2867 = vsel %vm816, %v2866, 0.0
    %2868 = vadd.xlane.f32.xlu0 %v2867
    %v2869 = vpop.xlane.xlu0 %2868
    %v2870 = vadd.f32 %v2869, %v824
    %2871 = vmatprep.subr.mxu0 %v219
    %2872 = vmatpush1.msra.mxu0 %v218
    %2873 = vmatprep.subr.mxu0 %v223
    %2874 = vmatpush1.msra.mxu0 %v222
    %2875 = vmatprep.subr.mxu0 %v227
    %2876 = vmatpush1.msra.mxu0 %v226
    %2877 = vmatprep.subr.mxu0 %v231
    %2878 = vmatpush1.msra.mxu0 %v230
    %2879 = vmatprep.subr.mxu0 %v235
    %2880 = vmatpush1.msra.mxu0 %v234
    %2881 = vmatprep.subr.mxu0 %v239
    %2882 = vmatpush1.msra.mxu0 %v238
    %2883 = vmatprep.subr.mxu0 %v243
    %2884 = vmatpush1.msra.mxu0 %v242
    %2885 = vmatprep.subr.mxu0 %v247
    %2886 = vmatpush1.msra.mxu0 %v246
    %2887 = vmatprep.subr.mxu0 %v251
    %2888 = vmatpush1.msra.mxu0 %v250
    %2889 = vmatprep.subr.mxu0 %v255
    %2890 = vmatpush1.msra.mxu0 %v254
    %2891 = vmatprep.subr.mxu0 %v259
    %2892 = vmatpush1.msra.mxu0 %v258
    %2893 = vmatprep.subr.mxu0 %v263
    %2894 = vmatpush1.msra.mxu0 %v262
    %2895 = vmatprep.subr.mxu0 %v267
    %2896 = vmatpush1.msra.mxu0 %v266
    %2897 = vmatprep.subr.mxu0 %v271
    %2898 = vmatpush1.msra.mxu0 %v270
    %2899 = vmatprep.subr.mxu0 %v275
    %2900 = vmatpush1.msra.mxu0 %v274
    %2901 = vmatprep.subr.mxu0 %v279
    %2902 = vmatpush1.msra.mxu0 %v278
    %2903 = vmatprep.subr.mxu0 0.0
    %2904 = vmatpush1.msra.mxu0 0.0
    %2905 = vmatprep.subr.mxu0 0.0
    %2906 = vmatpush1.msra.mxu0 0.0
    %2907 = vmatprep.subr.mxu0 0.0
    %2908 = vmatpush1.msra.mxu0 0.0
    %2909 = vmatprep.subr.mxu0 0.0
    %2910 = vmatpush1.msra.mxu0 0.0
    %2911 = vmatprep.subr.mxu0 0.0
    %2912 = vmatpush1.msra.mxu0 0.0
    %2913 = vmatprep.subr.mxu0 0.0
    %2914 = vmatpush1.msra.mxu0 0.0
    %2915 = vmatprep.subr.mxu0 0.0
    %2916 = vmatpush1.msra.mxu0 0.0
    %2917 = vmatprep.subr.mxu0 0.0
    %2918 = vmatpush1.msra.mxu0 0.0
    %2919 = vmatprep.subr.mxu0 0.0
    %2920 = vmatpush1.msra.mxu0 0.0
    %2921 = vmatprep.subr.mxu0 0.0
    %2922 = vmatpush1.msra.mxu0 0.0
    %2923 = vmatprep.subr.mxu0 0.0
    %2924 = vmatpush1.msra.mxu0 0.0
    %2925 = vmatprep.subr.mxu0 0.0
    %2926 = vmatpush1.msra.mxu0 0.0
    %2927 = vmatprep.subr.mxu0 0.0
    %2928 = vmatpush1.msra.mxu0 0.0
    %2929 = vmatprep.subr.mxu0 0.0
    %2930 = vmatpush1.msra.mxu0 0.0
    %2931 = vmatprep.subr.mxu0 0.0
    %2932 = vmatpush1.msra.mxu0 0.0
    %2933 = vmatprep.subr.mxu0 0.0
    %2934 = vmatpush1.msra.mxu0 0.0
    %2935 = vmatprep.mubr.f32.mxu0 0.0
    %2936 = vmatmul.mubr.f32.gmra.mrb[0].mxu0 %v2865
    %v2937 = vpop.f32.mrb[0].mxu0
    %v2938 = vadd.f32 %v289, %v2937
    %v2939 = vpop.f32.mrb[0].mxu0
    %v2940 = vadd.f32 %v293, %v2939
    %2941 = vdwg.mxu0
    %2942 = vmatprep.subr.mxu0 %v221
    %2943 = vmatpush1.msra.mxu0 %v220
    %2944 = vmatprep.subr.mxu0 %v225
    %2945 = vmatpush1.msra.mxu0 %v224
    %2946 = vmatprep.subr.mxu0 %v229
    %2947 = vmatpush1.msra.mxu0 %v228
    %2948 = vmatprep.subr.mxu0 %v233
    %2949 = vmatpush1.msra.mxu0 %v232
    %2950 = vmatprep.subr.mxu0 %v237
    %2951 = vmatpush1.msra.mxu0 %v236
    %2952 = vmatprep.subr.mxu0 %v241
    %2953 = vmatpush1.msra.mxu0 %v240
    %2954 = vmatprep.subr.mxu0 %v245
    %2955 = vmatpush1.msra.mxu0 %v244
    %2956 = vmatprep.subr.mxu0 %v249
    %2957 = vmatpush1.msra.mxu0 %v248
    %2958 = vmatprep.subr.mxu0 %v253
    %2959 = vmatpush1.msra.mxu0 %v252
    %2960 = vmatprep.subr.mxu0 %v257
    %2961 = vmatpush1.msra.mxu0 %v256
    %2962 = vmatprep.subr.mxu0 %v261
    %2963 = vmatpush1.msra.mxu0 %v260
    %2964 = vmatprep.subr.mxu0 %v265
    %2965 = vmatpush1.msra.mxu0 %v264
    %2966 = vmatprep.subr.mxu0 %v269
    %2967 = vmatpush1.msra.mxu0 %v268
    %2968 = vmatprep.subr.mxu0 %v273
    %2969 = vmatpush1.msra.mxu0 %v272
    %2970 = vmatprep.subr.mxu0 %v277
    %2971 = vmatpush1.msra.mxu0 %v276
    %2972 = vmatprep.subr.mxu0 %v281
    %2973 = vmatpush1.msra.mxu0 %v280
    %2974 = vmatprep.subr.mxu0 0.0
    %2975 = vmatpush1.msra.mxu0 0.0
    %2976 = vmatprep.subr.mxu0 0.0
    %2977 = vmatpush1.msra.mxu0 0.0
    %2978 = vmatprep.subr.mxu0 0.0
    %2979 = vmatpush1.msra.mxu0 0.0
    %2980 = vmatprep.subr.mxu0 0.0
    %2981 = vmatpush1.msra.mxu0 0.0
    %2982 = vmatprep.subr.mxu0 0.0
    %2983 = vmatpush1.msra.mxu0 0.0
    %2984 = vmatprep.subr.mxu0 0.0
    %2985 = vmatpush1.msra.mxu0 0.0
    %2986 = vmatprep.subr.mxu0 0.0
    %2987 = vmatpush1.msra.mxu0 0.0
    %2988 = vmatprep.subr.mxu0 0.0
    %2989 = vmatpush1.msra.mxu0 0.0
    %2990 = vmatprep.subr.mxu0 0.0
    %2991 = vmatpush1.msra.mxu0 0.0
    %2992 = vmatprep.subr.mxu0 0.0
    %2993 = vmatpush1.msra.mxu0 0.0
    %2994 = vmatprep.subr.mxu0 0.0
    %2995 = vmatpush1.msra.mxu0 0.0
    %2996 = vmatprep.subr.mxu0 0.0
    %2997 = vmatpush1.msra.mxu0 0.0
    %2998 = vmatprep.subr.mxu0 0.0
    %2999 = vmatpush1.msra.mxu0 0.0
    %3000 = vmatprep.subr.mxu0 0.0
    %3001 = vmatpush1.msra.mxu0 0.0
    %3002 = vmatprep.subr.mxu0 0.0
    %3003 = vmatpush1.msra.mxu0 0.0
    %3004 = vmatprep.subr.mxu0 0.0
    %3005 = vmatpush1.msra.mxu0 0.0
    %3006 = vmatprep.mubr.f32.mxu0 0.0
    %3007 = vmatmul.mubr.f32.gmra.mrb[0].mxu0 %v2865
    %v3008 = vpop.f32.mrb[0].mxu0
    %v3009 = vadd.f32 %v297, %v3008
    %v3010 = vpop.f32.mrb[0].mxu0
    %v3011 = vadd.f32 %v301, %v3010
    %3012 = vdwg.mxu0
    %s3013 = scalar_lea.vmem %s0, 40
    %v3014 = vld [vmem:[%s3013] sm:$0xff]
    %3015 = vmatprep.subr.mxu0 %v91
    %3016 = vmatpush1.msra.mxu0 %v90
    %3017 = vmatprep.subr.mxu0 %v95
    %3018 = vmatpush1.msra.mxu0 %v94
    %3019 = vmatprep.subr.mxu0 %v99
    %3020 = vmatpush1.msra.mxu0 %v98
    %3021 = vmatprep.subr.mxu0 %v103
    %3022 = vmatpush1.msra.mxu0 %v102
    %3023 = vmatprep.subr.mxu0 %v107
    %3024 = vmatpush1.msra.mxu0 %v106
    %3025 = vmatprep.subr.mxu0 %v111
    %3026 = vmatpush1.msra.mxu0 %v110
    %3027 = vmatprep.subr.mxu0 %v115
    %3028 = vmatpush1.msra.mxu0 %v114
    %3029 = vmatprep.subr.mxu0 %v119
    %3030 = vmatpush1.msra.mxu0 %v118
    %3031 = vmatprep.subr.mxu0 %v123
    %3032 = vmatpush1.msra.mxu0 %v122
    %3033 = vmatprep.subr.mxu0 %v127
    %3034 = vmatpush1.msra.mxu0 %v126
    %3035 = vmatprep.subr.mxu0 %v131
    %3036 = vmatpush1.msra.mxu0 %v130
    %3037 = vmatprep.subr.mxu0 %v135
    %3038 = vmatpush1.msra.mxu0 %v134
    %3039 = vmatprep.subr.mxu0 %v139
    %3040 = vmatpush1.msra.mxu0 %v138
    %3041 = vmatprep.subr.mxu0 %v143
    %3042 = vmatpush1.msra.mxu0 %v142
    %3043 = vmatprep.subr.mxu0 %v147
    %3044 = vmatpush1.msra.mxu0 %v146
    %3045 = vmatprep.subr.mxu0 %v151
    %3046 = vmatpush1.msra.mxu0 %v150
    %3047 = vmatprep.subr.mxu0 0.0
    %3048 = vmatpush1.msra.mxu0 0.0
    %3049 = vmatprep.subr.mxu0 0.0
    %3050 = vmatpush1.msra.mxu0 0.0
    %3051 = vmatprep.subr.mxu0 0.0
    %3052 = vmatpush1.msra.mxu0 0.0
    %3053 = vmatprep.subr.mxu0 0.0
    %3054 = vmatpush1.msra.mxu0 0.0
    %3055 = vmatprep.subr.mxu0 0.0
    %3056 = vmatpush1.msra.mxu0 0.0
    %3057 = vmatprep.subr.mxu0 0.0
    %3058 = vmatpush1.msra.mxu0 0.0
    %3059 = vmatprep.subr.mxu0 0.0
    %3060 = vmatpush1.msra.mxu0 0.0
    %3061 = vmatprep.subr.mxu0 0.0
    %3062 = vmatpush1.msra.mxu0 0.0
    %3063 = vmatprep.subr.mxu0 0.0
    %3064 = vmatpush1.msra.mxu0 0.0
    %3065 = vmatprep.subr.mxu0 0.0
    %3066 = vmatpush1.msra.mxu0 0.0
    %3067 = vmatprep.subr.mxu0 0.0
    %3068 = vmatpush1.msra.mxu0 0.0
    %3069 = vmatprep.subr.mxu0 0.0
    %3070 = vmatpush1.msra.mxu0 0.0
    %3071 = vmatprep.subr.mxu0 0.0
    %3072 = vmatpush1.msra.mxu0 0.0
    %3073 = vmatprep.subr.mxu0 0.0
    %3074 = vmatpush1.msra.mxu0 0.0
    %3075 = vmatprep.subr.mxu0 0.0
    %3076 = vmatpush1.msra.mxu0 0.0
    %3077 = vmatprep.subr.mxu0 0.0
    %3078 = vmatpush1.msra.mxu0 0.0
    %3079 = vmatprep.mubr.f32.mxu0 0.0
    %3080 = vmatmul.mubr.f32.gmra.mrb[0].mxu0 %v2699
    %v3081 = vpop.f32.mrb[0].mxu0
    %v3082 = vadd.f32 0.0, %v3081
    %v3083 = vpop.f32.mrb[0].mxu0
    %v3084 = vadd.f32 0.0, %v3083
    %3085 = vdwg.mxu0
    %3086 = vmatprep.subr.mxu0 %v93
    %3087 = vmatpush1.msra.mxu0 %v92
    %3088 = vmatprep.subr.mxu0 %v97
    %3089 = vmatpush1.msra.mxu0 %v96
    %3090 = vmatprep.subr.mxu0 %v101
    %3091 = vmatpush1.msra.mxu0 %v100
    %3092 = vmatprep.subr.mxu0 %v105
    %3093 = vmatpush1.msra.mxu0 %v104
    %3094 = vmatprep.subr.mxu0 %v109
    %3095 = vmatpush1.msra.mxu0 %v108
    %3096 = vmatprep.subr.mxu0 %v113
    %3097 = vmatpush1.msra.mxu0 %v112
    %3098 = vmatprep.subr.mxu0 %v117
    %3099 = vmatpush1.msra.mxu0 %v116
    %3100 = vmatprep.subr.mxu0 %v121
    %3101 = vmatpush1.msra.mxu0 %v120
    %3102 = vmatprep.subr.mxu0 %v125
    %3103 = vmatpush1.msra.mxu0 %v124
    %3104 = vmatprep.subr.mxu0 %v129
    %3105 = vmatpush1.msra.mxu0 %v128
    %3106 = vmatprep.subr.mxu0 %v133
    %3107 = vmatpush1.msra.mxu0 %v132
    %3108 = vmatprep.subr.mxu0 %v137
    %3109 = vmatpush1.msra.mxu0 %v136
    %3110 = vmatprep.subr.mxu0 %v141
    %3111 = vmatpush1.msra.mxu0 %v140
    %3112 = vmatprep.subr.mxu0 %v145
    %3113 = vmatpush1.msra.mxu0 %v144
    %3114 = vmatprep.subr.mxu0 %v149
    %3115 = vmatpush1.msra.mxu0 %v148
    %3116 = vmatprep.subr.mxu0 %v153
    %3117 = vmatpush1.msra.mxu0 %v152
    %3118 = vmatprep.subr.mxu0 0.0
    %3119 = vmatpush1.msra.mxu0 0.0
    %3120 = vmatprep.subr.mxu0 0.0
    %3121 = vmatpush1.msra.mxu0 0.0
    %3122 = vmatprep.subr.mxu0 0.0
    %3123 = vmatpush1.msra.mxu0 0.0
    %3124 = vmatprep.subr.mxu0 0.0
    %3125 = vmatpush1.msra.mxu0 0.0
    %3126 = vmatprep.subr.mxu0 0.0
    %3127 = vmatpush1.msra.mxu0 0.0
    %3128 = vmatprep.subr.mxu0 0.0
    %3129 = vmatpush1.msra.mxu0 0.0
    %3130 = vmatprep.subr.mxu0 0.0
    %3131 = vmatpush1.msra.mxu0 0.0
    %3132 = vmatprep.subr.mxu0 0.0
    %3133 = vmatpush1.msra.mxu0 0.0
    %3134 = vmatprep.subr.mxu0 0.0
    %3135 = vmatpush1.msra.mxu0 0.0
    %3136 = vmatprep.subr.mxu0 0.0
    %3137 = vmatpush1.msra.mxu0 0.0
    %3138 = vmatprep.subr.mxu0 0.0
    %3139 = vmatpush1.msra.mxu0 0.0
    %3140 = vmatprep.subr.mxu0 0.0
    %3141 = vmatpush1.msra.mxu0 0.0
    %3142 = vmatprep.subr.mxu0 0.0
    %3143 = vmatpush1.msra.mxu0 0.0
    %3144 = vmatprep.subr.mxu0 0.0
    %3145 = vmatpush1.msra.mxu0 0.0
    %3146 = vmatprep.subr.mxu0 0.0
    %3147 = vmatpush1.msra.mxu0 0.0
    %3148 = vmatprep.subr.mxu0 0.0
    %3149 = vmatpush1.msra.mxu0 0.0
    %3150 = vmatprep.mubr.f32.mxu0 0.0
    %3151 = vmatmul.mubr.f32.gmra.mrb[0].mxu0 %v2699
    %v3152 = vpop.f32.mrb[0].mxu0
    %v3153 = vadd.f32 0.0, %v3152
    %v3154 = vpop.f32.mrb[0].mxu0
    %v3155 = vadd.f32 0.0, %v3154
    %3156 = vdwg.mxu0
    %v3161 = vcombine.low %v3082, %v3084
    %v3162 = vcombine.low %v3153, %v3155
    %v3164 = vunpack.c.l.s4 1983009808
    %v3165 = vunpack.c.0.s8 %v3164
    %v3166 = vlaneseq
    %v3167 = vshrl.u32 %v3166, 7
    %v3168 = vsub.s32 %v3165, %v3167
    %v3169 = vrot.slane %v3161, %v3168
    %v3171 = vunpack.c.l.s4 1983009808
    %v3172 = vunpack.c.0.s8 %v3171
    %v3173 = vlaneseq
    %v3174 = vshrl.u32 %v3173, 7
    %v3175 = vsub.s32 %v3172, %v3174
    %v3176 = vrot.slane %v3162, %v3175
    %v3177 = vcombine.low %v3169, %v3176
    %v3179 = vadd.f32 %v3014, %v3177
    %v3180 = vxor.u32 %v3179, 2147483648
    %v3181 = vmul.f32 %v3180, 1.442695
    %v3182 = vpow.pop %v3181
    %v3183 = vadd.f32 %v3182, 1.0
    %v3184 = vrcp.pop %v3183
    %v3185 = vmul.f32 1.0, %v3184
    %v3187 = vrot.slane %v3179, 2
    %v3189 = vxor.u32 %v3187, 2147483648
    %v3190 = vmul.f32 %v3189, 1.442695
    %v3191 = vpow.pop %v3190
    %v3192 = vadd.f32 %v3191, 1.0
    %v3193 = vrcp.pop %v3192
    %v3194 = vmul.f32 1.0, %v3193
    %v3195 = vrot.slane %v3179, 4
    %v3197 = vtanh.pop %v3195
    %v3198 = vrot.slane %v3179, 6
    %v3200 = vxor.u32 %v3198, 2147483648
    %v3201 = vmul.f32 %v3200, 1.442695
    %v3202 = vpow.pop %v3201
    %v3203 = vadd.f32 %v3202, 1.0
    %v3204 = vrcp.pop %v3203
    %v3205 = vmul.f32 1.0, %v3204
    %v3206 = vmul.f32 %v3194, %v2697
    %v3207 = vmul.f32 %v3185, %v3197
    %v3208 = vadd.f32 %v3206, %v3207
    %v3209 = vtanh.pop %v3208
    %v3210 = vmul.f32 %v3205, %v3209
    %3211 = vmatprep.subr.mxu0 %v155
    %3212 = vmatpush1.msra.mxu0 %v154
    %3213 = vmatprep.subr.mxu0 %v159
    %3214 = vmatpush1.msra.mxu0 %v158
    %3215 = vmatprep.subr.mxu0 %v163
    %3216 = vmatpush1.msra.mxu0 %v162
    %3217 = vmatprep.subr.mxu0 %v167
    %3218 = vmatpush1.msra.mxu0 %v166
    %3219 = vmatprep.subr.mxu0 %v171
    %3220 = vmatpush1.msra.mxu0 %v170
    %3221 = vmatprep.subr.mxu0 %v175
    %3222 = vmatpush1.msra.mxu0 %v174
    %3223 = vmatprep.subr.mxu0 %v179
    %3224 = vmatpush1.msra.mxu0 %v178
    %3225 = vmatprep.subr.mxu0 %v183
    %3226 = vmatpush1.msra.mxu0 %v182
    %3227 = vmatprep.subr.mxu0 %v187
    %3228 = vmatpush1.msra.mxu0 %v186
    %3229 = vmatprep.subr.mxu0 %v191
    %3230 = vmatpush1.msra.mxu0 %v190
    %3231 = vmatprep.subr.mxu0 %v195
    %3232 = vmatpush1.msra.mxu0 %v194
    %3233 = vmatprep.subr.mxu0 %v199
    %3234 = vmatpush1.msra.mxu0 %v198
    %3235 = vmatprep.subr.mxu0 %v203
    %3236 = vmatpush1.msra.mxu0 %v202
    %3237 = vmatprep.subr.mxu0 %v207
    %3238 = vmatpush1.msra.mxu0 %v206
    %3239 = vmatprep.subr.mxu0 %v211
    %3240 = vmatpush1.msra.mxu0 %v210
    %3241 = vmatprep.subr.mxu0 %v215
    %3242 = vmatpush1.msra.mxu0 %v214
    %3243 = vmatprep.subr.mxu0 0.0
    %3244 = vmatpush1.msra.mxu0 0.0
    %3245 = vmatprep.subr.mxu0 0.0
    %3246 = vmatpush1.msra.mxu0 0.0
    %3247 = vmatprep.subr.mxu0 0.0
    %3248 = vmatpush1.msra.mxu0 0.0
    %3249 = vmatprep.subr.mxu0 0.0
    %3250 = vmatpush1.msra.mxu0 0.0
    %3251 = vmatprep.subr.mxu0 0.0
    %3252 = vmatpush1.msra.mxu0 0.0
    %3253 = vmatprep.subr.mxu0 0.0
    %3254 = vmatpush1.msra.mxu0 0.0
    %3255 = vmatprep.subr.mxu0 0.0
    %3256 = vmatpush1.msra.mxu0 0.0
    %3257 = vmatprep.subr.mxu0 0.0
    %3258 = vmatpush1.msra.mxu0 0.0
    %3259 = vmatprep.subr.mxu0 0.0
    %3260 = vmatpush1.msra.mxu0 0.0
    %3261 = vmatprep.subr.mxu0 0.0
    %3262 = vmatpush1.msra.mxu0 0.0
    %3263 = vmatprep.subr.mxu0 0.0
    %3264 = vmatpush1.msra.mxu0 0.0
    %3265 = vmatprep.subr.mxu0 0.0
    %3266 = vmatpush1.msra.mxu0 0.0
    %3267 = vmatprep.subr.mxu0 0.0
    %3268 = vmatpush1.msra.mxu0 0.0
    %3269 = vmatprep.subr.mxu0 0.0
    %3270 = vmatpush1.msra.mxu0 0.0
    %3271 = vmatprep.subr.mxu0 0.0
    %3272 = vmatpush1.msra.mxu0 0.0
    %3273 = vmatprep.subr.mxu0 0.0
    %3274 = vmatpush1.msra.mxu0 0.0
    %3275 = vmatprep.mubr.f32.mxu0 0.0
    %3276 = vmatmul.mubr.f32.gmra.mrb[0].mxu0 %v3210
    %v3277 = vpop.f32.mrb[0].mxu0
    %v3278 = vadd.f32 %v2938, %v3277
    %v3279 = vpop.f32.mrb[0].mxu0
    %v3280 = vadd.f32 %v2940, %v3279
    %3281 = vdwg.mxu0
    %3282 = vmatprep.subr.mxu0 %v157
    %3283 = vmatpush1.msra.mxu0 %v156
    %3284 = vmatprep.subr.mxu0 %v161
    %3285 = vmatpush1.msra.mxu0 %v160
    %3286 = vmatprep.subr.mxu0 %v165
    %3287 = vmatpush1.msra.mxu0 %v164
    %3288 = vmatprep.subr.mxu0 %v169
    %3289 = vmatpush1.msra.mxu0 %v168
    %3290 = vmatprep.subr.mxu0 %v173
    %3291 = vmatpush1.msra.mxu0 %v172
    %3292 = vmatprep.subr.mxu0 %v177
    %3293 = vmatpush1.msra.mxu0 %v176
    %3294 = vmatprep.subr.mxu0 %v181
    %3295 = vmatpush1.msra.mxu0 %v180
    %3296 = vmatprep.subr.mxu0 %v185
    %3297 = vmatpush1.msra.mxu0 %v184
    %3298 = vmatprep.subr.mxu0 %v189
    %3299 = vmatpush1.msra.mxu0 %v188
    %3300 = vmatprep.subr.mxu0 %v193
    %3301 = vmatpush1.msra.mxu0 %v192
    %3302 = vmatprep.subr.mxu0 %v197
    %3303 = vmatpush1.msra.mxu0 %v196
    %3304 = vmatprep.subr.mxu0 %v201
    %3305 = vmatpush1.msra.mxu0 %v200
    %3306 = vmatprep.subr.mxu0 %v205
    %3307 = vmatpush1.msra.mxu0 %v204
    %3308 = vmatprep.subr.mxu0 %v209
    %3309 = vmatpush1.msra.mxu0 %v208
    %3310 = vmatprep.subr.mxu0 %v213
    %3311 = vmatpush1.msra.mxu0 %v212
    %3312 = vmatprep.subr.mxu0 %v217
    %3313 = vmatpush1.msra.mxu0 %v216
    %3314 = vmatprep.subr.mxu0 0.0
    %3315 = vmatpush1.msra.mxu0 0.0
    %3316 = vmatprep.subr.mxu0 0.0
    %3317 = vmatpush1.msra.mxu0 0.0
    %3318 = vmatprep.subr.mxu0 0.0
    %3319 = vmatpush1.msra.mxu0 0.0
    %3320 = vmatprep.subr.mxu0 0.0
    %3321 = vmatpush1.msra.mxu0 0.0
    %3322 = vmatprep.subr.mxu0 0.0
    %3323 = vmatpush1.msra.mxu0 0.0
    %3324 = vmatprep.subr.mxu0 0.0
    %3325 = vmatpush1.msra.mxu0 0.0
    %3326 = vmatprep.subr.mxu0 0.0
    %3327 = vmatpush1.msra.mxu0 0.0
    %3328 = vmatprep.subr.mxu0 0.0
    %3329 = vmatpush1.msra.mxu0 0.0
    %3330 = vmatprep.subr.mxu0 0.0
    %3331 = vmatpush1.msra.mxu0 0.0
    %3332 = vmatprep.subr.mxu0 0.0
    %3333 = vmatpush1.msra.mxu0 0.0
    %3334 = vmatprep.subr.mxu0 0.0
    %3335 = vmatpush1.msra.mxu0 0.0
    %3336 = vmatprep.subr.mxu0 0.0
    %3337 = vmatpush1.msra.mxu0 0.0
    %3338 = vmatprep.subr.mxu0 0.0
    %3339 = vmatpush1.msra.mxu0 0.0
    %3340 = vmatprep.subr.mxu0 0.0
    %3341 = vmatpush1.msra.mxu0 0.0
    %3342 = vmatprep.subr.mxu0 0.0
    %3343 = vmatpush1.msra.mxu0 0.0
    %3344 = vmatprep.subr.mxu0 0.0
    %3345 = vmatpush1.msra.mxu0 0.0
    %3346 = vmatprep.mubr.f32.mxu0 0.0
    %3347 = vmatmul.mubr.f32.gmra.mrb[0].mxu0 %v3210
    %v3348 = vpop.f32.mrb[0].mxu0
    %v3349 = vadd.f32 %v3009, %v3348
    %v3350 = vpop.f32.mrb[0].mxu0
    %v3351 = vadd.f32 %v3011, %v3350
    %3352 = vdwg.mxu0
    %v3353 = vxor.u32 %v3278, 2147483648
    %v3354 = vmul.f32 %v3353, 1.442695
    %v3355 = vpow.pop %v3354
    %v3356 = vadd.f32 %v3355, 1.0
    %v3357 = vrcp.pop %v3356
    %v3358 = vmul.f32 1.0, %v3357
    %v3359 = vxor.u32 %v3280, 2147483648
    %v3360 = vmul.f32 %v3359, 1.442695
    %v3361 = vpow.pop %v3360
    %v3362 = vadd.f32 %v3361, 1.0
    %v3363 = vrcp.pop %v3362
    %v3364 = vmul.f32 1.0, %v3363
    %v3365 = vtanh.pop %v3349
    %v3366 = vxor.u32 %v3351, 2147483648
    %v3367 = vmul.f32 %v3366, 1.442695
    %v3368 = vpow.pop %v3367
    %v3369 = vadd.f32 %v3368, 1.0
    %v3370 = vrcp.pop %v3369
    %v3371 = vmul.f32 1.0, %v3370
    %v3372 = vmul.f32 %v3364, %v2863
    %v3373 = vmul.f32 %v3358, %v3365
    %v3374 = vadd.f32 %v3372, %v3373
    %v3375 = vtanh.pop %v3374
    %v3376 = vmul.f32 %v3371, %v3375
    %v3377 = vmul.f32 %v3376, %v813
    %v3378 = vsel %vm816, %v3377, 0.0
    %3379 = vadd.xlane.f32.xlu0 %v3378
    %v3380 = vpop.xlane.xlu0 %3379
    %v3381 = vadd.f32 %v3380, %v824
    %3382 = vmatprep.subr.mxu0 %v219
    %3383 = vmatpush1.msra.mxu0 %v218
    %3384 = vmatprep.subr.mxu0 %v223
    %3385 = vmatpush1.msra.mxu0 %v222
    %3386 = vmatprep.subr.mxu0 %v227
    %3387 = vmatpush1.msra.mxu0 %v226
    %3388 = vmatprep.subr.mxu0 %v231
    %3389 = vmatpush1.msra.mxu0 %v230
    %3390 = vmatprep.subr.mxu0 %v235
    %3391 = vmatpush1.msra.mxu0 %v234
    %3392 = vmatprep.subr.mxu0 %v239
    %3393 = vmatpush1.msra.mxu0 %v238
    %3394 = vmatprep.subr.mxu0 %v243
    %3395 = vmatpush1.msra.mxu0 %v242
    %3396 = vmatprep.subr.mxu0 %v247
    %3397 = vmatpush1.msra.mxu0 %v246
    %3398 = vmatprep.subr.mxu0 %v251
    %3399 = vmatpush1.msra.mxu0 %v250
    %3400 = vmatprep.subr.mxu0 %v255
    %3401 = vmatpush1.msra.mxu0 %v254
    %3402 = vmatprep.subr.mxu0 %v259
    %3403 = vmatpush1.msra.mxu0 %v258
    %3404 = vmatprep.subr.mxu0 %v263
    %3405 = vmatpush1.msra.mxu0 %v262
    %3406 = vmatprep.subr.mxu0 %v267
    %3407 = vmatpush1.msra.mxu0 %v266
    %3408 = vmatprep.subr.mxu0 %v271
    %3409 = vmatpush1.msra.mxu0 %v270
    %3410 = vmatprep.subr.mxu0 %v275
    %3411 = vmatpush1.msra.mxu0 %v274
    %3412 = vmatprep.subr.mxu0 %v279
    %3413 = vmatpush1.msra.mxu0 %v278
    %3414 = vmatprep.subr.mxu0 0.0
    %3415 = vmatpush1.msra.mxu0 0.0
    %3416 = vmatprep.subr.mxu0 0.0
    %3417 = vmatpush1.msra.mxu0 0.0
    %3418 = vmatprep.subr.mxu0 0.0
    %3419 = vmatpush1.msra.mxu0 0.0
    %3420 = vmatprep.subr.mxu0 0.0
    %3421 = vmatpush1.msra.mxu0 0.0
    %3422 = vmatprep.subr.mxu0 0.0
    %3423 = vmatpush1.msra.mxu0 0.0
    %3424 = vmatprep.subr.mxu0 0.0
    %3425 = vmatpush1.msra.mxu0 0.0
    %3426 = vmatprep.subr.mxu0 0.0
    %3427 = vmatpush1.msra.mxu0 0.0
    %3428 = vmatprep.subr.mxu0 0.0
    %3429 = vmatpush1.msra.mxu0 0.0
    %3430 = vmatprep.subr.mxu0 0.0
    %3431 = vmatpush1.msra.mxu0 0.0
    %3432 = vmatprep.subr.mxu0 0.0
    %3433 = vmatpush1.msra.mxu0 0.0
    %3434 = vmatprep.subr.mxu0 0.0
    %3435 = vmatpush1.msra.mxu0 0.0
    %3436 = vmatprep.subr.mxu0 0.0
    %3437 = vmatpush1.msra.mxu0 0.0
    %3438 = vmatprep.subr.mxu0 0.0
    %3439 = vmatpush1.msra.mxu0 0.0
    %3440 = vmatprep.subr.mxu0 0.0
    %3441 = vmatpush1.msra.mxu0 0.0
    %3442 = vmatprep.subr.mxu0 0.0
    %3443 = vmatpush1.msra.mxu0 0.0
    %3444 = vmatprep.subr.mxu0 0.0
    %3445 = vmatpush1.msra.mxu0 0.0
    %3446 = vmatprep.mubr.f32.mxu0 0.0
    %3447 = vmatmul.mubr.f32.gmra.mrb[0].mxu0 %v3376
    %v3448 = vpop.f32.mrb[0].mxu0
    %v3449 = vadd.f32 %v289, %v3448
    %v3450 = vpop.f32.mrb[0].mxu0
    %v3451 = vadd.f32 %v293, %v3450
    %3452 = vdwg.mxu0
    %3453 = vmatprep.subr.mxu0 %v221
    %3454 = vmatpush1.msra.mxu0 %v220
    %3455 = vmatprep.subr.mxu0 %v225
    %3456 = vmatpush1.msra.mxu0 %v224
    %3457 = vmatprep.subr.mxu0 %v229
    %3458 = vmatpush1.msra.mxu0 %v228
    %3459 = vmatprep.subr.mxu0 %v233
    %3460 = vmatpush1.msra.mxu0 %v232
    %3461 = vmatprep.subr.mxu0 %v237
    %3462 = vmatpush1.msra.mxu0 %v236
    %3463 = vmatprep.subr.mxu0 %v241
    %3464 = vmatpush1.msra.mxu0 %v240
    %3465 = vmatprep.subr.mxu0 %v245
    %3466 = vmatpush1.msra.mxu0 %v244
    %3467 = vmatprep.subr.mxu0 %v249
    %3468 = vmatpush1.msra.mxu0 %v248
    %3469 = vmatprep.subr.mxu0 %v253
    %3470 = vmatpush1.msra.mxu0 %v252
    %3471 = vmatprep.subr.mxu0 %v257
    %3472 = vmatpush1.msra.mxu0 %v256
    %3473 = vmatprep.subr.mxu0 %v261
    %3474 = vmatpush1.msra.mxu0 %v260
    %3475 = vmatprep.subr.mxu0 %v265
    %3476 = vmatpush1.msra.mxu0 %v264
    %3477 = vmatprep.subr.mxu0 %v269
    %3478 = vmatpush1.msra.mxu0 %v268
    %3479 = vmatprep.subr.mxu0 %v273
    %3480 = vmatpush1.msra.mxu0 %v272
    %3481 = vmatprep.subr.mxu0 %v277
    %3482 = vmatpush1.msra.mxu0 %v276
    %3483 = vmatprep.subr.mxu0 %v281
    %3484 = vmatpush1.msra.mxu0 %v280
    %3485 = vmatprep.subr.mxu0 0.0
    %3486 = vmatpush1.msra.mxu0 0.0
    %3487 = vmatprep.subr.mxu0 0.0
    %3488 = vmatpush1.msra.mxu0 0.0
    %3489 = vmatprep.subr.mxu0 0.0
    %3490 = vmatpush1.msra.mxu0 0.0
    %3491 = vmatprep.subr.mxu0 0.0
    %3492 = vmatpush1.msra.mxu0 0.0
    %3493 = vmatprep.subr.mxu0 0.0
    %3494 = vmatpush1.msra.mxu0 0.0
    %3495 = vmatprep.subr.mxu0 0.0
    %3496 = vmatpush1.msra.mxu0 0.0
    %3497 = vmatprep.subr.mxu0 0.0
    %3498 = vmatpush1.msra.mxu0 0.0
    %3499 = vmatprep.subr.mxu0 0.0
    %3500 = vmatpush1.msra.mxu0 0.0
    %3501 = vmatprep.subr.mxu0 0.0
    %3502 = vmatpush1.msra.mxu0 0.0
    %3503 = vmatprep.subr.mxu0 0.0
    %3504 = vmatpush1.msra.mxu0 0.0
    %3505 = vmatprep.subr.mxu0 0.0
    %3506 = vmatpush1.msra.mxu0 0.0
    %3507 = vmatprep.subr.mxu0 0.0
    %3508 = vmatpush1.msra.mxu0 0.0
    %3509 = vmatprep.subr.mxu0 0.0
    %3510 = vmatpush1.msra.mxu0 0.0
    %3511 = vmatprep.subr.mxu0 0.0
    %3512 = vmatpush1.msra.mxu0 0.0
    %3513 = vmatprep.subr.mxu0 0.0
    %3514 = vmatpush1.msra.mxu0 0.0
    %3515 = vmatprep.subr.mxu0 0.0
    %3516 = vmatpush1.msra.mxu0 0.0
    %3517 = vmatprep.mubr.f32.mxu0 0.0
    %3518 = vmatmul.mubr.f32.gmra.mrb[0].mxu0 %v3376
    %v3519 = vpop.f32.mrb[0].mxu0
    %v3520 = vadd.f32 %v297, %v3519
    %v3521 = vpop.f32.mrb[0].mxu0
    %v3522 = vadd.f32 %v301, %v3521
    %3523 = vdwg.mxu0
    %s3524 = scalar_lea.vmem %s0, 48
    %v3525 = vld [vmem:[%s3524] sm:$0xff]
    %3526 = vmatprep.subr.mxu0 %v91
    %3527 = vmatpush1.msra.mxu0 %v90
    %3528 = vmatprep.subr.mxu0 %v95
    %3529 = vmatpush1.msra.mxu0 %v94
    %3530 = vmatprep.subr.mxu0 %v99
    %3531 = vmatpush1.msra.mxu0 %v98
    %3532 = vmatprep.subr.mxu0 %v103
    %3533 = vmatpush1.msra.mxu0 %v102
    %3534 = vmatprep.subr.mxu0 %v107
    %3535 = vmatpush1.msra.mxu0 %v106
    %3536 = vmatprep.subr.mxu0 %v111
    %3537 = vmatpush1.msra.mxu0 %v110
    %3538 = vmatprep.subr.mxu0 %v115
    %3539 = vmatpush1.msra.mxu0 %v114
    %3540 = vmatprep.subr.mxu0 %v119
    %3541 = vmatpush1.msra.mxu0 %v118
    %3542 = vmatprep.subr.mxu0 %v123
    %3543 = vmatpush1.msra.mxu0 %v122
    %3544 = vmatprep.subr.mxu0 %v127
    %3545 = vmatpush1.msra.mxu0 %v126
    %3546 = vmatprep.subr.mxu0 %v131
    %3547 = vmatpush1.msra.mxu0 %v130
    %3548 = vmatprep.subr.mxu0 %v135
    %3549 = vmatpush1.msra.mxu0 %v134
    %3550 = vmatprep.subr.mxu0 %v139
    %3551 = vmatpush1.msra.mxu0 %v138
    %3552 = vmatprep.subr.mxu0 %v143
    %3553 = vmatpush1.msra.mxu0 %v142
    %3554 = vmatprep.subr.mxu0 %v147
    %3555 = vmatpush1.msra.mxu0 %v146
    %3556 = vmatprep.subr.mxu0 %v151
    %3557 = vmatpush1.msra.mxu0 %v150
    %3558 = vmatprep.subr.mxu0 0.0
    %3559 = vmatpush1.msra.mxu0 0.0
    %3560 = vmatprep.subr.mxu0 0.0
    %3561 = vmatpush1.msra.mxu0 0.0
    %3562 = vmatprep.subr.mxu0 0.0
    %3563 = vmatpush1.msra.mxu0 0.0
    %3564 = vmatprep.subr.mxu0 0.0
    %3565 = vmatpush1.msra.mxu0 0.0
    %3566 = vmatprep.subr.mxu0 0.0
    %3567 = vmatpush1.msra.mxu0 0.0
    %3568 = vmatprep.subr.mxu0 0.0
    %3569 = vmatpush1.msra.mxu0 0.0
    %3570 = vmatprep.subr.mxu0 0.0
    %3571 = vmatpush1.msra.mxu0 0.0
    %3572 = vmatprep.subr.mxu0 0.0
    %3573 = vmatpush1.msra.mxu0 0.0
    %3574 = vmatprep.subr.mxu0 0.0
    %3575 = vmatpush1.msra.mxu0 0.0
    %3576 = vmatprep.subr.mxu0 0.0
    %3577 = vmatpush1.msra.mxu0 0.0
    %3578 = vmatprep.subr.mxu0 0.0
    %3579 = vmatpush1.msra.mxu0 0.0
    %3580 = vmatprep.subr.mxu0 0.0
    %3581 = vmatpush1.msra.mxu0 0.0
    %3582 = vmatprep.subr.mxu0 0.0
    %3583 = vmatpush1.msra.mxu0 0.0
    %3584 = vmatprep.subr.mxu0 0.0
    %3585 = vmatpush1.msra.mxu0 0.0
    %3586 = vmatprep.subr.mxu0 0.0
    %3587 = vmatpush1.msra.mxu0 0.0
    %3588 = vmatprep.subr.mxu0 0.0
    %3589 = vmatpush1.msra.mxu0 0.0
    %3590 = vmatprep.mubr.f32.mxu0 0.0
    %3591 = vmatmul.mubr.f32.gmra.mrb[0].mxu0 %v3210
    %v3592 = vpop.f32.mrb[0].mxu0
    %v3593 = vadd.f32 0.0, %v3592
    %v3594 = vpop.f32.mrb[0].mxu0
    %v3595 = vadd.f32 0.0, %v3594
    %3596 = vdwg.mxu0
    %3597 = vmatprep.subr.mxu0 %v93
    %3598 = vmatpush1.msra.mxu0 %v92
    %3599 = vmatprep.subr.mxu0 %v97
    %3600 = vmatpush1.msra.mxu0 %v96
    %3601 = vmatprep.subr.mxu0 %v101
    %3602 = vmatpush1.msra.mxu0 %v100
    %3603 = vmatprep.subr.mxu0 %v105
    %3604 = vmatpush1.msra.mxu0 %v104
    %3605 = vmatprep.subr.mxu0 %v109
    %3606 = vmatpush1.msra.mxu0 %v108
    %3607 = vmatprep.subr.mxu0 %v113
    %3608 = vmatpush1.msra.mxu0 %v112
    %3609 = vmatprep.subr.mxu0 %v117
    %3610 = vmatpush1.msra.mxu0 %v116
    %3611 = vmatprep.subr.mxu0 %v121
    %3612 = vmatpush1.msra.mxu0 %v120
    %3613 = vmatprep.subr.mxu0 %v125
    %3614 = vmatpush1.msra.mxu0 %v124
    %3615 = vmatprep.subr.mxu0 %v129
    %3616 = vmatpush1.msra.mxu0 %v128
    %3617 = vmatprep.subr.mxu0 %v133
    %3618 = vmatpush1.msra.mxu0 %v132
    %3619 = vmatprep.subr.mxu0 %v137
    %3620 = vmatpush1.msra.mxu0 %v136
    %3621 = vmatprep.subr.mxu0 %v141
    %3622 = vmatpush1.msra.mxu0 %v140
    %3623 = vmatprep.subr.mxu0 %v145
    %3624 = vmatpush1.msra.mxu0 %v144
    %3625 = vmatprep.subr.mxu0 %v149
    %3626 = vmatpush1.msra.mxu0 %v148
    %3627 = vmatprep.subr.mxu0 %v153
    %3628 = vmatpush1.msra.mxu0 %v152
    %3629 = vmatprep.subr.mxu0 0.0
    %3630 = vmatpush1.msra.mxu0 0.0
    %3631 = vmatprep.subr.mxu0 0.0
    %3632 = vmatpush1.msra.mxu0 0.0
    %3633 = vmatprep.subr.mxu0 0.0
    %3634 = vmatpush1.msra.mxu0 0.0
    %3635 = vmatprep.subr.mxu0 0.0
    %3636 = vmatpush1.msra.mxu0 0.0
    %3637 = vmatprep.subr.mxu0 0.0
    %3638 = vmatpush1.msra.mxu0 0.0
    %3639 = vmatprep.subr.mxu0 0.0
    %3640 = vmatpush1.msra.mxu0 0.0
    %3641 = vmatprep.subr.mxu0 0.0
    %3642 = vmatpush1.msra.mxu0 0.0
    %3643 = vmatprep.subr.mxu0 0.0
    %3644 = vmatpush1.msra.mxu0 0.0
    %3645 = vmatprep.subr.mxu0 0.0
    %3646 = vmatpush1.msra.mxu0 0.0
    %3647 = vmatprep.subr.mxu0 0.0
    %3648 = vmatpush1.msra.mxu0 0.0
    %3649 = vmatprep.subr.mxu0 0.0
    %3650 = vmatpush1.msra.mxu0 0.0
    %3651 = vmatprep.subr.mxu0 0.0
    %3652 = vmatpush1.msra.mxu0 0.0
    %3653 = vmatprep.subr.mxu0 0.0
    %3654 = vmatpush1.msra.mxu0 0.0
    %3655 = vmatprep.subr.mxu0 0.0
    %3656 = vmatpush1.msra.mxu0 0.0
    %3657 = vmatprep.subr.mxu0 0.0
    %3658 = vmatpush1.msra.mxu0 0.0
    %3659 = vmatprep.subr.mxu0 0.0
    %3660 = vmatpush1.msra.mxu0 0.0
    %3661 = vmatprep.mubr.f32.mxu0 0.0
    %3662 = vmatmul.mubr.f32.gmra.mrb[0].mxu0 %v3210
    %v3663 = vpop.f32.mrb[0].mxu0
    %v3664 = vadd.f32 0.0, %v3663
    %v3665 = vpop.f32.mrb[0].mxu0
    %v3666 = vadd.f32 0.0, %v3665
    %3667 = vdwg.mxu0
    %v3672 = vcombine.low %v3593, %v3595
    %v3673 = vcombine.low %v3664, %v3666
    %v3675 = vunpack.c.l.s4 1983009808
    %v3676 = vunpack.c.0.s8 %v3675
    %v3677 = vlaneseq
    %v3678 = vshrl.u32 %v3677, 7
    %v3679 = vsub.s32 %v3676, %v3678
    %v3680 = vrot.slane %v3672, %v3679
    %v3682 = vunpack.c.l.s4 1983009808
    %v3683 = vunpack.c.0.s8 %v3682
    %v3684 = vlaneseq
    %v3685 = vshrl.u32 %v3684, 7
    %v3686 = vsub.s32 %v3683, %v3685
    %v3687 = vrot.slane %v3673, %v3686
    %v3688 = vcombine.low %v3680, %v3687
    %v3690 = vadd.f32 %v3525, %v3688
    %v3691 = vxor.u32 %v3690, 2147483648
    %v3692 = vmul.f32 %v3691, 1.442695
    %v3693 = vpow.pop %v3692
    %v3694 = vadd.f32 %v3693, 1.0
    %v3695 = vrcp.pop %v3694
    %v3696 = vmul.f32 1.0, %v3695
    %v3698 = vrot.slane %v3690, 2
    %v3700 = vxor.u32 %v3698, 2147483648
    %v3701 = vmul.f32 %v3700, 1.442695
    %v3702 = vpow.pop %v3701
    %v3703 = vadd.f32 %v3702, 1.0
    %v3704 = vrcp.pop %v3703
    %v3705 = vmul.f32 1.0, %v3704
    %v3706 = vrot.slane %v3690, 4
    %v3708 = vtanh.pop %v3706
    %v3709 = vrot.slane %v3690, 6
    %v3711 = vxor.u32 %v3709, 2147483648
    %v3712 = vmul.f32 %v3711, 1.442695
    %v3713 = vpow.pop %v3712
    %v3714 = vadd.f32 %v3713, 1.0
    %v3715 = vrcp.pop %v3714
    %v3716 = vmul.f32 1.0, %v3715
    %v3717 = vmul.f32 %v3705, %v3208
    %v3718 = vmul.f32 %v3696, %v3708
    %v3719 = vadd.f32 %v3717, %v3718
    %v3720 = vtanh.pop %v3719
    %v3721 = vmul.f32 %v3716, %v3720
    %3722 = vmatprep.subr.mxu0 %v155
    %3723 = vmatpush1.msra.mxu0 %v154
    %3724 = vmatprep.subr.mxu0 %v159
    %3725 = vmatpush1.msra.mxu0 %v158
    %3726 = vmatprep.subr.mxu0 %v163
    %3727 = vmatpush1.msra.mxu0 %v162
    %3728 = vmatprep.subr.mxu0 %v167
    %3729 = vmatpush1.msra.mxu0 %v166
    %3730 = vmatprep.subr.mxu0 %v171
    %3731 = vmatpush1.msra.mxu0 %v170
    %3732 = vmatprep.subr.mxu0 %v175
    %3733 = vmatpush1.msra.mxu0 %v174
    %3734 = vmatprep.subr.mxu0 %v179
    %3735 = vmatpush1.msra.mxu0 %v178
    %3736 = vmatprep.subr.mxu0 %v183
    %3737 = vmatpush1.msra.mxu0 %v182
    %3738 = vmatprep.subr.mxu0 %v187
    %3739 = vmatpush1.msra.mxu0 %v186
    %3740 = vmatprep.subr.mxu0 %v191
    %3741 = vmatpush1.msra.mxu0 %v190
    %3742 = vmatprep.subr.mxu0 %v195
    %3743 = vmatpush1.msra.mxu0 %v194
    %3744 = vmatprep.subr.mxu0 %v199
    %3745 = vmatpush1.msra.mxu0 %v198
    %3746 = vmatprep.subr.mxu0 %v203
    %3747 = vmatpush1.msra.mxu0 %v202
    %3748 = vmatprep.subr.mxu0 %v207
    %3749 = vmatpush1.msra.mxu0 %v206
    %3750 = vmatprep.subr.mxu0 %v211
    %3751 = vmatpush1.msra.mxu0 %v210
    %3752 = vmatprep.subr.mxu0 %v215
    %3753 = vmatpush1.msra.mxu0 %v214
    %3754 = vmatprep.subr.mxu0 0.0
    %3755 = vmatpush1.msra.mxu0 0.0
    %3756 = vmatprep.subr.mxu0 0.0
    %3757 = vmatpush1.msra.mxu0 0.0
    %3758 = vmatprep.subr.mxu0 0.0
    %3759 = vmatpush1.msra.mxu0 0.0
    %3760 = vmatprep.subr.mxu0 0.0
    %3761 = vmatpush1.msra.mxu0 0.0
    %3762 = vmatprep.subr.mxu0 0.0
    %3763 = vmatpush1.msra.mxu0 0.0
    %3764 = vmatprep.subr.mxu0 0.0
    %3765 = vmatpush1.msra.mxu0 0.0
    %3766 = vmatprep.subr.mxu0 0.0
    %3767 = vmatpush1.msra.mxu0 0.0
    %3768 = vmatprep.subr.mxu0 0.0
    %3769 = vmatpush1.msra.mxu0 0.0
    %3770 = vmatprep.subr.mxu0 0.0
    %3771 = vmatpush1.msra.mxu0 0.0
    %3772 = vmatprep.subr.mxu0 0.0
    %3773 = vmatpush1.msra.mxu0 0.0
    %3774 = vmatprep.subr.mxu0 0.0
    %3775 = vmatpush1.msra.mxu0 0.0
    %3776 = vmatprep.subr.mxu0 0.0
    %3777 = vmatpush1.msra.mxu0 0.0
    %3778 = vmatprep.subr.mxu0 0.0
    %3779 = vmatpush1.msra.mxu0 0.0
    %3780 = vmatprep.subr.mxu0 0.0
    %3781 = vmatpush1.msra.mxu0 0.0
    %3782 = vmatprep.subr.mxu0 0.0
    %3783 = vmatpush1.msra.mxu0 0.0
    %3784 = vmatprep.subr.mxu0 0.0
    %3785 = vmatpush1.msra.mxu0 0.0
    %3786 = vmatprep.mubr.f32.mxu0 0.0
    %3787 = vmatmul.mubr.f32.gmra.mrb[0].mxu0 %v3721
    %v3788 = vpop.f32.mrb[0].mxu0
    %v3789 = vadd.f32 %v3449, %v3788
    %v3790 = vpop.f32.mrb[0].mxu0
    %v3791 = vadd.f32 %v3451, %v3790
    %3792 = vdwg.mxu0
    %3793 = vmatprep.subr.mxu0 %v157
    %3794 = vmatpush1.msra.mxu0 %v156
    %3795 = vmatprep.subr.mxu0 %v161
    %3796 = vmatpush1.msra.mxu0 %v160
    %3797 = vmatprep.subr.mxu0 %v165
    %3798 = vmatpush1.msra.mxu0 %v164
    %3799 = vmatprep.subr.mxu0 %v169
    %3800 = vmatpush1.msra.mxu0 %v168
    %3801 = vmatprep.subr.mxu0 %v173
    %3802 = vmatpush1.msra.mxu0 %v172
    %3803 = vmatprep.subr.mxu0 %v177
    %3804 = vmatpush1.msra.mxu0 %v176
    %3805 = vmatprep.subr.mxu0 %v181
    %3806 = vmatpush1.msra.mxu0 %v180
    %3807 = vmatprep.subr.mxu0 %v185
    %3808 = vmatpush1.msra.mxu0 %v184
    %3809 = vmatprep.subr.mxu0 %v189
    %3810 = vmatpush1.msra.mxu0 %v188
    %3811 = vmatprep.subr.mxu0 %v193
    %3812 = vmatpush1.msra.mxu0 %v192
    %3813 = vmatprep.subr.mxu0 %v197
    %3814 = vmatpush1.msra.mxu0 %v196
    %3815 = vmatprep.subr.mxu0 %v201
    %3816 = vmatpush1.msra.mxu0 %v200
    %3817 = vmatprep.subr.mxu0 %v205
    %3818 = vmatpush1.msra.mxu0 %v204
    %3819 = vmatprep.subr.mxu0 %v209
    %3820 = vmatpush1.msra.mxu0 %v208
    %3821 = vmatprep.subr.mxu0 %v213
    %3822 = vmatpush1.msra.mxu0 %v212
    %3823 = vmatprep.subr.mxu0 %v217
    %3824 = vmatpush1.msra.mxu0 %v216
    %3825 = vmatprep.subr.mxu0 0.0
    %3826 = vmatpush1.msra.mxu0 0.0
    %3827 = vmatprep.subr.mxu0 0.0
    %3828 = vmatpush1.msra.mxu0 0.0
    %3829 = vmatprep.subr.mxu0 0.0
    %3830 = vmatpush1.msra.mxu0 0.0
    %3831 = vmatprep.subr.mxu0 0.0
    %3832 = vmatpush1.msra.mxu0 0.0
    %3833 = vmatprep.subr.mxu0 0.0
    %3834 = vmatpush1.msra.mxu0 0.0
    %3835 = vmatprep.subr.mxu0 0.0
    %3836 = vmatpush1.msra.mxu0 0.0
    %3837 = vmatprep.subr.mxu0 0.0
    %3838 = vmatpush1.msra.mxu0 0.0
    %3839 = vmatprep.subr.mxu0 0.0
    %3840 = vmatpush1.msra.mxu0 0.0
    %3841 = vmatprep.subr.mxu0 0.0
    %3842 = vmatpush1.msra.mxu0 0.0
    %3843 = vmatprep.subr.mxu0 0.0
    %3844 = vmatpush1.msra.mxu0 0.0
    %3845 = vmatprep.subr.mxu0 0.0
    %3846 = vmatpush1.msra.mxu0 0.0
    %3847 = vmatprep.subr.mxu0 0.0
    %3848 = vmatpush1.msra.mxu0 0.0
    %3849 = vmatprep.subr.mxu0 0.0
    %3850 = vmatpush1.msra.mxu0 0.0
    %3851 = vmatprep.subr.mxu0 0.0
    %3852 = vmatpush1.msra.mxu0 0.0
    %3853 = vmatprep.subr.mxu0 0.0
    %3854 = vmatpush1.msra.mxu0 0.0
    %3855 = vmatprep.subr.mxu0 0.0
    %3856 = vmatpush1.msra.mxu0 0.0
    %3857 = vmatprep.mubr.f32.mxu0 0.0
    %3858 = vmatmul.mubr.f32.gmra.mrb[0].mxu0 %v3721
    %v3859 = vpop.f32.mrb[0].mxu0
    %v3860 = vadd.f32 %v3520, %v3859
    %v3861 = vpop.f32.mrb[0].mxu0
    %v3862 = vadd.f32 %v3522, %v3861
    %3863 = vdwg.mxu0
    %v3864 = vxor.u32 %v3789, 2147483648
    %v3865 = vmul.f32 %v3864, 1.442695
    %v3866 = vpow.pop %v3865
    %v3867 = vadd.f32 %v3866, 1.0
    %v3868 = vrcp.pop %v3867
    %v3869 = vmul.f32 1.0, %v3868
    %v3870 = vxor.u32 %v3791, 2147483648
    %v3871 = vmul.f32 %v3870, 1.442695
    %v3872 = vpow.pop %v3871
    %v3873 = vadd.f32 %v3872, 1.0
    %v3874 = vrcp.pop %v3873
    %v3875 = vmul.f32 1.0, %v3874
    %v3876 = vtanh.pop %v3860
    %v3877 = vxor.u32 %v3862, 2147483648
    %v3878 = vmul.f32 %v3877, 1.442695
    %v3879 = vpow.pop %v3878
    %v3880 = vadd.f32 %v3879, 1.0
    %v3881 = vrcp.pop %v3880
    %v3882 = vmul.f32 1.0, %v3881
    %v3883 = vmul.f32 %v3875, %v3374
    %v3884 = vmul.f32 %v3869, %v3876
    %v3885 = vadd.f32 %v3883, %v3884
    %v3886 = vtanh.pop %v3885
    %v3887 = vmul.f32 %v3882, %v3886
    %v3888 = vmul.f32 %v3887, %v813
    %v3889 = vsel %vm816, %v3888, 0.0
    %3890 = vadd.xlane.f32.xlu0 %v3889
    %v3891 = vpop.xlane.xlu0 %3890
    %v3892 = vadd.f32 %v3891, %v824
    %3893 = vmatprep.subr.mxu0 %v219
    %3894 = vmatpush1.msra.mxu0 %v218
    %3895 = vmatprep.subr.mxu0 %v223
    %3896 = vmatpush1.msra.mxu0 %v222
    %3897 = vmatprep.subr.mxu0 %v227
    %3898 = vmatpush1.msra.mxu0 %v226
    %3899 = vmatprep.subr.mxu0 %v231
    %3900 = vmatpush1.msra.mxu0 %v230
    %3901 = vmatprep.subr.mxu0 %v235
    %3902 = vmatpush1.msra.mxu0 %v234
    %3903 = vmatprep.subr.mxu0 %v239
    %3904 = vmatpush1.msra.mxu0 %v238
    %3905 = vmatprep.subr.mxu0 %v243
    %3906 = vmatpush1.msra.mxu0 %v242
    %3907 = vmatprep.subr.mxu0 %v247
    %3908 = vmatpush1.msra.mxu0 %v246
    %3909 = vmatprep.subr.mxu0 %v251
    %3910 = vmatpush1.msra.mxu0 %v250
    %3911 = vmatprep.subr.mxu0 %v255
    %3912 = vmatpush1.msra.mxu0 %v254
    %3913 = vmatprep.subr.mxu0 %v259
    %3914 = vmatpush1.msra.mxu0 %v258
    %3915 = vmatprep.subr.mxu0 %v263
    %3916 = vmatpush1.msra.mxu0 %v262
    %3917 = vmatprep.subr.mxu0 %v267
    %3918 = vmatpush1.msra.mxu0 %v266
    %3919 = vmatprep.subr.mxu0 %v271
    %3920 = vmatpush1.msra.mxu0 %v270
    %3921 = vmatprep.subr.mxu0 %v275
    %3922 = vmatpush1.msra.mxu0 %v274
    %3923 = vmatprep.subr.mxu0 %v279
    %3924 = vmatpush1.msra.mxu0 %v278
    %3925 = vmatprep.subr.mxu0 0.0
    %3926 = vmatpush1.msra.mxu0 0.0
    %3927 = vmatprep.subr.mxu0 0.0
    %3928 = vmatpush1.msra.mxu0 0.0
    %3929 = vmatprep.subr.mxu0 0.0
    %3930 = vmatpush1.msra.mxu0 0.0
    %3931 = vmatprep.subr.mxu0 0.0
    %3932 = vmatpush1.msra.mxu0 0.0
    %3933 = vmatprep.subr.mxu0 0.0
    %3934 = vmatpush1.msra.mxu0 0.0
    %3935 = vmatprep.subr.mxu0 0.0
    %3936 = vmatpush1.msra.mxu0 0.0
    %3937 = vmatprep.subr.mxu0 0.0
    %3938 = vmatpush1.msra.mxu0 0.0
    %3939 = vmatprep.subr.mxu0 0.0
    %3940 = vmatpush1.msra.mxu0 0.0
    %3941 = vmatprep.subr.mxu0 0.0
    %3942 = vmatpush1.msra.mxu0 0.0
    %3943 = vmatprep.subr.mxu0 0.0
    %3944 = vmatpush1.msra.mxu0 0.0
    %3945 = vmatprep.subr.mxu0 0.0
    %3946 = vmatpush1.msra.mxu0 0.0
    %3947 = vmatprep.subr.mxu0 0.0
    %3948 = vmatpush1.msra.mxu0 0.0
    %3949 = vmatprep.subr.mxu0 0.0
    %3950 = vmatpush1.msra.mxu0 0.0
    %3951 = vmatprep.subr.mxu0 0.0
    %3952 = vmatpush1.msra.mxu0 0.0
    %3953 = vmatprep.subr.mxu0 0.0
    %3954 = vmatpush1.msra.mxu0 0.0
    %3955 = vmatprep.subr.mxu0 0.0
    %3956 = vmatpush1.msra.mxu0 0.0
    %3957 = vmatprep.mubr.f32.mxu0 0.0
    %3958 = vmatmul.mubr.f32.gmra.mrb[0].mxu0 %v3887
    %v3959 = vpop.f32.mrb[0].mxu0
    %v3960 = vadd.f32 %v289, %v3959
    %v3961 = vpop.f32.mrb[0].mxu0
    %v3962 = vadd.f32 %v293, %v3961
    %3963 = vdwg.mxu0
    %3964 = vmatprep.subr.mxu0 %v221
    %3965 = vmatpush1.msra.mxu0 %v220
    %3966 = vmatprep.subr.mxu0 %v225
    %3967 = vmatpush1.msra.mxu0 %v224
    %3968 = vmatprep.subr.mxu0 %v229
    %3969 = vmatpush1.msra.mxu0 %v228
    %3970 = vmatprep.subr.mxu0 %v233
    %3971 = vmatpush1.msra.mxu0 %v232
    %3972 = vmatprep.subr.mxu0 %v237
    %3973 = vmatpush1.msra.mxu0 %v236
    %3974 = vmatprep.subr.mxu0 %v241
    %3975 = vmatpush1.msra.mxu0 %v240
    %3976 = vmatprep.subr.mxu0 %v245
    %3977 = vmatpush1.msra.mxu0 %v244
    %3978 = vmatprep.subr.mxu0 %v249
    %3979 = vmatpush1.msra.mxu0 %v248
    %3980 = vmatprep.subr.mxu0 %v253
    %3981 = vmatpush1.msra.mxu0 %v252
    %3982 = vmatprep.subr.mxu0 %v257
    %3983 = vmatpush1.msra.mxu0 %v256
    %3984 = vmatprep.subr.mxu0 %v261
    %3985 = vmatpush1.msra.mxu0 %v260
    %3986 = vmatprep.subr.mxu0 %v265
    %3987 = vmatpush1.msra.mxu0 %v264
    %3988 = vmatprep.subr.mxu0 %v269
    %3989 = vmatpush1.msra.mxu0 %v268
    %3990 = vmatprep.subr.mxu0 %v273
    %3991 = vmatpush1.msra.mxu0 %v272
    %3992 = vmatprep.subr.mxu0 %v277
    %3993 = vmatpush1.msra.mxu0 %v276
    %3994 = vmatprep.subr.mxu0 %v281
    %3995 = vmatpush1.msra.mxu0 %v280
    %3996 = vmatprep.subr.mxu0 0.0
    %3997 = vmatpush1.msra.mxu0 0.0
    %3998 = vmatprep.subr.mxu0 0.0
    %3999 = vmatpush1.msra.mxu0 0.0
    %4000 = vmatprep.subr.mxu0 0.0
    %4001 = vmatpush1.msra.mxu0 0.0
    %4002 = vmatprep.subr.mxu0 0.0
    %4003 = vmatpush1.msra.mxu0 0.0
    %4004 = vmatprep.subr.mxu0 0.0
    %4005 = vmatpush1.msra.mxu0 0.0
    %4006 = vmatprep.subr.mxu0 0.0
    %4007 = vmatpush1.msra.mxu0 0.0
    %4008 = vmatprep.subr.mxu0 0.0
    %4009 = vmatpush1.msra.mxu0 0.0
    %4010 = vmatprep.subr.mxu0 0.0
    %4011 = vmatpush1.msra.mxu0 0.0
    %4012 = vmatprep.subr.mxu0 0.0
    %4013 = vmatpush1.msra.mxu0 0.0
    %4014 = vmatprep.subr.mxu0 0.0
    %4015 = vmatpush1.msra.mxu0 0.0
    %4016 = vmatprep.subr.mxu0 0.0
    %4017 = vmatpush1.msra.mxu0 0.0
    %4018 = vmatprep.subr.mxu0 0.0
    %4019 = vmatpush1.msra.mxu0 0.0
    %4020 = vmatprep.subr.mxu0 0.0
    %4021 = vmatpush1.msra.mxu0 0.0
    %4022 = vmatprep.subr.mxu0 0.0
    %4023 = vmatpush1.msra.mxu0 0.0
    %4024 = vmatprep.subr.mxu0 0.0
    %4025 = vmatpush1.msra.mxu0 0.0
    %4026 = vmatprep.subr.mxu0 0.0
    %4027 = vmatpush1.msra.mxu0 0.0
    %4028 = vmatprep.mubr.f32.mxu0 0.0
    %4029 = vmatmul.mubr.f32.gmra.mrb[0].mxu0 %v3887
    %v4030 = vpop.f32.mrb[0].mxu0
    %v4031 = vadd.f32 %v297, %v4030
    %v4032 = vpop.f32.mrb[0].mxu0
    %v4033 = vadd.f32 %v301, %v4032
    %4034 = vdwg.mxu0
    %s4035 = scalar_lea.vmem %s0, 56
    %v4036 = vld [vmem:[%s4035] sm:$0xff]
    %4037 = vmatprep.subr.mxu0 %v91
    %4038 = vmatpush1.msra.mxu0 %v90
    %4039 = vmatprep.subr.mxu0 %v95
    %4040 = vmatpush1.msra.mxu0 %v94
    %4041 = vmatprep.subr.mxu0 %v99
    %4042 = vmatpush1.msra.mxu0 %v98
    %4043 = vmatprep.subr.mxu0 %v103
    %4044 = vmatpush1.msra.mxu0 %v102
    %4045 = vmatprep.subr.mxu0 %v107
    %4046 = vmatpush1.msra.mxu0 %v106
    %4047 = vmatprep.subr.mxu0 %v111
    %4048 = vmatpush1.msra.mxu0 %v110
    %4049 = vmatprep.subr.mxu0 %v115
    %4050 = vmatpush1.msra.mxu0 %v114
    %4051 = vmatprep.subr.mxu0 %v119
    %4052 = vmatpush1.msra.mxu0 %v118
    %4053 = vmatprep.subr.mxu0 %v123
    %4054 = vmatpush1.msra.mxu0 %v122
    %4055 = vmatprep.subr.mxu0 %v127
    %4056 = vmatpush1.msra.mxu0 %v126
    %4057 = vmatprep.subr.mxu0 %v131
    %4058 = vmatpush1.msra.mxu0 %v130
    %4059 = vmatprep.subr.mxu0 %v135
    %4060 = vmatpush1.msra.mxu0 %v134
    %4061 = vmatprep.subr.mxu0 %v139
    %4062 = vmatpush1.msra.mxu0 %v138
    %4063 = vmatprep.subr.mxu0 %v143
    %4064 = vmatpush1.msra.mxu0 %v142
    %4065 = vmatprep.subr.mxu0 %v147
    %4066 = vmatpush1.msra.mxu0 %v146
    %4067 = vmatprep.subr.mxu0 %v151
    %4068 = vmatpush1.msra.mxu0 %v150
    %4069 = vmatprep.subr.mxu0 0.0
    %4070 = vmatpush1.msra.mxu0 0.0
    %4071 = vmatprep.subr.mxu0 0.0
    %4072 = vmatpush1.msra.mxu0 0.0
    %4073 = vmatprep.subr.mxu0 0.0
    %4074 = vmatpush1.msra.mxu0 0.0
    %4075 = vmatprep.subr.mxu0 0.0
    %4076 = vmatpush1.msra.mxu0 0.0
    %4077 = vmatprep.subr.mxu0 0.0
    %4078 = vmatpush1.msra.mxu0 0.0
    %4079 = vmatprep.subr.mxu0 0.0
    %4080 = vmatpush1.msra.mxu0 0.0
    %4081 = vmatprep.subr.mxu0 0.0
    %4082 = vmatpush1.msra.mxu0 0.0
    %4083 = vmatprep.subr.mxu0 0.0
    %4084 = vmatpush1.msra.mxu0 0.0
    %4085 = vmatprep.subr.mxu0 0.0
    %4086 = vmatpush1.msra.mxu0 0.0
    %4087 = vmatprep.subr.mxu0 0.0
    %4088 = vmatpush1.msra.mxu0 0.0
    %4089 = vmatprep.subr.mxu0 0.0
    %4090 = vmatpush1.msra.mxu0 0.0
    %4091 = vmatprep.subr.mxu0 0.0
    %4092 = vmatpush1.msra.mxu0 0.0
    %4093 = vmatprep.subr.mxu0 0.0
    %4094 = vmatpush1.msra.mxu0 0.0
    %4095 = vmatprep.subr.mxu0 0.0
    %4096 = vmatpush1.msra.mxu0 0.0
    %4097 = vmatprep.subr.mxu0 0.0
    %4098 = vmatpush1.msra.mxu0 0.0
    %4099 = vmatprep.subr.mxu0 0.0
    %4100 = vmatpush1.msra.mxu0 0.0
    %4101 = vmatprep.mubr.f32.mxu0 0.0
    %4102 = vmatmul.mubr.f32.gmra.mrb[0].mxu0 %v3721
    %v4103 = vpop.f32.mrb[0].mxu0
    %v4104 = vadd.f32 0.0, %v4103
    %v4105 = vpop.f32.mrb[0].mxu0
    %v4106 = vadd.f32 0.0, %v4105
    %4107 = vdwg.mxu0
    %4108 = vmatprep.subr.mxu0 %v93
    %4109 = vmatpush1.msra.mxu0 %v92
    %4110 = vmatprep.subr.mxu0 %v97
    %4111 = vmatpush1.msra.mxu0 %v96
    %4112 = vmatprep.subr.mxu0 %v101
    %4113 = vmatpush1.msra.mxu0 %v100
    %4114 = vmatprep.subr.mxu0 %v105
    %4115 = vmatpush1.msra.mxu0 %v104
    %4116 = vmatprep.subr.mxu0 %v109
    %4117 = vmatpush1.msra.mxu0 %v108
    %4118 = vmatprep.subr.mxu0 %v113
    %4119 = vmatpush1.msra.mxu0 %v112
    %4120 = vmatprep.subr.mxu0 %v117
    %4121 = vmatpush1.msra.mxu0 %v116
    %4122 = vmatprep.subr.mxu0 %v121
    %4123 = vmatpush1.msra.mxu0 %v120
    %4124 = vmatprep.subr.mxu0 %v125
    %4125 = vmatpush1.msra.mxu0 %v124
    %4126 = vmatprep.subr.mxu0 %v129
    %4127 = vmatpush1.msra.mxu0 %v128
    %4128 = vmatprep.subr.mxu0 %v133
    %4129 = vmatpush1.msra.mxu0 %v132
    %4130 = vmatprep.subr.mxu0 %v137
    %4131 = vmatpush1.msra.mxu0 %v136
    %4132 = vmatprep.subr.mxu0 %v141
    %4133 = vmatpush1.msra.mxu0 %v140
    %4134 = vmatprep.subr.mxu0 %v145
    %4135 = vmatpush1.msra.mxu0 %v144
    %4136 = vmatprep.subr.mxu0 %v149
    %4137 = vmatpush1.msra.mxu0 %v148
    %4138 = vmatprep.subr.mxu0 %v153
    %4139 = vmatpush1.msra.mxu0 %v152
    %4140 = vmatprep.subr.mxu0 0.0
    %4141 = vmatpush1.msra.mxu0 0.0
    %4142 = vmatprep.subr.mxu0 0.0
    %4143 = vmatpush1.msra.mxu0 0.0
    %4144 = vmatprep.subr.mxu0 0.0
    %4145 = vmatpush1.msra.mxu0 0.0
    %4146 = vmatprep.subr.mxu0 0.0
    %4147 = vmatpush1.msra.mxu0 0.0
    %4148 = vmatprep.subr.mxu0 0.0
    %4149 = vmatpush1.msra.mxu0 0.0
    %4150 = vmatprep.subr.mxu0 0.0
    %4151 = vmatpush1.msra.mxu0 0.0
    %4152 = vmatprep.subr.mxu0 0.0
    %4153 = vmatpush1.msra.mxu0 0.0
    %4154 = vmatprep.subr.mxu0 0.0
    %4155 = vmatpush1.msra.mxu0 0.0
    %4156 = vmatprep.subr.mxu0 0.0
    %4157 = vmatpush1.msra.mxu0 0.0
    %4158 = vmatprep.subr.mxu0 0.0
    %4159 = vmatpush1.msra.mxu0 0.0
    %4160 = vmatprep.subr.mxu0 0.0
    %4161 = vmatpush1.msra.mxu0 0.0
    %4162 = vmatprep.subr.mxu0 0.0
    %4163 = vmatpush1.msra.mxu0 0.0
    %4164 = vmatprep.subr.mxu0 0.0
    %4165 = vmatpush1.msra.mxu0 0.0
    %4166 = vmatprep.subr.mxu0 0.0
    %4167 = vmatpush1.msra.mxu0 0.0
    %4168 = vmatprep.subr.mxu0 0.0
    %4169 = vmatpush1.msra.mxu0 0.0
    %4170 = vmatprep.subr.mxu0 0.0
    %4171 = vmatpush1.msra.mxu0 0.0
    %4172 = vmatprep.mubr.f32.mxu0 0.0
    %4173 = vmatmul.mubr.f32.gmra.mrb[0].mxu0 %v3721
    %v4174 = vpop.f32.mrb[0].mxu0
    %v4175 = vadd.f32 0.0, %v4174
    %v4176 = vpop.f32.mrb[0].mxu0
    %v4177 = vadd.f32 0.0, %v4176
    %4178 = vdwg.mxu0
    %v4183 = vcombine.low %v4104, %v4106
    %v4184 = vcombine.low %v4175, %v4177
    %v4186 = vunpack.c.l.s4 1983009808
    %v4187 = vunpack.c.0.s8 %v4186
    %v4188 = vlaneseq
    %v4189 = vshrl.u32 %v4188, 7
    %v4190 = vsub.s32 %v4187, %v4189
    %v4191 = vrot.slane %v4183, %v4190
    %v4193 = vunpack.c.l.s4 1983009808
    %v4194 = vunpack.c.0.s8 %v4193
    %v4195 = vlaneseq
    %v4196 = vshrl.u32 %v4195, 7
    %v4197 = vsub.s32 %v4194, %v4196
    %v4198 = vrot.slane %v4184, %v4197
    %v4199 = vcombine.low %v4191, %v4198
    %v4201 = vadd.f32 %v4036, %v4199
    %v4202 = vxor.u32 %v4201, 2147483648
    %v4203 = vmul.f32 %v4202, 1.442695
    %v4204 = vpow.pop %v4203
    %v4205 = vadd.f32 %v4204, 1.0
    %v4206 = vrcp.pop %v4205
    %v4207 = vmul.f32 1.0, %v4206
    %v4209 = vrot.slane %v4201, 2
    %v4211 = vxor.u32 %v4209, 2147483648
    %v4212 = vmul.f32 %v4211, 1.442695
    %v4213 = vpow.pop %v4212
    %v4214 = vadd.f32 %v4213, 1.0
    %v4215 = vrcp.pop %v4214
    %v4216 = vmul.f32 1.0, %v4215
    %v4217 = vrot.slane %v4201, 4
    %v4219 = vtanh.pop %v4217
    %v4220 = vrot.slane %v4201, 6
    %v4222 = vxor.u32 %v4220, 2147483648
    %v4223 = vmul.f32 %v4222, 1.442695
    %v4224 = vpow.pop %v4223
    %v4225 = vadd.f32 %v4224, 1.0
    %v4226 = vrcp.pop %v4225
    %v4227 = vmul.f32 1.0, %v4226
    %v4228 = vmul.f32 %v4216, %v3719
    %v4229 = vmul.f32 %v4207, %v4219
    %v4230 = vadd.f32 %v4228, %v4229
    %v4231 = vtanh.pop %v4230
    %v4232 = vmul.f32 %v4227, %v4231
    %4233 = vmatprep.subr.mxu0 %v155
    %4234 = vmatpush1.msra.mxu0 %v154
    %4235 = vmatprep.subr.mxu0 %v159
    %4236 = vmatpush1.msra.mxu0 %v158
    %4237 = vmatprep.subr.mxu0 %v163
    %4238 = vmatpush1.msra.mxu0 %v162
    %4239 = vmatprep.subr.mxu0 %v167
    %4240 = vmatpush1.msra.mxu0 %v166
    %4241 = vmatprep.subr.mxu0 %v171
    %4242 = vmatpush1.msra.mxu0 %v170
    %4243 = vmatprep.subr.mxu0 %v175
    %4244 = vmatpush1.msra.mxu0 %v174
    %4245 = vmatprep.subr.mxu0 %v179
    %4246 = vmatpush1.msra.mxu0 %v178
    %4247 = vmatprep.subr.mxu0 %v183
    %4248 = vmatpush1.msra.mxu0 %v182
    %4249 = vmatprep.subr.mxu0 %v187
    %4250 = vmatpush1.msra.mxu0 %v186
    %4251 = vmatprep.subr.mxu0 %v191
    %4252 = vmatpush1.msra.mxu0 %v190
    %4253 = vmatprep.subr.mxu0 %v195
    %4254 = vmatpush1.msra.mxu0 %v194
    %4255 = vmatprep.subr.mxu0 %v199
    %4256 = vmatpush1.msra.mxu0 %v198
    %4257 = vmatprep.subr.mxu0 %v203
    %4258 = vmatpush1.msra.mxu0 %v202
    %4259 = vmatprep.subr.mxu0 %v207
    %4260 = vmatpush1.msra.mxu0 %v206
    %4261 = vmatprep.subr.mxu0 %v211
    %4262 = vmatpush1.msra.mxu0 %v210
    %4263 = vmatprep.subr.mxu0 %v215
    %4264 = vmatpush1.msra.mxu0 %v214
    %4265 = vmatprep.subr.mxu0 0.0
    %4266 = vmatpush1.msra.mxu0 0.0
    %4267 = vmatprep.subr.mxu0 0.0
    %4268 = vmatpush1.msra.mxu0 0.0
    %4269 = vmatprep.subr.mxu0 0.0
    %4270 = vmatpush1.msra.mxu0 0.0
    %4271 = vmatprep.subr.mxu0 0.0
    %4272 = vmatpush1.msra.mxu0 0.0
    %4273 = vmatprep.subr.mxu0 0.0
    %4274 = vmatpush1.msra.mxu0 0.0
    %4275 = vmatprep.subr.mxu0 0.0
    %4276 = vmatpush1.msra.mxu0 0.0
    %4277 = vmatprep.subr.mxu0 0.0
    %4278 = vmatpush1.msra.mxu0 0.0
    %4279 = vmatprep.subr.mxu0 0.0
    %4280 = vmatpush1.msra.mxu0 0.0
    %4281 = vmatprep.subr.mxu0 0.0
    %4282 = vmatpush1.msra.mxu0 0.0
    %4283 = vmatprep.subr.mxu0 0.0
    %4284 = vmatpush1.msra.mxu0 0.0
    %4285 = vmatprep.subr.mxu0 0.0
    %4286 = vmatpush1.msra.mxu0 0.0
    %4287 = vmatprep.subr.mxu0 0.0
    %4288 = vmatpush1.msra.mxu0 0.0
    %4289 = vmatprep.subr.mxu0 0.0
    %4290 = vmatpush1.msra.mxu0 0.0
    %4291 = vmatprep.subr.mxu0 0.0
    %4292 = vmatpush1.msra.mxu0 0.0
    %4293 = vmatprep.subr.mxu0 0.0
    %4294 = vmatpush1.msra.mxu0 0.0
    %4295 = vmatprep.subr.mxu0 0.0
    %4296 = vmatpush1.msra.mxu0 0.0
    %4297 = vmatprep.mubr.f32.mxu0 0.0
    %4298 = vmatmul.mubr.f32.gmra.mrb[0].mxu0 %v4232
    %v4299 = vpop.f32.mrb[0].mxu0
    %v4300 = vadd.f32 %v3960, %v4299
    %v4301 = vpop.f32.mrb[0].mxu0
    %v4302 = vadd.f32 %v3962, %v4301
    %4303 = vdwg.mxu0
    %4304 = vmatprep.subr.mxu0 %v157
    %4305 = vmatpush1.msra.mxu0 %v156
    %4306 = vmatprep.subr.mxu0 %v161
    %4307 = vmatpush1.msra.mxu0 %v160
    %4308 = vmatprep.subr.mxu0 %v165
    %4309 = vmatpush1.msra.mxu0 %v164
    %4310 = vmatprep.subr.mxu0 %v169
    %4311 = vmatpush1.msra.mxu0 %v168
    %4312 = vmatprep.subr.mxu0 %v173
    %4313 = vmatpush1.msra.mxu0 %v172
    %4314 = vmatprep.subr.mxu0 %v177
    %4315 = vmatpush1.msra.mxu0 %v176
    %4316 = vmatprep.subr.mxu0 %v181
    %4317 = vmatpush1.msra.mxu0 %v180
    %4318 = vmatprep.subr.mxu0 %v185
    %4319 = vmatpush1.msra.mxu0 %v184
    %4320 = vmatprep.subr.mxu0 %v189
    %4321 = vmatpush1.msra.mxu0 %v188
    %4322 = vmatprep.subr.mxu0 %v193
    %4323 = vmatpush1.msra.mxu0 %v192
    %4324 = vmatprep.subr.mxu0 %v197
    %4325 = vmatpush1.msra.mxu0 %v196
    %4326 = vmatprep.subr.mxu0 %v201
    %4327 = vmatpush1.msra.mxu0 %v200
    %4328 = vmatprep.subr.mxu0 %v205
    %4329 = vmatpush1.msra.mxu0 %v204
    %4330 = vmatprep.subr.mxu0 %v209
    %4331 = vmatpush1.msra.mxu0 %v208
    %4332 = vmatprep.subr.mxu0 %v213
    %4333 = vmatpush1.msra.mxu0 %v212
    %4334 = vmatprep.subr.mxu0 %v217
    %4335 = vmatpush1.msra.mxu0 %v216
    %4336 = vmatprep.subr.mxu0 0.0
    %4337 = vmatpush1.msra.mxu0 0.0
    %4338 = vmatprep.subr.mxu0 0.0
    %4339 = vmatpush1.msra.mxu0 0.0
    %4340 = vmatprep.subr.mxu0 0.0
    %4341 = vmatpush1.msra.mxu0 0.0
    %4342 = vmatprep.subr.mxu0 0.0
    %4343 = vmatpush1.msra.mxu0 0.0
    %4344 = vmatprep.subr.mxu0 0.0
    %4345 = vmatpush1.msra.mxu0 0.0
    %4346 = vmatprep.subr.mxu0 0.0
    %4347 = vmatpush1.msra.mxu0 0.0
    %4348 = vmatprep.subr.mxu0 0.0
    %4349 = vmatpush1.msra.mxu0 0.0
    %4350 = vmatprep.subr.mxu0 0.0
    %4351 = vmatpush1.msra.mxu0 0.0
    %4352 = vmatprep.subr.mxu0 0.0
    %4353 = vmatpush1.msra.mxu0 0.0
    %4354 = vmatprep.subr.mxu0 0.0
    %4355 = vmatpush1.msra.mxu0 0.0
    %4356 = vmatprep.subr.mxu0 0.0
    %4357 = vmatpush1.msra.mxu0 0.0
    %4358 = vmatprep.subr.mxu0 0.0
    %4359 = vmatpush1.msra.mxu0 0.0
    %4360 = vmatprep.subr.mxu0 0.0
    %4361 = vmatpush1.msra.mxu0 0.0
    %4362 = vmatprep.subr.mxu0 0.0
    %4363 = vmatpush1.msra.mxu0 0.0
    %4364 = vmatprep.subr.mxu0 0.0
    %4365 = vmatpush1.msra.mxu0 0.0
    %4366 = vmatprep.subr.mxu0 0.0
    %4367 = vmatpush1.msra.mxu0 0.0
    %4368 = vmatprep.mubr.f32.mxu0 0.0
    %4369 = vmatmul.mubr.f32.gmra.mrb[0].mxu0 %v4232
    %v4370 = vpop.f32.mrb[0].mxu0
    %v4371 = vadd.f32 %v4031, %v4370
    %v4372 = vpop.f32.mrb[0].mxu0
    %v4373 = vadd.f32 %v4033, %v4372
    %4374 = vdwg.mxu0
    %v4375 = vxor.u32 %v4300, 2147483648
    %v4376 = vmul.f32 %v4375, 1.442695
    %v4377 = vpow.pop %v4376
    %v4378 = vadd.f32 %v4377, 1.0
    %v4379 = vrcp.pop %v4378
    %v4380 = vmul.f32 1.0, %v4379
    %v4381 = vxor.u32 %v4302, 2147483648
    %v4382 = vmul.f32 %v4381, 1.442695
    %v4383 = vpow.pop %v4382
    %v4384 = vadd.f32 %v4383, 1.0
    %v4385 = vrcp.pop %v4384
    %v4386 = vmul.f32 1.0, %v4385
    %v4387 = vtanh.pop %v4371
    %v4388 = vxor.u32 %v4373, 2147483648
    %v4389 = vmul.f32 %v4388, 1.442695
    %v4390 = vpow.pop %v4389
    %v4391 = vadd.f32 %v4390, 1.0
    %v4392 = vrcp.pop %v4391
    %v4393 = vmul.f32 1.0, %v4392
    %v4394 = vmul.f32 %v4386, %v3885
    %v4395 = vmul.f32 %v4380, %v4387
    %v4396 = vadd.f32 %v4394, %v4395
    %v4397 = vtanh.pop %v4396
    %v4398 = vmul.f32 %v4393, %v4397
    %v4399 = vmul.f32 %v4398, %v813
    %v4400 = vsel %vm816, %v4399, 0.0
    %4401 = vadd.xlane.f32.xlu0 %v4400
    %v4402 = vpop.xlane.xlu0 %4401
    %v4403 = vadd.f32 %v4402, %v824
    %4405 = vrot.lane.b32.xlu0 %v1337, 1
    %v4406 = vpop.permute.xlu0 %4405
    %4409 = vrot.lane.b32.xlu0 %v1848, 2
    %v4410 = vpop.permute.xlu0 %4409
    %4413 = vrot.lane.b32.xlu0 %v2359, 3
    %v4414 = vpop.permute.xlu0 %4413
    %4417 = vrot.lane.b32.xlu0 %v2870, 4
    %v4418 = vpop.permute.xlu0 %4417
    %4421 = vrot.lane.b32.xlu0 %v3381, 5
    %v4422 = vpop.permute.xlu0 %4421
    %4425 = vrot.lane.b32.xlu0 %v3892, 6
    %v4426 = vpop.permute.xlu0 %4425
    %4429 = vrot.lane.b32.xlu0 %v4403, 7
    %v4430 = vpop.permute.xlu0 %4429
    %vm4432 = vcmask 7168
    %v4433 = vsel %vm4432, %v826, %v4406
    %vm4434 = vcmask 15360
    %v4435 = vsel %vm4434, %v4433, %v4410
    %vm4436 = vcmask 23552
    %v4437 = vsel %vm4436, %v4435, %v4414
    %vm4438 = vcmask 31744
    %v4439 = vsel %vm4438, %v4437, %v4418
    %vm4440 = vcmask 39936
    %v4441 = vsel %vm4440, %v4439, %v4422
    %vm4442 = vcmask 48128
    %v4443 = vsel %vm4442, %v4441, %v4426
    %vm4444 = vcmask 56320
    %v4445 = vsel %vm4444, %v4443, %v4430
    %vm4446 = vcmask 64512
    %v4447 = vsel %vm4446, %v4445, 0.0
    %4448 = vst [vmem:[#allocation11] sm:$0x3] %v4447
    // Predicated region
    $region54: #{sequence_forward.1} parent=1 // pred_check
      _
    $region55: #{sequence_forward.1} parent=1 // pred_check_branch
      %4450 = sbr.rel (0) target = $region57
    $region56: #{sequence_forward.1} parent=1 // pred_region
      %s4452 = ssub.s32 32, 32
      %4453 = vsyncadd [#allocation5], %s4452
      %s4455 = sshll.u32 [#allocation11], 4
      %s4456 = int_to_ptr.vmem [resolvable:$true] %s4455
      %4458 = dma.vmem_to_hbm [thread:$0]  %s4456, 32, %s9, [#allocation5]
    $region57: #{sequence_forward.1} parent=1 // pred_fallthru
      _
    // Predicated region
    $region58: #{sequence_forward.1} parent=1 // pred_check
      _
    $region59: #{sequence_forward.1} parent=1 // pred_check_branch
      %4460 = sbr.rel (0) target = $region61
    $region60: #{sequence_forward.1} parent=1 // pred_region
      %4461 = dma.done [#allocation5], 32
    $region61: #{sequence_forward.1} parent=1 // pred_fallthru
      _
    %4462 = vsyncpa [#allocation4], 1
    %4463 = vsyncpa [#allocation7], 1
    %4464 = vsyncpa [#allocation10], 1
    %4465 = vsyncpa [#allocation5], 1

</llo_original>
